<compile_context>
chip_gen: v7x
topology: tpu7x:2x2x1
jax: 0.10.0
libtpu: 0.0.40
codegen_flags: <defaults>
</compile_context>

<pallas_src>
import functools
import math

import jax
import jax.numpy as jnp
from jax.experimental import pallas as pl
from jax.experimental.pallas import tpu as pltpu


# ----------------------------------------------------------------------------
# Pallas kernels
# ----------------------------------------------------------------------------
def _gemm_bias_stats_kernel(pT_ref, wT_ref, bias_ref, yT_ref, sum_ref, sq_ref):
    """Lane-dense conv-as-GEMM block + fused BN partial statistics.

    pT_ref  : (K, MB)   bf16   im2col patches (K = 9*Cin), MB lane-dense columns
    wT_ref  : (C, K)    bf16   conv weights (Cout x 9*Cin)
    bias_ref: (C, 1)    f32
    yT_ref  : (C, MB)   f32    raw conv output (pre-BN)
    sum_ref : (1, C, 1) f32    per-block per-channel sum
    sq_ref  : (1, C, 1) f32    per-block per-channel sum of squares
    """
    y = jnp.dot(wT_ref[...], pT_ref[...], preferred_element_type=jnp.float32)
    y = y + bias_ref[...]                      # (C,1) broadcast along lanes
    yT_ref[...] = y
    sum_ref[0] = jnp.sum(y, axis=1, keepdims=True)
    sq_ref[0] = jnp.sum(y * y, axis=1, keepdims=True)


def _bn_relu_apply_kernel(yT_ref, a_ref, s_ref, oT_ref):
    """Single f32 FMA pass: z = relu(y * a + s) with folded per-channel BN affine."""
    z = yT_ref[...] * a_ref[...] + s_ref[...]
    oT_ref[...] = jnp.maximum(z, 0.0).astype(oT_ref.dtype)


# ----------------------------------------------------------------------------
# Pallas wrappers
# ----------------------------------------------------------------------------
def _choose_block(m):
    """Largest lane-dense (multiple of 128) block that divides m while keeping a
    grid of >= 2 steps (so both v7x TensorCores get work)."""
    for mb in (2048, 1024, 512, 256, 128):
        if m % mb == 0 and m // mb >= 2:
            return mb
    return m


def conv3x3_bn_stats(pT, wT, bias):
    """pT: (K, M) bf16 patches; wT: (C, K); bias: (C,) -> (y_T (C,M) f32, partial stats)."""
    K, M = pT.shape
    C = wT.shape[0]
    MB = _choose_block(M)
    G = M // MB
    return pl.pallas_call(
        _gemm_bias_stats_kernel,
        out_shape=(
            jax.ShapeDtypeStruct((C, M), jnp.float32),
            jax.ShapeDtypeStruct((G, C, 1), jnp.float32),
            jax.ShapeDtypeStruct((G, C, 1), jnp.float32),
        ),
        grid=(G,),
        in_specs=[
            pl.BlockSpec((K, MB), lambda i: (0, i)),
            pl.BlockSpec((C, K), lambda i: (0, 0)),
            pl.BlockSpec((C, 1), lambda i: (0, 0)),
        ],
        out_specs=(
            pl.BlockSpec((C, MB), lambda i: (0, i)),
            pl.BlockSpec((1, C, 1), lambda i: (i, 0, 0)),
            pl.BlockSpec((1, C, 1), lambda i: (i, 0, 0)),
        ),
        compiler_params=pltpu.CompilerParams(dimension_semantics=("parallel",)),
    )(pT, wT.astype(jnp.bfloat16), bias.astype(jnp.float32).reshape(C, 1))


def bn_relu_apply(yT, a, shift, out_dtype=jnp.float32):
    """yT: (C, M) f32; a/shift: (C, 1) f32 folded BN affine -> relu(y*a + shift)."""
    C, M = yT.shape
    MB = _choose_block(M)
    G = M // MB
    return pl.pallas_call(
        _bn_relu_apply_kernel,
        out_shape=jax.ShapeDtypeStruct((C, M), out_dtype),
        grid=(G,),
        in_specs=[
            pl.BlockSpec((C, MB), lambda i: (0, i)),
            pl.BlockSpec((C, 1), lambda i: (0, 0)),
            pl.BlockSpec((C, 1), lambda i: (0, 0)),
        ],
        out_specs=pl.BlockSpec((C, MB), lambda i: (0, i)),
        compiler_params=pltpu.CompilerParams(dimension_semantics=("parallel",)),
    )(yT, a, shift)


# ----------------------------------------------------------------------------
# Glue (pure data movement / tiny scalar math)
# ----------------------------------------------------------------------------
def _im2col_T(x, dtype=jnp.bfloat16):
    """(N, H, W, Cin) -> transposed im2col patches (9*Cin, N*H*W), K = tap*Cin + cin.

    Pre-arranged in plain JAX (one fused pad+gather+transpose in XLA); tiny at
    these shapes.
    # TODO(synk): at production shapes build the im2col block in-kernel into a
    # VMEM scratch to avoid the ~9x HBM expansion of the activation.
    """
    N, H, W, Cin = x.shape
    xp = jnp.pad(x.astype(dtype), ((0, 0), (1, 1), (1, 1), (0, 0)))
    taps = [xp[:, ki:ki + H, kj:kj + W, :] for ki in range(3) for kj in range(3)]
    p = jnp.transpose(jnp.stack(taps, axis=0), (0, 4, 1, 2, 3))  # (9, Cin, N, H, W)
    return p.reshape(9 * Cin, N * H * W)


def _bn_affine(sums, sqs, count, gamma, beta, eps=1e-5):
    """Reduce per-block partial sums -> folded BN scale/shift (f32, biased var)."""
    s = jnp.sum(sums, axis=0)[:, 0]
    ss = jnp.sum(sqs, axis=0)[:, 0]
    mean = s / count
    var = jnp.maximum(ss / count - mean * mean, 0.0)
    a = gamma * jax.lax.rsqrt(var + eps)
    shift = beta - mean * a
    return a.reshape(-1, 1), shift.reshape(-1, 1)


# ----------------------------------------------------------------------------
# Parameters & forward
# ----------------------------------------------------------------------------
def init_params(key, c1, c2):
    pad_d = int(math.ceil(c1 / 4) * 4)
    g = pad_d // 4
    ks = jax.random.split(key, 4)

    def uni(k, shape, fan_in):
        bound = 1.0 / math.sqrt(fan_in)
        return jax.random.uniform(k, shape, jnp.float32, -bound, bound)

    return dict(
        pad_d=pad_d,
        # conv1: Conv3d(g -> c2, (3,3,1)); weights stored 2D as (Cout, 9*Cin)
        w1=uni(ks[0], (c2, 9 * g), g * 9),
        b1=uni(ks[1], (c2,), g * 9),
        g1=jnp.ones((c2,), jnp.float32),
        be1=jnp.zeros((c2,), jnp.float32),
        # conv2: Conv3d(24 -> 24, (3,3,1))
        w2=uni(ks[2], (24, 9 * 24), 24 * 9),
        b2=uni(ks[3], (24,), 24 * 9),
        g2=jnp.ones((24,), jnp.float32),
        be2=jnp.zeros((24,), jnp.float32),
    )


def sfc_back_forward(x, params):
    """x: (b, 24, w, h, d) -> (b, 24, 2w, 2h, c2)  (same order as the PyTorch module)."""
    b, c, w, h, d = x.shape
    assert c == 24, "conv2 has in_channels=24, so the second input dim must be 24"
    pad_d = params["pad_d"]
    g = pad_d // 4
    H, W = 2 * w, 2 * h

    # --- depth pad with 1e-8 + depth-to-space (pure data movement, glue) ----
    xt = jnp.transpose(x, (0, 1, 4, 2, 3))                     # (b, c, d, w, h)
    if pad_d > d:
        fill = jnp.full((b, c, pad_d - d, w, h), 1e-8, xt.dtype)
        xt = jnp.concatenate([xt, fill], axis=2)
    x0, x1, x2, x3 = (xt[:, :, k * g:(k + 1) * g] for k in range(4))
    even = jnp.stack([x0, x2], axis=-1).reshape(b, c, g, w, 2 * h)
    odd = jnp.stack([x1, x3], axis=-1).reshape(b, c, g, w, 2 * h)
    xx = jnp.stack([even, odd], axis=-2).reshape(b, c, g, H, W)

    # --- conv1 + BN + ReLU ---------------------------------------------------
    # Conv3d frame: N=b, C=g, D=2w, H=2h, W=c (kernel 1 along W => weights
    # shared across the c slices).  Slice frame: (b*c, 2w, 2h, g).
    t1 = jnp.transpose(xx, (0, 1, 3, 4, 2)).reshape(b * c, H, W, g)
    p1 = _im2col_T(t1)                                         # (9g, b*c*H*W)
    y1, su1, sq1 = conv3x3_bn_stats(p1, params["w1"], params["b1"])
    a1, sh1 = _bn_affine(su1, sq1, y1.shape[1], params["g1"], params["be1"])
    z1 = bn_relu_apply(y1, a1, sh1, jnp.bfloat16)              # (c2, b*c*H*W)
    c2 = z1.shape[0]

    # --- conv2 + BN + ReLU ---------------------------------------------------
    # Conv3d frame: N=b, C=24, D=2w, H=2h, W=c2.  Slice frame: (b*c2, 2w, 2h, 24).
    t2 = jnp.transpose(z1.reshape(c2, b, c, H, W), (1, 0, 3, 4, 2))
    t2 = t2.reshape(b * c2, H, W, c)
    p2 = _im2col_T(t2)                                         # (9*24, b*c2*H*W)
    y2, su2, sq2 = conv3x3_bn_stats(p2, params["w2"], params["b2"])
    a2, sh2 = _bn_affine(su2, sq2, y2.shape[1], params["g2"], params["be2"])
    z2 = bn_relu_apply(y2, a2, sh2, jnp.float32)               # (24, b*c2*H*W)

    # back to PyTorch output layout (b, 24, 2w, 2h, c2)
    out = jnp.transpose(z2.reshape(c, b, c2, H, W), (1, 0, 3, 4, 2))
    return out


# ----------------------------------------------------------------------------
# main
# ----------------------------------------------------------------------------
if __name__ == "__main__":
    key = jax.random.PRNGKey(0)
    k_in, k_par = jax.random.split(key)

    # small shapes: batch=2, c=24 (fixed by conv2), spatial w=h=4, depth d=c1=6
    b, c, w, h, d = 2, 24, 4, 4, 6
    c1, c2 = d, 16

    x = jax.random.normal(k_in, (b, c, w, h, d), dtype=jnp.float32)
    params = init_params(k_par, c1, c2)

    fwd = jax.jit(functools.partial(sfc_back_forward, params=params))
    out = fwd(x)
    jax.block_until_ready(out)

    expected_shape = (b, 24, 2 * w, 2 * h, c2)
    assert out.shape == expected_shape, (out.shape, expected_shape)
    assert bool(jnp.all(jnp.isfinite(out)))
    print("KERNEL_OK")
</pallas_src>

<mosaic_0001>
module attributes {stable_mosaic.version = 11 : i64} {
  func.func @_gemm_bias_stats_kernel(%arg0: i32, %arg1: memref<18x1024xbf16, #tpu.memory_space<vmem>>, %arg2: memref<16x18xbf16, #tpu.memory_space<vmem>>, %arg3: memref<16x1xf32, #tpu.memory_space<vmem>>, %arg4: memref<16x1024xf32, #tpu.memory_space<vmem>>, %arg5: memref<1x16x1xf32, #tpu.memory_space<vmem>>, %arg6: memref<1x16x1xf32, #tpu.memory_space<vmem>>) attributes {dimension_semantics = [#tpu.dimension_semantics<parallel>], iteration_bounds = array<i64: 3>, scalar_prefetch = 0 : i64, scratch_operands = 0 : i64, tpu.core_type = #tpu.core_type<tc>, window_params = [{transform_indices = @transform_0, window_bounds = array<i64: 18, 1024>}, {pipeline_mode = #tpu.pipeline_mode<synchronous>, transform_indices = @transform_1, window_bounds = array<i64: 16, 18>}, {pipeline_mode = #tpu.pipeline_mode<synchronous>, transform_indices = @transform_2, window_bounds = array<i64: 16, 1>}, {transform_indices = @transform_3, window_bounds = array<i64: 16, 1024>}, {transform_indices = @transform_4, window_bounds = array<i64: 1, 16, 1>}, {transform_indices = @transform_5, window_bounds = array<i64: 1, 16, 1>}]} {
    %c0 = arith.constant 0 : index
    %c0_0 = arith.constant 0 : index
    %0 = vector.load %arg2[%c0, %c0_0] : memref<16x18xbf16, #tpu.memory_space<vmem>>, vector<16x18xbf16>
    %c0_1 = arith.constant 0 : index
    %c0_2 = arith.constant 0 : index
    %1 = vector.load %arg1[%c0_1, %c0_2] : memref<18x1024xbf16, #tpu.memory_space<vmem>>, vector<18x1024xbf16>
    %cst = arith.constant dense<0.000000e+00> : vector<16x1024xf32>
    %2 = tpu.matmul %0, %1, %cst {dimension_numbers = #tpu.dot_dimension_numbers<[1], [0], [0], [1], [0, 0, 1, 1], [], []>} : vector<16x18xbf16>, vector<18x1024xbf16>, vector<16x1024xf32> -> vector<16x1024xf32>
    %c0_3 = arith.constant 0 : index
    %c0_4 = arith.constant 0 : index
    %3 = vector.load %arg3[%c0_3, %c0_4] : memref<16x1xf32, #tpu.memory_space<vmem>>, vector<16x1xf32>
    %4 = vector.broadcast %3 : vector<16x1xf32> to vector<16x1024xf32>
    %5 = arith.addf %2, %4 : vector<16x1024xf32>
    %c0_5 = arith.constant 0 : index
    %c0_6 = arith.constant 0 : index
    %6 = vector.load %arg4[%c0_5, %c0_6] : memref<16x1024xf32, #tpu.memory_space<vmem>>, vector<16x1024xf32>
    tpu.vector_store %arg4[%c0_5, %c0_6], %5 {strides = array<i32>} : memref<16x1024xf32, #tpu.memory_space<vmem>>, vector<16x1024xf32>,
    %cst_7 = arith.constant dense<0.000000e+00> : vector<16xf32>
    %7 = vector.multi_reduction <add>, %5, %cst_7 [1] : vector<16x1024xf32> to vector<16xf32>
    %8 = vector.shape_cast %7 : vector<16xf32> to vector<16x1xf32>
    %c0_8 = arith.constant 0 : index
    %c0_9 = arith.constant 0 : index
    %c0_10 = arith.constant 0 : index
    %9 = vector.load %arg5[%c0_8, %c0_9, %c0_10] : memref<1x16x1xf32, #tpu.memory_space<vmem>>, vector<1x16x1xf32>
    %10 = vector.shape_cast %9 : vector<1x16x1xf32> to vector<16x1xf32>
    %11 = vector.shape_cast %8 : vector<16x1xf32> to vector<1x16x1xf32>
    tpu.vector_store %arg5[%c0_8, %c0_9, %c0_10], %11 {strides = array<i32>} : memref<1x16x1xf32, #tpu.memory_space<vmem>>, vector<1x16x1xf32>,
    %12 = arith.mulf %5, %5 : vector<16x1024xf32>
    %cst_11 = arith.constant dense<0.000000e+00> : vector<16xf32>
    %13 = vector.multi_reduction <add>, %12, %cst_11 [1] : vector<16x1024xf32> to vector<16xf32>
    %14 = vector.shape_cast %13 : vector<16xf32> to vector<16x1xf32>
    %c0_12 = arith.constant 0 : index
    %c0_13 = arith.constant 0 : index
    %c0_14 = arith.constant 0 : index
    %15 = vector.load %arg6[%c0_12, %c0_13, %c0_14] : memref<1x16x1xf32, #tpu.memory_space<vmem>>, vector<1x16x1xf32>
    %16 = vector.shape_cast %15 : vector<1x16x1xf32> to vector<16x1xf32>
    %17 = vector.shape_cast %14 : vector<16x1xf32> to vector<1x16x1xf32>
    tpu.vector_store %arg6[%c0_12, %c0_13, %c0_14], %17 {strides = array<i32>} : memref<1x16x1xf32, #tpu.memory_space<vmem>>, vector<1x16x1xf32>,
    return
  }
  func.func @transform_0(%arg0: i32) -> (i32, i32) {
    %c0_i32 = arith.constant 0 : i32
    %c0_i32_0 = arith.constant 0 : i32
    return %c0_i32, %arg0 : i32, i32
  }
  func.func @transform_1(%arg0: i32) -> (i32, i32) {
    %c0_i32 = arith.constant 0 : i32
    %c0_i32_0 = arith.constant 0 : i32
    %c0_i32_1 = arith.constant 0 : i32
    return %c0_i32, %c0_i32_0 : i32, i32
  }
  func.func @transform_2(%arg0: i32) -> (i32, i32) {
    %c0_i32 = arith.constant 0 : i32
    %c0_i32_0 = arith.constant 0 : i32
    %c0_i32_1 = arith.constant 0 : i32
    return %c0_i32, %c0_i32_0 : i32, i32
  }
  func.func @transform_3(%arg0: i32) -> (i32, i32) {
    %c0_i32 = arith.constant 0 : i32
    %c0_i32_0 = arith.constant 0 : i32
    return %c0_i32, %arg0 : i32, i32
  }
  func.func @transform_4(%arg0: i32) -> (i32, i32, i32) {
    %c0_i32 = arith.constant 0 : i32
    %c0_i32_0 = arith.constant 0 : i32
    %c0_i32_1 = arith.constant 0 : i32
    return %arg0, %c0_i32, %c0_i32_0 : i32, i32, i32
  }
  func.func @transform_5(%arg0: i32) -> (i32, i32, i32) {
    %c0_i32 = arith.constant 0 : i32
    %c0_i32_0 = arith.constant 0 : i32
    %c0_i32_1 = arith.constant 0 : i32
    return %arg0, %c0_i32, %c0_i32_0 : i32, i32, i32
  }
}

module attributes {stable_mosaic.version = 11 : i64} {
  func.func @_bn_relu_apply_kernel(%arg0: i32, %arg1: memref<16x1024xf32, #tpu.memory_space<vmem>>, %arg2: memref<16x1xf32, #tpu.memory_space<vmem>>, %arg3: memref<16x1xf32, #tpu.memory_space<vmem>>, %arg4: memref<16x1024xbf16, #tpu.memory_space<vmem>>) attributes {dimension_semantics = [#tpu.dimension_semantics<parallel>], iteration_bounds = array<i64: 3>, scalar_prefetch = 0 : i64, scratch_operands = 0 : i64, tpu.core_type = #tpu.core_type<tc>, window_params = [{transform_indices = @transform_0, window_bounds = array<i64: 16, 1024>}, {pipeline_mode = #tpu.pipeline_mode<synchronous>, transform_indices = @transform_1, window_bounds = array<i64: 16, 1>}, {pipeline_mode = #tpu.pipeline_mode<synchronous>, transform_indices = @transform_2, window_bounds = array<i64: 16, 1>}, {transform_indices = @transform_3, window_bounds = array<i64: 16, 1024>}]} {
    %c0 = arith.constant 0 : index
    %c0_0 = arith.constant 0 : index
    %0 = vector.load %arg1[%c0, %c0_0] : memref<16x1024xf32, #tpu.memory_space<vmem>>, vector<16x1024xf32>
    %c0_1 = arith.constant 0 : index
    %c0_2 = arith.constant 0 : index
    %1 = vector.load %arg2[%c0_1, %c0_2] : memref<16x1xf32, #tpu.memory_space<vmem>>, vector<16x1xf32>
    %2 = vector.broadcast %1 : vector<16x1xf32> to vector<16x1024xf32>
    %3 = arith.mulf %0, %2 : vector<16x1024xf32>
    %c0_3 = arith.constant 0 : index
    %c0_4 = arith.constant 0 : index
    %4 = vector.load %arg3[%c0_3, %c0_4] : memref<16x1xf32, #tpu.memory_space<vmem>>, vector<16x1xf32>
    %5 = vector.broadcast %4 : vector<16x1xf32> to vector<16x1024xf32>
    %6 = arith.addf %3, %5 : vector<16x1024xf32>
    %cst = arith.constant 0.000000e+00 : f32
    %7 = vector.broadcast %cst : f32 to vector<16x1024xf32>
    %8 = arith.maximumf %6, %7 : vector<16x1024xf32>
    %9 = arith.truncf %8 : vector<16x1024xf32> to vector<16x1024xbf16>
    %c0_5 = arith.constant 0 : index
    %c0_6 = arith.constant 0 : index
    %10 = vector.load %arg4[%c0_5, %c0_6] : memref<16x1024xbf16, #tpu.memory_space<vmem>>, vector<16x1024xbf16>
    tpu.vector_store %arg4[%c0_5, %c0_6], %9 {strides = array<i32>} : memref<16x1024xbf16, #tpu.memory_space<vmem>>, vector<16x1024xbf16>,
    return
  }
  func.func @transform_0(%arg0: i32) -> (i32, i32) {
    %c0_i32 = arith.constant 0 : i32
    %c0_i32_0 = arith.constant 0 : i32
    return %c0_i32, %arg0 : i32, i32
  }
  func.func @transform_1(%arg0: i32) -> (i32, i32) {
    %c0_i32 = arith.constant 0 : i32
    %c0_i32_0 = arith.constant 0 : i32
    %c0_i32_1 = arith.constant 0 : i32
    return %c0_i32, %c0_i32_0 : i32, i32
  }
  func.func @transform_2(%arg0: i32) -> (i32, i32) {
    %c0_i32 = arith.constant 0 : i32
    %c0_i32_0 = arith.constant 0 : i32
    %c0_i32_1 = arith.constant 0 : i32
    return %c0_i32, %c0_i32_0 : i32, i32
  }
  func.func @transform_3(%arg0: i32) -> (i32, i32) {
    %c0_i32 = arith.constant 0 : i32
    %c0_i32_0 = arith.constant 0 : i32
    return %c0_i32, %arg0 : i32, i32
  }
}

module attributes {stable_mosaic.version = 11 : i64} {
  func.func @_gemm_bias_stats_kernel(%arg0: i32, %arg1: memref<216x1024xbf16, #tpu.memory_space<vmem>>, %arg2: memref<24x216xbf16, #tpu.memory_space<vmem>>, %arg3: memref<24x1xf32, #tpu.memory_space<vmem>>, %arg4: memref<24x1024xf32, #tpu.memory_space<vmem>>, %arg5: memref<1x24x1xf32, #tpu.memory_space<vmem>>, %arg6: memref<1x24x1xf32, #tpu.memory_space<vmem>>) attributes {dimension_semantics = [#tpu.dimension_semantics<parallel>], iteration_bounds = array<i64: 2>, scalar_prefetch = 0 : i64, scratch_operands = 0 : i64, tpu.core_type = #tpu.core_type<tc>, window_params = [{transform_indices = @transform_0, window_bounds = array<i64: 216, 1024>}, {pipeline_mode = #tpu.pipeline_mode<synchronous>, transform_indices = @transform_1, window_bounds = array<i64: 24, 216>}, {pipeline_mode = #tpu.pipeline_mode<synchronous>, transform_indices = @transform_2, window_bounds = array<i64: 24, 1>}, {transform_indices = @transform_3, window_bounds = array<i64: 24, 1024>}, {transform_indices = @transform_4, window_bounds = array<i64: 1, 24, 1>}, {transform_indices = @transform_5, window_bounds = array<i64: 1, 24, 1>}]} {
    %c0 = arith.constant 0 : index
    %c0_0 = arith.constant 0 : index
    %0 = vector.load %arg2[%c0, %c0_0] : memref<24x216xbf16, #tpu.memory_space<vmem>>, vector<24x216xbf16>
    %c0_1 = arith.constant 0 : index
    %c0_2 = arith.constant 0 : index
    %1 = vector.load %arg1[%c0_1, %c0_2] : memref<216x1024xbf16, #tpu.memory_space<vmem>>, vector<216x1024xbf16>
    %cst = arith.constant dense<0.000000e+00> : vector<24x1024xf32>
    %2 = tpu.matmul %0, %1, %cst {dimension_numbers = #tpu.dot_dimension_numbers<[1], [0], [0], [1], [0, 0, 1, 1], [], []>} : vector<24x216xbf16>, vector<216x1024xbf16>, vector<24x1024xf32> -> vector<24x1024xf32>
    %c0_3 = arith.constant 0 : index
    %c0_4 = arith.constant 0 : index
    %3 = vector.load %arg3[%c0_3, %c0_4] : memref<24x1xf32, #tpu.memory_space<vmem>>, vector<24x1xf32>
    %4 = vector.broadcast %3 : vector<24x1xf32> to vector<24x1024xf32>
    %5 = arith.addf %2, %4 : vector<24x1024xf32>
    %c0_5 = arith.constant 0 : index
    %c0_6 = arith.constant 0 : index
    %6 = vector.load %arg4[%c0_5, %c0_6] : memref<24x1024xf32, #tpu.memory_space<vmem>>, vector<24x1024xf32>
    tpu.vector_store %arg4[%c0_5, %c0_6], %5 {strides = array<i32>} : memref<24x1024xf32, #tpu.memory_space<vmem>>, vector<24x1024xf32>,
    %cst_7 = arith.constant dense<0.000000e+00> : vector<24xf32>
    %7 = vector.multi_reduction <add>, %5, %cst_7 [1] : vector<24x1024xf32> to vector<24xf32>
    %8 = vector.shape_cast %7 : vector<24xf32> to vector<24x1xf32>
    %c0_8 = arith.constant 0 : index
    %c0_9 = arith.constant 0 : index
    %c0_10 = arith.constant 0 : index
    %9 = vector.load %arg5[%c0_8, %c0_9, %c0_10] : memref<1x24x1xf32, #tpu.memory_space<vmem>>, vector<1x24x1xf32>
    %10 = vector.shape_cast %9 : vector<1x24x1xf32> to vector<24x1xf32>
    %11 = vector.shape_cast %8 : vector<24x1xf32> to vector<1x24x1xf32>
    tpu.vector_store %arg5[%c0_8, %c0_9, %c0_10], %11 {strides = array<i32>} : memref<1x24x1xf32, #tpu.memory_space<vmem>>, vector<1x24x1xf32>,
    %12 = arith.mulf %5, %5 : vector<24x1024xf32>
    %cst_11 = arith.constant dense<0.000000e+00> : vector<24xf32>
    %13 = vector.multi_reduction <add>, %12, %cst_11 [1] : vector<24x1024xf32> to vector<24xf32>
    %14 = vector.shape_cast %13 : vector<24xf32> to vector<24x1xf32>
    %c0_12 = arith.constant 0 : index
    %c0_13 = arith.constant 0 : index
    %c0_14 = arith.constant 0 : index
    %15 = vector.load %arg6[%c0_12, %c0_13, %c0_14] : memref<1x24x1xf32, #tpu.memory_space<vmem>>, vector<1x24x1xf32>
    %16 = vector.shape_cast %15 : vector<1x24x1xf32> to vector<24x1xf32>
    %17 = vector.shape_cast %14 : vector<24x1xf32> to vector<1x24x1xf32>
    tpu.vector_store %arg6[%c0_12, %c0_13, %c0_14], %17 {strides = array<i32>} : memref<1x24x1xf32, #tpu.memory_space<vmem>>, vector<1x24x1xf32>,
    return
  }
  func.func @transform_0(%arg0: i32) -> (i32, i32) {
    %c0_i32 = arith.constant 0 : i32
    %c0_i32_0 = arith.constant 0 : i32
    return %c0_i32, %arg0 : i32, i32
  }
  func.func @transform_1(%arg0: i32) -> (i32, i32) {
    %c0_i32 = arith.constant 0 : i32
    %c0_i32_0 = arith.constant 0 : i32
    %c0_i32_1 = arith.constant 0 : i32
    return %c0_i32, %c0_i32_0 : i32, i32
  }
  func.func @transform_2(%arg0: i32) -> (i32, i32) {
    %c0_i32 = arith.constant 0 : i32
    %c0_i32_0 = arith.constant 0 : i32
    %c0_i32_1 = arith.constant 0 : i32
    return %c0_i32, %c0_i32_0 : i32, i32
  }
  func.func @transform_3(%arg0: i32) -> (i32, i32) {
    %c0_i32 = arith.constant 0 : i32
    %c0_i32_0 = arith.constant 0 : i32
    return %c0_i32, %arg0 : i32, i32
  }
  func.func @transform_4(%arg0: i32) -> (i32, i32, i32) {
    %c0_i32 = arith.constant 0 : i32
    %c0_i32_0 = arith.constant 0 : i32
    %c0_i32_1 = arith.constant 0 : i32
    return %arg0, %c0_i32, %c0_i32_0 : i32, i32, i32
  }
  func.func @transform_5(%arg0: i32) -> (i32, i32, i32) {
    %c0_i32 = arith.constant 0 : i32
    %c0_i32_0 = arith.constant 0 : i32
    %c0_i32_1 = arith.constant 0 : i32
    return %arg0, %c0_i32, %c0_i32_0 : i32, i32, i32
  }
}

module attributes {stable_mosaic.version = 11 : i64} {
  func.func @_bn_relu_apply_kernel(%arg0: i32, %arg1: memref<24x1024xf32, #tpu.memory_space<vmem>>, %arg2: memref<24x1xf32, #tpu.memory_space<vmem>>, %arg3: memref<24x1xf32, #tpu.memory_space<vmem>>, %arg4: memref<24x1024xf32, #tpu.memory_space<vmem>>) attributes {dimension_semantics = [#tpu.dimension_semantics<parallel>], iteration_bounds = array<i64: 2>, scalar_prefetch = 0 : i64, scratch_operands = 0 : i64, tpu.core_type = #tpu.core_type<tc>, window_params = [{transform_indices = @transform_0, window_bounds = array<i64: 24, 1024>}, {pipeline_mode = #tpu.pipeline_mode<synchronous>, transform_indices = @transform_1, window_bounds = array<i64: 24, 1>}, {pipeline_mode = #tpu.pipeline_mode<synchronous>, transform_indices = @transform_2, window_bounds = array<i64: 24, 1>}, {transform_indices = @transform_3, window_bounds = array<i64: 24, 1024>}]} {
    %c0 = arith.constant 0 : index
    %c0_0 = arith.constant 0 : index
    %0 = vector.load %arg1[%c0, %c0_0] : memref<24x1024xf32, #tpu.memory_space<vmem>>, vector<24x1024xf32>
    %c0_1 = arith.constant 0 : index
    %c0_2 = arith.constant 0 : index
    %1 = vector.load %arg2[%c0_1, %c0_2] : memref<24x1xf32, #tpu.memory_space<vmem>>, vector<24x1xf32>
    %2 = vector.broadcast %1 : vector<24x1xf32> to vector<24x1024xf32>
    %3 = arith.mulf %0, %2 : vector<24x1024xf32>
    %c0_3 = arith.constant 0 : index
    %c0_4 = arith.constant 0 : index
    %4 = vector.load %arg3[%c0_3, %c0_4] : memref<24x1xf32, #tpu.memory_space<vmem>>, vector<24x1xf32>
    %5 = vector.broadcast %4 : vector<24x1xf32> to vector<24x1024xf32>
    %6 = arith.addf %3, %5 : vector<24x1024xf32>
    %cst = arith.constant 0.000000e+00 : f32
    %7 = vector.broadcast %cst : f32 to vector<24x1024xf32>
    %8 = arith.maximumf %6, %7 : vector<24x1024xf32>
    %c0_5 = arith.constant 0 : index
    %c0_6 = arith.constant 0 : index
    %9 = vector.load %arg4[%c0_5, %c0_6] : memref<24x1024xf32, #tpu.memory_space<vmem>>, vector<24x1024xf32>
    tpu.vector_store %arg4[%c0_5, %c0_6], %8 {strides = array<i32>} : memref<24x1024xf32, #tpu.memory_space<vmem>>, vector<24x1024xf32>,
    return
  }
  func.func @transform_0(%arg0: i32) -> (i32, i32) {
    %c0_i32 = arith.constant 0 : i32
    %c0_i32_0 = arith.constant 0 : i32
    return %c0_i32, %arg0 : i32, i32
  }
  func.func @transform_1(%arg0: i32) -> (i32, i32) {
    %c0_i32 = arith.constant 0 : i32
    %c0_i32_0 = arith.constant 0 : i32
    %c0_i32_1 = arith.constant 0 : i32
    return %c0_i32, %c0_i32_0 : i32, i32
  }
  func.func @transform_2(%arg0: i32) -> (i32, i32) {
    %c0_i32 = arith.constant 0 : i32
    %c0_i32_0 = arith.constant 0 : i32
    %c0_i32_1 = arith.constant 0 : i32
    return %c0_i32, %c0_i32_0 : i32, i32
  }
  func.func @transform_3(%arg0: i32) -> (i32, i32) {
    %c0_i32 = arith.constant 0 : i32
    %c0_i32_0 = arith.constant 0 : i32
    return %c0_i32, %arg0 : i32, i32
  }
}

</mosaic_0001>

<llo_original>
// kernel: sfc_back_forward.5
$region0: #{sfc_back_forward.5}
  #allocation0 [shape = 'u32[]', space=smem, size = 0x4, offset = 0x4, fixed_abs, tag = 'smem constant byte address 0x4 - core index']
  #allocation1 [shape = 'u32[144,128]{1,0:T(1,128)}', space=vmem, size = 0x12000, scoped, tag = 'internal scratch']
  %s0 = inlined_call_operand.vmem [shape: f32[16,3072], index: 0, kind: input, shape index: {}]
  %s1 = inlined_call_operand.vmem [shape: f32[16,1], index: 1, kind: input, shape index: {}]
  %s2 = inlined_call_operand.vmem [shape: f32[16,1], index: 2, kind: input, shape index: {}]
  %s3 = inlined_call_operand.vmem [shape: bf16[16,3072], index: 3, kind: output, shape index: {}]
  %s4 = sld [smem:[#allocation0]]
  $region87: #{sfc_back_forward.5} parent=0
    _
  %s6 = ssub.s32 1, %s4
  %s7 = scalar_select 0, %s6, %s4
  $region1: #{sfc_back_forward.5} parent=0
    #allocation2 [shape = 'u8[131072]{0}', space=vmem, size = 0x20000, scoped, tag = 'input window, operand 0']
    #allocation3 [shape = 'u8[65536]{0}', space=vmem, size = 0x10000, scoped, tag = 'output window, operand 0']
    loop: start=0, step=1, limit=5
    $region2: #{sfc_back_forward.5} parent=1 // loop_pre_header
      _
    $region3: #{sfc_back_forward.5} parent=1 // loop_header
      %s9 = sphi 0, %s13
      %p10 = scmp.ge.s32.totalorder %s9, 5
      %s19 = sphi 0, %s21
      %s22 = sphi 0, %s19
      %s23 = sphi 0, %s22
      %s39 = sphi 0, %s23
      %s43 = sphi 0, %s43
      %s45 = sphi 0, %s43
      %s46 = sphi 0, %s45
      %s60 = sphi 0, %s46
      %s64 = sphi 0, %s64
      %s66 = sphi 0, %s64
      %s67 = sphi 0, %s66
      %s81 = sphi 0, %s67
      %s87 = sphi 0, %s89
      %s90 = sphi 0, %s87
      %s91 = sphi 0, %s90
      %s107 = sphi 0, %s91
    $region4: #{sfc_back_forward.5} parent=1 // loop_header_branch
      %12 = sbr.rel (%p10) target = $region8
    $region5: #{sfc_back_forward.5} parent=1 // loop_body
      %s14 = ssub.s32 %s9, 1
      %s15 = ssub.s32 %s9, 2
      %s16 = sadd.s32 %s9, 1
      %s17 = ssub.s32 %s9, %s16
      %p18 = scmp.eq.s32.totalorder %s17, 0
      %s20 = sadd.s32 %s19, 1
      %s21 = scalar_select %p18, %s19, %s20
      %p24 = pneg %p18
      %p25 = scmp.eq.s32.totalorder %s9, 2
      %p26 = por %p24, %p25
      %p27 = scmp.ne.s32.totalorder %s19, %s22
      %p28 = scmp.eq.s32.totalorder %s9, 0
      %p29 = por %p27, %p28
      %p30 = scmp.ne.s32.totalorder %s19, %s22
      %p31 = scmp.eq.s32.totalorder %s14, 2
      %p32 = por %p30, %p31
      %p33 = scmp.ne.s32.totalorder %s22, %s23
      %p34 = scmp.eq.s32.totalorder %s14, 0
      %p35 = por %p33, %p34
      %p36 = scmp.ne.s32.totalorder %s22, %s23
      %p37 = scmp.eq.s32.totalorder %s15, 2
      %p38 = por %p36, %p37
      %p40 = scmp.ne.s32.totalorder %s23, %s39
      %p41 = scmp.eq.s32.totalorder %s15, 0
      %p42 = por %p40, %p41
      %s44 = sadd.s32 %s43, 1
      %p47 = scmp.eq.s32.totalorder %s9, 2
      %p48 = scmp.ne.s32.totalorder %s43, %s45
      %p49 = scmp.eq.s32.totalorder %s9, 0
      %p50 = por %p48, %p49
      %p51 = scmp.ne.s32.totalorder %s43, %s45
      %p52 = scmp.eq.s32.totalorder %s14, 2
      %p53 = por %p51, %p52
      %p54 = scmp.ne.s32.totalorder %s45, %s46
      %p55 = scmp.eq.s32.totalorder %s14, 0
      %p56 = por %p54, %p55
      %p57 = scmp.ne.s32.totalorder %s45, %s46
      %p58 = scmp.eq.s32.totalorder %s15, 2
      %p59 = por %p57, %p58
      %p61 = scmp.ne.s32.totalorder %s46, %s60
      %p62 = scmp.eq.s32.totalorder %s15, 0
      %p63 = por %p61, %p62
      %s65 = sadd.s32 %s64, 1
      %p68 = scmp.eq.s32.totalorder %s9, 2
      %p69 = scmp.ne.s32.totalorder %s64, %s66
      %p70 = scmp.eq.s32.totalorder %s9, 0
      %p71 = por %p69, %p70
      %p72 = scmp.ne.s32.totalorder %s64, %s66
      %p73 = scmp.eq.s32.totalorder %s14, 2
      %p74 = por %p72, %p73
      %p75 = scmp.ne.s32.totalorder %s66, %s67
      %p76 = scmp.eq.s32.totalorder %s14, 0
      %p77 = por %p75, %p76
      %p78 = scmp.ne.s32.totalorder %s66, %s67
      %p79 = scmp.eq.s32.totalorder %s15, 2
      %p80 = por %p78, %p79
      %p82 = scmp.ne.s32.totalorder %s67, %s81
      %p83 = scmp.eq.s32.totalorder %s15, 0
      %p84 = por %p82, %p83
      %s85 = ssub.s32 %s9, %s16
      %p86 = scmp.eq.s32.totalorder %s85, 0
      %s88 = sadd.s32 %s87, 1
      %s89 = scalar_select %p86, %s87, %s88
      %p92 = pneg %p86
      %p93 = scmp.eq.s32.totalorder %s9, 2
      %p94 = por %p92, %p93
      %p95 = scmp.ne.s32.totalorder %s87, %s90
      %p96 = scmp.eq.s32.totalorder %s9, 0
      %p97 = por %p95, %p96
      %p98 = scmp.ne.s32.totalorder %s87, %s90
      %p99 = scmp.eq.s32.totalorder %s14, 2
      %p100 = por %p98, %p99
      %p101 = scmp.ne.s32.totalorder %s90, %s91
      %p102 = scmp.eq.s32.totalorder %s14, 0
      %p103 = por %p101, %p102
      %p104 = scmp.ne.s32.totalorder %s90, %s91
      %p105 = scmp.eq.s32.totalorder %s15, 2
      %p106 = por %p104, %p105
      %p108 = scmp.ne.s32.totalorder %s91, %s107
      %p109 = scmp.eq.s32.totalorder %s15, 0
      %p110 = por %p108, %p109
      %p111 = scmp.le.s32.totalorder 1, %s9
      %p112 = scmp.lt.s32.totalorder %s9, 4
      %p113 = pnand %p111, %p112
      %p114 = pneg %p113
      // Predicated region
      $region9: #{sfc_back_forward.5} parent=5 // pred_check
        _
      $region10: #{sfc_back_forward.5} parent=5 // pred_check_branch
        %116 = sbr.rel (%p113) target = $region12
      $region11: #{sfc_back_forward.5} parent=5 // pred_region
        %s117 = ssub.s32 %s9, 1
        // Predicated region
        $region13: #{sfc_back_forward.5} parent=11 // pred_check
          %p118 = pneg %p56
        $region14: #{sfc_back_forward.5} parent=11 // pred_check_branch
          %120 = sbr.rel (%p118) target = $region16
        $region15: #{sfc_back_forward.5} parent=11 // pred_region
          _
        $region16: #{sfc_back_forward.5} parent=11 // pred_fallthru
          _
        // Predicated region
        $region17: #{sfc_back_forward.5} parent=11 // pred_check
          %p121 = pneg %p77
        $region18: #{sfc_back_forward.5} parent=11 // pred_check_branch
          %123 = sbr.rel (%p121) target = $region20
        $region19: #{sfc_back_forward.5} parent=11 // pred_region
          _
        $region20: #{sfc_back_forward.5} parent=11 // pred_fallthru
          _
      $region12: #{sfc_back_forward.5} parent=5 // pred_fallthru
        _
      %p124 = scmp.lt.s32.totalorder %s9, 3
      // Predicated region
      $region21: #{sfc_back_forward.5} parent=5 // pred_check
        %p125 = pneg %p124
      $region22: #{sfc_back_forward.5} parent=5 // pred_check_branch
        %127 = sbr.rel (%p125) target = $region24
      $region23: #{sfc_back_forward.5} parent=5 // pred_region
        // Predicated region
        $region25: #{sfc_back_forward.5} parent=23 // pred_check
          %p128 = pneg %p29
        $region26: #{sfc_back_forward.5} parent=23 // pred_check_branch
          %130 = sbr.rel (%p128) target = $region28
        $region27: #{sfc_back_forward.5} parent=23 // pred_region
          %s131 = sand.u32 %s19, 1
          %s132 = sand.u32 %s19, 1
          %s133 = smul.addr %s132, 128
          %s134 = scalar_lea.vmem [#allocation2], %s133
          %s135 = smul.u32 8, %s9
          %s136 = smul.addr %s135, 8
          %s137 = scalar_lea.vmem %s0, %s136
          // Predicated region
          $region29: #{sfc_back_forward.5} parent=27 // pred_check
            _
          $region30: #{sfc_back_forward.5} parent=27 // pred_check_branch
            %139 = sbr.rel (0) target = $region32
          $region31: #{sfc_back_forward.5} parent=27 // pred_region
            // Predicated region
            $region33: #{sfc_back_forward.5} parent=31 // pred_check
              _
            $region34: #{sfc_back_forward.5} parent=31 // pred_check_branch
              %141 = sbr.rel (0) target = $region36
            $region35: #{sfc_back_forward.5} parent=31 // pred_region
              loop: start=0, step=1, limit=1
              $region37: #{sfc_back_forward.5} parent=35 // loop_pre_header
                _
              $region38: #{sfc_back_forward.5} parent=35 // loop_header
                %s143 = sphi 0, %s147
                %p144 = scmp.ge.s32.totalorder %s143, 1
                %s148 = sphi %s137, %s137
                %s149 = sphi %s134, %s134
              $region39: #{sfc_back_forward.5} parent=35 // loop_header_branch
                %146 = sbr.rel (%p144) target = $region43
              $region40: #{sfc_back_forward.5} parent=35 // loop_body
                %v150 = vld [vmem:[%s148] sm:$0xff]
                %151 = vst [vmem:[%s149] sm:$0xff] %v150
                %v152 = vld [vmem:[%s148 + $0x8] sm:$0xff]
                %153 = vst [vmem:[%s149 + $0x8] sm:$0xff] %v152
                %v154 = vld [vmem:[%s148 + $0x10] sm:$0xff]
                %155 = vst [vmem:[%s149 + $0x10] sm:$0xff] %v154
                %v156 = vld [vmem:[%s148 + $0x18] sm:$0xff]
                %157 = vst [vmem:[%s149 + $0x18] sm:$0xff] %v156
                %v158 = vld [vmem:[%s148 + $0x20] sm:$0xff]
                %159 = vst [vmem:[%s149 + $0x20] sm:$0xff] %v158
                %v160 = vld [vmem:[%s148 + $0x28] sm:$0xff]
                %161 = vst [vmem:[%s149 + $0x28] sm:$0xff] %v160
                %v162 = vld [vmem:[%s148 + $0x30] sm:$0xff]
                %163 = vst [vmem:[%s149 + $0x30] sm:$0xff] %v162
                %v164 = vld [vmem:[%s148 + $0x38] sm:$0xff]
                %165 = vst [vmem:[%s149 + $0x38] sm:$0xff] %v164
                %v166 = vld [vmem:[%s148 + $0xc0] sm:$0xff]
                %167 = vst [vmem:[%s149 + $0x40] sm:$0xff] %v166
                %v168 = vld [vmem:[%s148 + $0xc8] sm:$0xff]
                %169 = vst [vmem:[%s149 + $0x48] sm:$0xff] %v168
                %v170 = vld [vmem:[%s148 + $0xd0] sm:$0xff]
                %171 = vst [vmem:[%s149 + $0x50] sm:$0xff] %v170
                %v172 = vld [vmem:[%s148 + $0xd8] sm:$0xff]
                %173 = vst [vmem:[%s149 + $0x58] sm:$0xff] %v172
                %v174 = vld [vmem:[%s148 + $0xe0] sm:$0xff]
                %175 = vst [vmem:[%s149 + $0x60] sm:$0xff] %v174
                %v176 = vld [vmem:[%s148 + $0xe8] sm:$0xff]
                %177 = vst [vmem:[%s149 + $0x68] sm:$0xff] %v176
                %v178 = vld [vmem:[%s148 + $0xf0] sm:$0xff]
                %179 = vst [vmem:[%s149 + $0x70] sm:$0xff] %v178
                %v180 = vld [vmem:[%s148 + $0xf8] sm:$0xff]
                %181 = vst [vmem:[%s149 + $0x78] sm:$0xff] %v180
              $region41: #{sfc_back_forward.5} parent=35 // loop_footer
                %s147 = sadd.s32 1, %s143
              $region42: #{sfc_back_forward.5} parent=35 // loop_footer_branch
                %142 = sbr.rel target = $region38
              $region43: #{sfc_back_forward.5} parent=35 // loop_exit
                _
            $region36: #{sfc_back_forward.5} parent=31 // pred_fallthru
              _
            // Predicated region
            $region44: #{sfc_back_forward.5} parent=31 // pred_check
              _
            $region45: #{sfc_back_forward.5} parent=31 // pred_check_branch
              %183 = sbr.rel target = $region47
            $region46: #{sfc_back_forward.5} parent=31 // pred_region
              _
            $region47: #{sfc_back_forward.5} parent=31 // pred_fallthru
              _
          $region32: #{sfc_back_forward.5} parent=27 // pred_fallthru
            _
          %184 = vnop
        $region28: #{sfc_back_forward.5} parent=23 // pred_fallthru
          _
      $region24: #{sfc_back_forward.5} parent=5 // pred_fallthru
        _
      %p185 = scmp.le.s32.totalorder 1, %s9
      %p186 = scmp.lt.s32.totalorder %s9, 4
      %p187 = pnand %p185, %p186
      %p188 = pneg %p187
      // Predicated region
      $region48: #{sfc_back_forward.5} parent=5 // pred_check
        _
      $region49: #{sfc_back_forward.5} parent=5 // pred_check_branch
        %190 = sbr.rel (%p187) target = $region51
      $region50: #{sfc_back_forward.5} parent=5 // pred_region
        %s191 = ssub.s32 %s9, 1
        %s192 = sand.u32 %s22, 1
        %s193 = sand.u32 %s22, 1
        %s194 = smul.addr %s193, 128
        %s195 = scalar_lea.vmem [#allocation2], %s194
        // Predicated region
        $region52: #{sfc_back_forward.5} parent=50 // pred_check
          %p196 = pneg %p35
        $region53: #{sfc_back_forward.5} parent=50 // pred_check_branch
          %198 = sbr.rel (%p196) target = $region55
        $region54: #{sfc_back_forward.5} parent=50 // pred_region
          _
        $region55: #{sfc_back_forward.5} parent=50 // pred_fallthru
          _
        %s199 = sand.u32 %s22, 1
        %s200 = sand.u32 %s22, 1
        %s201 = smul.addr %s200, 128
        %s202 = scalar_lea.vmem [#allocation2], %s201
        %p203 = pneg %p35
        %p204 = pneg %p32
        %p205 = pneg %p56
        %p206 = pneg %p53
        %p207 = pneg %p77
        %p208 = pneg %p74
        %p209 = pneg %p103
        %p210 = pneg %p100
        %s211 = sand.u32 %s90, 1
        %s212 = sand.u32 %s90, 1
        %s213 = smul.addr %s212, 64
        %s214 = scalar_lea.vmem [#allocation3], %s213
        %s215 = smul.u32 8, %s14
        %s216 = smul.u32 8, %s14
        %v217 = vld [vmem:[%s195] sm:$0xff]
        %v218 = vld [vmem:[%s195 + $0x8] sm:$0xff]
        %v219 = vld [vmem:[%s195 + $0x10] sm:$0xff]
        %v220 = vld [vmem:[%s195 + $0x18] sm:$0xff]
        %v221 = vld [vmem:[%s195 + $0x20] sm:$0xff]
        %v222 = vld [vmem:[%s195 + $0x28] sm:$0xff]
        %v223 = vld [vmem:[%s195 + $0x30] sm:$0xff]
        %v224 = vld [vmem:[%s195 + $0x38] sm:$0xff]
        %v225 = vld [vmem:[%s195 + $0x40] sm:$0xff]
        %v226 = vld [vmem:[%s195 + $0x48] sm:$0xff]
        %v227 = vld [vmem:[%s195 + $0x50] sm:$0xff]
        %v228 = vld [vmem:[%s195 + $0x58] sm:$0xff]
        %v229 = vld [vmem:[%s195 + $0x60] sm:$0xff]
        %v230 = vld [vmem:[%s195 + $0x68] sm:$0xff]
        %v231 = vld [vmem:[%s195 + $0x70] sm:$0xff]
        %v232 = vld [vmem:[%s195 + $0x78] sm:$0xff]
        %v233 = vld [vmem:[%s1] sm:$0xff]
        %v234 = vld [vmem:[%s1 + $0x8] sm:$0xff]
        %236 = vset.pattern.permute.xlu0 0
        %237 = vperm.xlu0 %236, %v233
        %v238 = vpop.permute.xlu0 %237
        %241 = vset.pattern.permute.xlu0 0
        %242 = vperm.xlu0 %241, %v234
        %v243 = vpop.permute.xlu0 %242
        %v245 = vmul.f32 %v217, %v238
        %v246 = vmul.f32 %v218, %v238
        %v247 = vmul.f32 %v219, %v238
        %v248 = vmul.f32 %v220, %v238
        %v249 = vmul.f32 %v221, %v238
        %v250 = vmul.f32 %v222, %v238
        %v251 = vmul.f32 %v223, %v238
        %v252 = vmul.f32 %v224, %v238
        %v253 = vmul.f32 %v225, %v243
        %v254 = vmul.f32 %v226, %v243
        %v255 = vmul.f32 %v227, %v243
        %v256 = vmul.f32 %v228, %v243
        %v257 = vmul.f32 %v229, %v243
        %v258 = vmul.f32 %v230, %v243
        %v259 = vmul.f32 %v231, %v243
        %v260 = vmul.f32 %v232, %v243
        %v261 = vld [vmem:[%s2] sm:$0xff]
        %v262 = vld [vmem:[%s2 + $0x8] sm:$0xff]
        %264 = vset.pattern.permute.xlu0 0
        %265 = vperm.xlu0 %264, %v261
        %v266 = vpop.permute.xlu0 %265
        %269 = vset.pattern.permute.xlu0 0
        %270 = vperm.xlu0 %269, %v262
        %v271 = vpop.permute.xlu0 %270
        %v273 = vadd.f32 %v245, %v266
        %v274 = vadd.f32 %v246, %v266
        %v275 = vadd.f32 %v247, %v266
        %v276 = vadd.f32 %v248, %v266
        %v277 = vadd.f32 %v249, %v266
        %v278 = vadd.f32 %v250, %v266
        %v279 = vadd.f32 %v251, %v266
        %v280 = vadd.f32 %v252, %v266
        %v281 = vadd.f32 %v253, %v271
        %v282 = vadd.f32 %v254, %v271
        %v283 = vadd.f32 %v255, %v271
        %v284 = vadd.f32 %v256, %v271
        %v285 = vadd.f32 %v257, %v271
        %v286 = vadd.f32 %v258, %v271
        %v287 = vadd.f32 %v259, %v271
        %v288 = vadd.f32 %v260, %v271
        %v289 = vmax.f32 %v273, 0.0
        %v290 = vmax.f32 %v274, 0.0
        %v291 = vmax.f32 %v275, 0.0
        %v292 = vmax.f32 %v276, 0.0
        %v293 = vmax.f32 %v277, 0.0
        %v294 = vmax.f32 %v278, 0.0
        %v295 = vmax.f32 %v279, 0.0
        %v296 = vmax.f32 %v280, 0.0
        %v297 = vmax.f32 %v281, 0.0
        %v298 = vmax.f32 %v282, 0.0
        %v299 = vmax.f32 %v283, 0.0
        %v300 = vmax.f32 %v284, 0.0
        %v301 = vmax.f32 %v285, 0.0
        %v302 = vmax.f32 %v286, 0.0
        %v303 = vmax.f32 %v287, 0.0
        %v304 = vmax.f32 %v288, 0.0
        %v305 = vpack.c.bf16 %v297, %v289
        %v306 = vpack.c.bf16 %v298, %v290
        %v307 = vpack.c.bf16 %v299, %v291
        %v308 = vpack.c.bf16 %v300, %v292
        %v309 = vpack.c.bf16 %v301, %v293
        %v310 = vpack.c.bf16 %v302, %v294
        %v311 = vpack.c.bf16 %v303, %v295
        %v312 = vpack.c.bf16 %v304, %v296
        %v321 = vunpack.c.l.b16 %v305
        %v322 = vunpack.c.l.b16 %v306
        %v323 = vunpack.c.l.b16 %v307
        %v324 = vunpack.c.l.b16 %v308
        %v325 = vunpack.c.l.b16 %v309
        %v326 = vunpack.c.l.b16 %v310
        %v327 = vunpack.c.l.b16 %v311
        %v328 = vunpack.c.l.b16 %v312
        %v329 = vunpack.c.h.b16 %v305
        %v330 = vunpack.c.h.b16 %v306
        %v331 = vunpack.c.h.b16 %v307
        %v332 = vunpack.c.h.b16 %v308
        %v333 = vunpack.c.h.b16 %v309
        %v334 = vunpack.c.h.b16 %v310
        %v335 = vunpack.c.h.b16 %v311
        %v336 = vunpack.c.h.b16 %v312
        %v337 = vpack.c.b16 %v322, %v321
        %v338 = vpack.c.b16 %v324, %v323
        %v339 = vpack.c.b16 %v326, %v325
        %v340 = vpack.c.b16 %v328, %v327
        %v341 = vpack.c.b16 %v330, %v329
        %v342 = vpack.c.b16 %v332, %v331
        %v343 = vpack.c.b16 %v334, %v333
        %v344 = vpack.c.b16 %v336, %v335
        %353 = vst [vmem:[%s214] sm:$0xff] %v337
        %354 = vst [vmem:[%s214 + $0x8] sm:$0xff] %v338
        %355 = vst [vmem:[%s214 + $0x10] sm:$0xff] %v339
        %356 = vst [vmem:[%s214 + $0x18] sm:$0xff] %v340
        %357 = vst [vmem:[%s214 + $0x20] sm:$0xff] %v341
        %358 = vst [vmem:[%s214 + $0x28] sm:$0xff] %v342
        %359 = vst [vmem:[%s214 + $0x30] sm:$0xff] %v343
        %360 = vst [vmem:[%s214 + $0x38] sm:$0xff] %v344
        %s361 = sand.u32 %s90, 1
        %s362 = sand.u32 %s90, 1
        %s363 = smul.addr %s362, 64
        %s364 = scalar_lea.vmem [#allocation3], %s363
        // Predicated region
        $region56: #{sfc_back_forward.5} parent=50 // pred_check
          %p365 = pneg %p100
        $region57: #{sfc_back_forward.5} parent=50 // pred_check_branch
          %367 = sbr.rel (%p365) target = $region59
        $region58: #{sfc_back_forward.5} parent=50 // pred_region
          %s368 = smul.u32 8, %s14
          %s369 = smul.addr %s368, 4
          %s370 = scalar_lea.vmem %s3, %s369
          // Predicated region
          $region60: #{sfc_back_forward.5} parent=58 // pred_check
            _
          $region61: #{sfc_back_forward.5} parent=58 // pred_check_branch
            %372 = sbr.rel (0) target = $region63
          $region62: #{sfc_back_forward.5} parent=58 // pred_region
            // Predicated region
            $region64: #{sfc_back_forward.5} parent=62 // pred_check
              _
            $region65: #{sfc_back_forward.5} parent=62 // pred_check_branch
              %374 = sbr.rel (0) target = $region67
            $region66: #{sfc_back_forward.5} parent=62 // pred_region
              loop: start=0, step=1, limit=1
              $region68: #{sfc_back_forward.5} parent=66 // loop_pre_header
                _
              $region69: #{sfc_back_forward.5} parent=66 // loop_header
                %s376 = sphi 0, %s380
                %p377 = scmp.ge.s32.totalorder %s376, 1
                %s381 = sphi %s364, %s364
                %s382 = sphi %s370, %s370
              $region70: #{sfc_back_forward.5} parent=66 // loop_header_branch
                %379 = sbr.rel (%p377) target = $region74
              $region71: #{sfc_back_forward.5} parent=66 // loop_body
                %v383 = vld [vmem:[%s381] sm:$0xff]
                %384 = vst [vmem:[%s382] sm:$0xff] %v383
                %v385 = vld [vmem:[%s381 + $0x8] sm:$0xff]
                %386 = vst [vmem:[%s382 + $0x8] sm:$0xff] %v385
                %v387 = vld [vmem:[%s381 + $0x10] sm:$0xff]
                %388 = vst [vmem:[%s382 + $0x10] sm:$0xff] %v387
                %v389 = vld [vmem:[%s381 + $0x18] sm:$0xff]
                %390 = vst [vmem:[%s382 + $0x18] sm:$0xff] %v389
                %v391 = vld [vmem:[%s381 + $0x20] sm:$0xff]
                %392 = vst [vmem:[%s382 + $0x60] sm:$0xff] %v391
                %v393 = vld [vmem:[%s381 + $0x28] sm:$0xff]
                %394 = vst [vmem:[%s382 + $0x68] sm:$0xff] %v393
                %v395 = vld [vmem:[%s381 + $0x30] sm:$0xff]
                %396 = vst [vmem:[%s382 + $0x70] sm:$0xff] %v395
                %v397 = vld [vmem:[%s381 + $0x38] sm:$0xff]
                %398 = vst [vmem:[%s382 + $0x78] sm:$0xff] %v397
              $region72: #{sfc_back_forward.5} parent=66 // loop_footer
                %s380 = sadd.s32 1, %s376
              $region73: #{sfc_back_forward.5} parent=66 // loop_footer_branch
                %375 = sbr.rel target = $region69
              $region74: #{sfc_back_forward.5} parent=66 // loop_exit
                _
            $region67: #{sfc_back_forward.5} parent=62 // pred_fallthru
              _
            // Predicated region
            $region75: #{sfc_back_forward.5} parent=62 // pred_check
              _
            $region76: #{sfc_back_forward.5} parent=62 // pred_check_branch
              %400 = sbr.rel target = $region78
            $region77: #{sfc_back_forward.5} parent=62 // pred_region
              _
            $region78: #{sfc_back_forward.5} parent=62 // pred_fallthru
              _
          $region63: #{sfc_back_forward.5} parent=58 // pred_fallthru
            _
          %401 = vnop
        $region59: #{sfc_back_forward.5} parent=50 // pred_fallthru
          _
      $region51: #{sfc_back_forward.5} parent=5 // pred_fallthru
        _
      %p402 = scmp.le.s32.totalorder 2, %s9
      // Predicated region
      $region79: #{sfc_back_forward.5} parent=5 // pred_check
        %p403 = pneg %p402
      $region80: #{sfc_back_forward.5} parent=5 // pred_check_branch
        %405 = sbr.rel (%p403) target = $region82
      $region81: #{sfc_back_forward.5} parent=5 // pred_region
        %s406 = ssub.s32 %s9, 2
        // Predicated region
        $region83: #{sfc_back_forward.5} parent=81 // pred_check
          %p407 = pneg %p106
        $region84: #{sfc_back_forward.5} parent=81 // pred_check_branch
          %409 = sbr.rel (%p407) target = $region86
        $region85: #{sfc_back_forward.5} parent=81 // pred_region
          %s410 = sand.u32 %s91, 1
          %s411 = sand.u32 %s91, 1
          %s412 = smul.addr %s411, 64
          %s413 = scalar_lea.vmem [#allocation3], %s412
        $region86: #{sfc_back_forward.5} parent=81 // pred_fallthru
          _
      $region82: #{sfc_back_forward.5} parent=5 // pred_fallthru
        _
    $region6: #{sfc_back_forward.5} parent=1 // loop_footer
      %s13 = sadd.s32 1, %s9
    $region7: #{sfc_back_forward.5} parent=1 // loop_footer_branch
      %8 = sbr.rel target = $region3
    $region8: #{sfc_back_forward.5} parent=1 // loop_exit
      _

// kernel: sfc_back_forward.4
$region0: #{sfc_back_forward.4}
  #allocation0 [shape = 'u32[]', space=smem, size = 0x4, offset = 0x4, fixed_abs, tag = 'smem constant byte address 0x4 - core index']
  #allocation1 [shape = 'u32[144,128]{1,0:T(1,128)}', space=vmem, size = 0x12000, scoped, tag = 'internal scratch']
  %s0 = inlined_call_operand.vmem [shape: bf16[18,3072], index: 0, kind: input, shape index: {}]
  %s1 = inlined_call_operand.vmem [shape: bf16[16,18], index: 1, kind: input, shape index: {}]
  %s2 = inlined_call_operand.vmem [shape: f32[16,1], index: 2, kind: input, shape index: {}]
  %s3 = inlined_call_operand.vmem [shape: f32[16,3072], index: 3, kind: output, shape index: {0}]
  %s4 = inlined_call_operand.vmem [shape: f32[3,16,1], index: 4, kind: output, shape index: {1}]
  %s5 = inlined_call_operand.vmem [shape: f32[3,16,1], index: 5, kind: output, shape index: {2}]
  %6 = xla_tuple %s3, %s4, %s5
  %s7 = sld [smem:[#allocation0]]
  $region103: #{sfc_back_forward.4} parent=0
    _
  %s9 = ssub.s32 1, %s7
  %s10 = scalar_select 0, %s9, %s7
  $region1: #{sfc_back_forward.4} parent=0
    #allocation2 [shape = 'u8[98304]{0}', space=vmem, size = 0x18000, scoped, tag = 'input window, operand 0']
    #allocation3 [shape = 'u8[131072]{0}', space=vmem, size = 0x20000, scoped, tag = 'output window, operand 0']
    loop: start=0, step=1, limit=5
    $region2: #{sfc_back_forward.4} parent=1 // loop_pre_header
      _
    $region3: #{sfc_back_forward.4} parent=1 // loop_header
      %s12 = sphi 0, %s16
      %p13 = scmp.ge.s32.totalorder %s12, 5
      %s22 = sphi 0, %s24
      %s25 = sphi 0, %s22
      %s26 = sphi 0, %s25
      %s42 = sphi 0, %s26
      %s46 = sphi 0, %s46
      %s48 = sphi 0, %s46
      %s49 = sphi 0, %s48
      %s63 = sphi 0, %s49
      %s67 = sphi 0, %s67
      %s69 = sphi 0, %s67
      %s70 = sphi 0, %s69
      %s84 = sphi 0, %s70
      %s90 = sphi 0, %s92
      %s93 = sphi 0, %s90
      %s94 = sphi 0, %s93
      %s110 = sphi 0, %s94
      %s116 = sphi 0, %s118
      %s119 = sphi 0, %s116
      %s120 = sphi 0, %s119
      %s136 = sphi 0, %s120
      %s142 = sphi 0, %s144
      %s145 = sphi 0, %s142
      %s146 = sphi 0, %s145
      %s162 = sphi 0, %s146
    $region4: #{sfc_back_forward.4} parent=1 // loop_header_branch
      %15 = sbr.rel (%p13) target = $region8
    $region5: #{sfc_back_forward.4} parent=1 // loop_body
      %s17 = ssub.s32 %s12, 1
      %s18 = ssub.s32 %s12, 2
      %s19 = sadd.s32 %s12, 1
      %s20 = ssub.s32 %s12, %s19
      %p21 = scmp.eq.s32.totalorder %s20, 0
      %s23 = sadd.s32 %s22, 1
      %s24 = scalar_select %p21, %s22, %s23
      %p27 = pneg %p21
      %p28 = scmp.eq.s32.totalorder %s12, 2
      %p29 = por %p27, %p28
      %p30 = scmp.ne.s32.totalorder %s22, %s25
      %p31 = scmp.eq.s32.totalorder %s12, 0
      %p32 = por %p30, %p31
      %p33 = scmp.ne.s32.totalorder %s22, %s25
      %p34 = scmp.eq.s32.totalorder %s17, 2
      %p35 = por %p33, %p34
      %p36 = scmp.ne.s32.totalorder %s25, %s26
      %p37 = scmp.eq.s32.totalorder %s17, 0
      %p38 = por %p36, %p37
      %p39 = scmp.ne.s32.totalorder %s25, %s26
      %p40 = scmp.eq.s32.totalorder %s18, 2
      %p41 = por %p39, %p40
      %p43 = scmp.ne.s32.totalorder %s26, %s42
      %p44 = scmp.eq.s32.totalorder %s18, 0
      %p45 = por %p43, %p44
      %s47 = sadd.s32 %s46, 1
      %p50 = scmp.eq.s32.totalorder %s12, 2
      %p51 = scmp.ne.s32.totalorder %s46, %s48
      %p52 = scmp.eq.s32.totalorder %s12, 0
      %p53 = por %p51, %p52
      %p54 = scmp.ne.s32.totalorder %s46, %s48
      %p55 = scmp.eq.s32.totalorder %s17, 2
      %p56 = por %p54, %p55
      %p57 = scmp.ne.s32.totalorder %s48, %s49
      %p58 = scmp.eq.s32.totalorder %s17, 0
      %p59 = por %p57, %p58
      %p60 = scmp.ne.s32.totalorder %s48, %s49
      %p61 = scmp.eq.s32.totalorder %s18, 2
      %p62 = por %p60, %p61
      %p64 = scmp.ne.s32.totalorder %s49, %s63
      %p65 = scmp.eq.s32.totalorder %s18, 0
      %p66 = por %p64, %p65
      %s68 = sadd.s32 %s67, 1
      %p71 = scmp.eq.s32.totalorder %s12, 2
      %p72 = scmp.ne.s32.totalorder %s67, %s69
      %p73 = scmp.eq.s32.totalorder %s12, 0
      %p74 = por %p72, %p73
      %p75 = scmp.ne.s32.totalorder %s67, %s69
      %p76 = scmp.eq.s32.totalorder %s17, 2
      %p77 = por %p75, %p76
      %p78 = scmp.ne.s32.totalorder %s69, %s70
      %p79 = scmp.eq.s32.totalorder %s17, 0
      %p80 = por %p78, %p79
      %p81 = scmp.ne.s32.totalorder %s69, %s70
      %p82 = scmp.eq.s32.totalorder %s18, 2
      %p83 = por %p81, %p82
      %p85 = scmp.ne.s32.totalorder %s70, %s84
      %p86 = scmp.eq.s32.totalorder %s18, 0
      %p87 = por %p85, %p86
      %s88 = ssub.s32 %s12, %s19
      %p89 = scmp.eq.s32.totalorder %s88, 0
      %s91 = sadd.s32 %s90, 1
      %s92 = scalar_select %p89, %s90, %s91
      %p95 = pneg %p89
      %p96 = scmp.eq.s32.totalorder %s12, 2
      %p97 = por %p95, %p96
      %p98 = scmp.ne.s32.totalorder %s90, %s93
      %p99 = scmp.eq.s32.totalorder %s12, 0
      %p100 = por %p98, %p99
      %p101 = scmp.ne.s32.totalorder %s90, %s93
      %p102 = scmp.eq.s32.totalorder %s17, 2
      %p103 = por %p101, %p102
      %p104 = scmp.ne.s32.totalorder %s93, %s94
      %p105 = scmp.eq.s32.totalorder %s17, 0
      %p106 = por %p104, %p105
      %p107 = scmp.ne.s32.totalorder %s93, %s94
      %p108 = scmp.eq.s32.totalorder %s18, 2
      %p109 = por %p107, %p108
      %p111 = scmp.ne.s32.totalorder %s94, %s110
      %p112 = scmp.eq.s32.totalorder %s18, 0
      %p113 = por %p111, %p112
      %s114 = ssub.s32 %s12, %s19
      %p115 = scmp.eq.s32.totalorder %s114, 0
      %s117 = sadd.s32 %s116, 1
      %s118 = scalar_select %p115, %s116, %s117
      %p121 = pneg %p115
      %p122 = scmp.eq.s32.totalorder %s12, 2
      %p123 = por %p121, %p122
      %p124 = scmp.ne.s32.totalorder %s116, %s119
      %p125 = scmp.eq.s32.totalorder %s12, 0
      %p126 = por %p124, %p125
      %p127 = scmp.ne.s32.totalorder %s116, %s119
      %p128 = scmp.eq.s32.totalorder %s17, 2
      %p129 = por %p127, %p128
      %p130 = scmp.ne.s32.totalorder %s119, %s120
      %p131 = scmp.eq.s32.totalorder %s17, 0
      %p132 = por %p130, %p131
      %p133 = scmp.ne.s32.totalorder %s119, %s120
      %p134 = scmp.eq.s32.totalorder %s18, 2
      %p135 = por %p133, %p134
      %p137 = scmp.ne.s32.totalorder %s120, %s136
      %p138 = scmp.eq.s32.totalorder %s18, 0
      %p139 = por %p137, %p138
      %s140 = ssub.s32 %s12, %s19
      %p141 = scmp.eq.s32.totalorder %s140, 0
      %s143 = sadd.s32 %s142, 1
      %s144 = scalar_select %p141, %s142, %s143
      %p147 = pneg %p141
      %p148 = scmp.eq.s32.totalorder %s12, 2
      %p149 = por %p147, %p148
      %p150 = scmp.ne.s32.totalorder %s142, %s145
      %p151 = scmp.eq.s32.totalorder %s12, 0
      %p152 = por %p150, %p151
      %p153 = scmp.ne.s32.totalorder %s142, %s145
      %p154 = scmp.eq.s32.totalorder %s17, 2
      %p155 = por %p153, %p154
      %p156 = scmp.ne.s32.totalorder %s145, %s146
      %p157 = scmp.eq.s32.totalorder %s17, 0
      %p158 = por %p156, %p157
      %p159 = scmp.ne.s32.totalorder %s145, %s146
      %p160 = scmp.eq.s32.totalorder %s18, 2
      %p161 = por %p159, %p160
      %p163 = scmp.ne.s32.totalorder %s146, %s162
      %p164 = scmp.eq.s32.totalorder %s18, 0
      %p165 = por %p163, %p164
      %p166 = scmp.le.s32.totalorder 1, %s12
      %p167 = scmp.lt.s32.totalorder %s12, 4
      %p168 = pnand %p166, %p167
      %p169 = pneg %p168
      // Predicated region
      $region9: #{sfc_back_forward.4} parent=5 // pred_check
        _
      $region10: #{sfc_back_forward.4} parent=5 // pred_check_branch
        %171 = sbr.rel (%p168) target = $region12
      $region11: #{sfc_back_forward.4} parent=5 // pred_region
        %s172 = ssub.s32 %s12, 1
        // Predicated region
        $region13: #{sfc_back_forward.4} parent=11 // pred_check
          %p173 = pneg %p59
        $region14: #{sfc_back_forward.4} parent=11 // pred_check_branch
          %175 = sbr.rel (%p173) target = $region16
        $region15: #{sfc_back_forward.4} parent=11 // pred_region
          _
        $region16: #{sfc_back_forward.4} parent=11 // pred_fallthru
          _
        // Predicated region
        $region17: #{sfc_back_forward.4} parent=11 // pred_check
          %p176 = pneg %p80
        $region18: #{sfc_back_forward.4} parent=11 // pred_check_branch
          %178 = sbr.rel (%p176) target = $region20
        $region19: #{sfc_back_forward.4} parent=11 // pred_region
          _
        $region20: #{sfc_back_forward.4} parent=11 // pred_fallthru
          _
      $region12: #{sfc_back_forward.4} parent=5 // pred_fallthru
        _
      %p179 = scmp.lt.s32.totalorder %s12, 3
      // Predicated region
      $region21: #{sfc_back_forward.4} parent=5 // pred_check
        %p180 = pneg %p179
      $region22: #{sfc_back_forward.4} parent=5 // pred_check_branch
        %182 = sbr.rel (%p180) target = $region24
      $region23: #{sfc_back_forward.4} parent=5 // pred_region
        // Predicated region
        $region25: #{sfc_back_forward.4} parent=23 // pred_check
          %p183 = pneg %p32
        $region26: #{sfc_back_forward.4} parent=23 // pred_check_branch
          %185 = sbr.rel (%p183) target = $region28
        $region27: #{sfc_back_forward.4} parent=23 // pred_region
          %s186 = sand.u32 %s22, 1
          %s187 = sand.u32 %s22, 1
          %s188 = smul.addr %s187, 96
          %s189 = scalar_lea.vmem [#allocation2], %s188
          %s190 = smul.u32 8, %s12
          %s191 = smul.addr %s190, 4
          %s192 = scalar_lea.vmem %s0, %s191
          // Predicated region
          $region29: #{sfc_back_forward.4} parent=27 // pred_check
            _
          $region30: #{sfc_back_forward.4} parent=27 // pred_check_branch
            %194 = sbr.rel (0) target = $region32
          $region31: #{sfc_back_forward.4} parent=27 // pred_region
            // Predicated region
            $region33: #{sfc_back_forward.4} parent=31 // pred_check
              _
            $region34: #{sfc_back_forward.4} parent=31 // pred_check_branch
              %196 = sbr.rel (0) target = $region36
            $region35: #{sfc_back_forward.4} parent=31 // pred_region
              loop: start=0, step=1, limit=1
              $region37: #{sfc_back_forward.4} parent=35 // loop_pre_header
                _
              $region38: #{sfc_back_forward.4} parent=35 // loop_header
                %s198 = sphi 0, %s202
                %p199 = scmp.ge.s32.totalorder %s198, 1
                %s203 = sphi %s192, %s192
                %s204 = sphi %s189, %s189
              $region39: #{sfc_back_forward.4} parent=35 // loop_header_branch
                %201 = sbr.rel (%p199) target = $region43
              $region40: #{sfc_back_forward.4} parent=35 // loop_body
                %v205 = vld [vmem:[%s203] sm:$0xff]
                %206 = vst [vmem:[%s204] sm:$0xff] %v205
                %v207 = vld [vmem:[%s203 + $0x8] sm:$0xff]
                %208 = vst [vmem:[%s204 + $0x8] sm:$0xff] %v207
                %v209 = vld [vmem:[%s203 + $0x10] sm:$0xff]
                %210 = vst [vmem:[%s204 + $0x10] sm:$0xff] %v209
                %v211 = vld [vmem:[%s203 + $0x18] sm:$0xff]
                %212 = vst [vmem:[%s204 + $0x18] sm:$0xff] %v211
                %v213 = vld [vmem:[%s203 + $0x60] sm:$0xff]
                %214 = vst [vmem:[%s204 + $0x20] sm:$0xff] %v213
                %v215 = vld [vmem:[%s203 + $0x68] sm:$0xff]
                %216 = vst [vmem:[%s204 + $0x28] sm:$0xff] %v215
                %v217 = vld [vmem:[%s203 + $0x70] sm:$0xff]
                %218 = vst [vmem:[%s204 + $0x30] sm:$0xff] %v217
                %v219 = vld [vmem:[%s203 + $0x78] sm:$0xff]
                %220 = vst [vmem:[%s204 + $0x38] sm:$0xff] %v219
                %v221 = vld [vmem:[%s203 + $0xc0] sm:$0xff]
                %222 = vst [vmem:[%s204 + $0x40] sm:$0xff] %v221
                %v223 = vld [vmem:[%s203 + $0xc8] sm:$0xff]
                %224 = vst [vmem:[%s204 + $0x48] sm:$0xff] %v223
                %v225 = vld [vmem:[%s203 + $0xd0] sm:$0xff]
                %226 = vst [vmem:[%s204 + $0x50] sm:$0xff] %v225
                %v227 = vld [vmem:[%s203 + $0xd8] sm:$0xff]
                %228 = vst [vmem:[%s204 + $0x58] sm:$0xff] %v227
              $region41: #{sfc_back_forward.4} parent=35 // loop_footer
                %s202 = sadd.s32 1, %s198
              $region42: #{sfc_back_forward.4} parent=35 // loop_footer_branch
                %197 = sbr.rel target = $region38
              $region43: #{sfc_back_forward.4} parent=35 // loop_exit
                _
            $region36: #{sfc_back_forward.4} parent=31 // pred_fallthru
              _
            // Predicated region
            $region44: #{sfc_back_forward.4} parent=31 // pred_check
              _
            $region45: #{sfc_back_forward.4} parent=31 // pred_check_branch
              %230 = sbr.rel target = $region47
            $region46: #{sfc_back_forward.4} parent=31 // pred_region
              _
            $region47: #{sfc_back_forward.4} parent=31 // pred_fallthru
              _
          $region32: #{sfc_back_forward.4} parent=27 // pred_fallthru
            _
          %231 = vnop
        $region28: #{sfc_back_forward.4} parent=23 // pred_fallthru
          _
      $region24: #{sfc_back_forward.4} parent=5 // pred_fallthru
        _
      %p232 = scmp.le.s32.totalorder 1, %s12
      %p233 = scmp.lt.s32.totalorder %s12, 4
      %p234 = pnand %p232, %p233
      %p235 = pneg %p234
      // Predicated region
      $region48: #{sfc_back_forward.4} parent=5 // pred_check
        _
      $region49: #{sfc_back_forward.4} parent=5 // pred_check_branch
        %237 = sbr.rel (%p234) target = $region51
      $region50: #{sfc_back_forward.4} parent=5 // pred_region
        %s238 = ssub.s32 %s12, 1
        %s239 = sand.u32 %s25, 1
        %s240 = sand.u32 %s25, 1
        %s241 = smul.addr %s240, 96
        %s242 = scalar_lea.vmem [#allocation2], %s241
        // Predicated region
        $region52: #{sfc_back_forward.4} parent=50 // pred_check
          %p243 = pneg %p38
        $region53: #{sfc_back_forward.4} parent=50 // pred_check_branch
          %245 = sbr.rel (%p243) target = $region55
        $region54: #{sfc_back_forward.4} parent=50 // pred_region
          _
        $region55: #{sfc_back_forward.4} parent=50 // pred_fallthru
          _
        %s246 = sand.u32 %s25, 1
        %s247 = sand.u32 %s25, 1
        %s248 = smul.addr %s247, 96
        %s249 = scalar_lea.vmem [#allocation2], %s248
        %p250 = pneg %p38
        %p251 = pneg %p35
        %p252 = pneg %p59
        %p253 = pneg %p56
        %p254 = pneg %p80
        %p255 = pneg %p77
        %p256 = pneg %p106
        %p257 = pneg %p103
        %s258 = sand.u32 %s93, 1
        %s259 = sand.u32 %s93, 1
        %s260 = smul.addr %s259, 128
        %s261 = scalar_lea.vmem [#allocation3], %s260
        %p262 = pneg %p132
        %p263 = pneg %p129
        %p264 = scmp.lt.s32.totalorder %s17, 2
        %s265 = scalar_select %p264, %s17, 2
        %s266 = smul.addr %s265, 2
        %s267 = smul.addr %s266, 8
        %s268 = scalar_lea.vmem %s4, %s267
        %p269 = pneg %p158
        %p270 = pneg %p155
        %p271 = scmp.lt.s32.totalorder %s17, 2
        %s272 = scalar_select %p271, %s17, 2
        %s273 = smul.addr %s272, 2
        %s274 = smul.addr %s273, 8
        %s275 = scalar_lea.vmem %s5, %s274
        %s276 = smul.u32 8, %s17
        %s277 = smul.u32 8, %s17
        %p278 = scmp.lt.s32.totalorder %s17, 2
        %s279 = scalar_select %p278, %s17, 2
        %s280 = smul.addr %s279, 2
        %s281 = smul.addr %s280, 8
        %s282 = scalar_lea.vmem %s4, %s281
        %p283 = scmp.lt.s32.totalorder %s17, 2
        %s284 = scalar_select %p283, %s17, 2
        %s285 = smul.addr %s284, 2
        %s286 = smul.addr %s285, 8
        %s287 = scalar_lea.vmem %s5, %s286
        %v289 = vld [vmem:[%s1] sm:$0xf]
        %v290 = vld [vmem:[%s1 + $0x4] sm:$0xf]
        %v291 = vld [vmem:[%s242] sm:$0xff]
        %v292 = vld [vmem:[%s242 + $0x8] sm:$0xff]
        %v293 = vld [vmem:[%s242 + $0x10] sm:$0xff]
        %v294 = vld [vmem:[%s242 + $0x18] sm:$0xff]
        %v295 = vld [vmem:[%s242 + $0x20] sm:$0xff]
        %v296 = vld [vmem:[%s242 + $0x28] sm:$0xff]
        %v297 = vld [vmem:[%s242 + $0x30] sm:$0xff]
        %v298 = vld [vmem:[%s242 + $0x38] sm:$0xff]
        %v299 = vld [vmem:[%s242 + $0x40] sm:$0x11]
        %v300 = vld [vmem:[%s242 + $0x48] sm:$0x11]
        %v301 = vld [vmem:[%s242 + $0x50] sm:$0x11]
        %v302 = vld [vmem:[%s242 + $0x58] sm:$0x11]
        %v303 = vld [vmem:[%s2] sm:$0xff]
        %v304 = vld [vmem:[%s2 + $0x8] sm:$0xff]
        %306 = vset.pattern.permute.xlu0 0
        %307 = vperm.xlu0 %306, %v303
        %v308 = vpop.permute.xlu0 %307
        %311 = vset.pattern.permute.xlu0 0
        %312 = vperm.xlu0 %311, %v304
        %v313 = vpop.permute.xlu0 %312
        %v317 = vunpack.c.l.b16 %v289
        %v318 = vunpack.c.l.b16 %v290
        %v319 = vpack.c.b16 %v318, %v317
        %v332 = vunpack.c.l.b16 %v291
        %v333 = vunpack.c.h.b16 %v291
        %v334 = vunpack.c.l.b16 %v292
        %v335 = vunpack.c.h.b16 %v292
        %v336 = vunpack.c.l.b16 %v293
        %v337 = vunpack.c.h.b16 %v293
        %v338 = vunpack.c.l.b16 %v294
        %v339 = vunpack.c.h.b16 %v294
        %v340 = vunpack.c.l.b16 %v295
        %v341 = vunpack.c.h.b16 %v295
        %v342 = vunpack.c.l.b16 %v296
        %v343 = vunpack.c.h.b16 %v296
        %v344 = vunpack.c.l.b16 %v297
        %v345 = vunpack.c.h.b16 %v297
        %v346 = vunpack.c.l.b16 %v298
        %v347 = vunpack.c.h.b16 %v298
        %v348 = vunpack.c.l.b16 %v299
        %v349 = vunpack.c.h.b16 %v299
        %v350 = vunpack.c.l.b16 %v300
        %v351 = vunpack.c.h.b16 %v300
        %v352 = vunpack.c.l.b16 %v301
        %v353 = vunpack.c.h.b16 %v301
        %v354 = vunpack.c.l.b16 %v302
        %v355 = vunpack.c.h.b16 %v302
        %v356 = vpack.c.b16 %v340, %v332
        %v357 = vpack.c.b16 %v341, %v333
        %v358 = vpack.c.b16 %v342, %v334
        %v359 = vpack.c.b16 %v343, %v335
        %v360 = vpack.c.b16 %v344, %v336
        %v361 = vpack.c.b16 %v345, %v337
        %v362 = vpack.c.b16 %v346, %v338
        %v363 = vpack.c.b16 %v347, %v339
        %v364 = vpack.c.b16 %v348, %v348
        %v365 = vpack.c.b16 %v349, %v349
        %v366 = vpack.c.b16 %v350, %v350
        %v367 = vpack.c.b16 %v351, %v351
        %v368 = vpack.c.b16 %v352, %v352
        %v369 = vpack.c.b16 %v353, %v353
        %v370 = vpack.c.b16 %v354, %v354
        %v371 = vpack.c.b16 %v355, %v355
        %vm380 = vcmask 146432
        %v382 = vsel %vm380, %v319, 0
        %vm384 = vcmask 1040384
        %v386 = vsel %vm384, %v364, 0
        %v389 = vsel %vm384, %v365, 0
        %v392 = vsel %vm384, %v366, 0
        %v395 = vsel %vm384, %v367, 0
        %v398 = vsel %vm384, %v368, 0
        %v401 = vsel %vm384, %v369, 0
        %v404 = vsel %vm384, %v370, 0
        %v407 = vsel %vm384, %v371, 0
        %409 = vmatprep.subr.bf16.mxu0 %v357
        %410 = vmatpush1.bf16.msra.mxu0 %v356
        %411 = vmatprep.subr.bf16.mxu0 %v389
        %412 = vmatpush1.bf16.msra.mxu0 %v386
        %413 = vmatprep.subr.bf16.mxu0 0
        %414 = vmatpush1.bf16.msra.mxu0 0
        %415 = vmatprep.subr.bf16.mxu0 0
        %416 = vmatpush1.bf16.msra.mxu0 0
        %417 = vmatprep.subr.bf16.mxu0 0
        %418 = vmatpush1.bf16.msra.mxu0 0
        %419 = vmatprep.subr.bf16.mxu0 0
        %420 = vmatpush1.bf16.msra.mxu0 0
        %421 = vmatprep.subr.bf16.mxu0 0
        %422 = vmatpush1.bf16.msra.mxu0 0
        %423 = vmatprep.subr.bf16.mxu0 0
        %424 = vmatpush1.bf16.msra.mxu0 0
        %425 = vmatprep.subr.bf16.mxu0 0
        %426 = vmatpush1.bf16.msra.mxu0 0
        %427 = vmatprep.subr.bf16.mxu0 0
        %428 = vmatpush1.bf16.msra.mxu0 0
        %429 = vmatprep.subr.bf16.mxu0 0
        %430 = vmatpush1.bf16.msra.mxu0 0
        %431 = vmatprep.subr.bf16.mxu0 0
        %432 = vmatpush1.bf16.msra.mxu0 0
        %433 = vmatprep.subr.bf16.mxu0 0
        %434 = vmatpush1.bf16.msra.mxu0 0
        %435 = vmatprep.subr.bf16.mxu0 0
        %436 = vmatpush1.bf16.msra.mxu0 0
        %437 = vmatprep.subr.bf16.mxu0 0
        %438 = vmatpush1.bf16.msra.mxu0 0
        %439 = vmatprep.subr.bf16.mxu0 0
        %440 = vmatpush1.bf16.msra.mxu0 0
        %441 = vmatprep.mubr.bf16.mxu0 0
        %442 = vmatmul.mubr.bf16.gmra.mrb[0].mxu0 %v382
        %v443 = vpop.f32.mrb[0].mxu0
        %v444 = vadd.f32 %v308, %v443
        %v445 = vpop.f32.mrb[0].mxu0
        %v446 = vadd.f32 %v308, %v445
        %v447 = vpop.f32.mrb[0].mxu0
        %v448 = vadd.f32 %v313, %v447
        %v449 = vpop.f32.mrb[0].mxu0
        %v450 = vadd.f32 %v313, %v449
        %451 = vdwg.mxu0
        %452 = vmatprep.subr.bf16.mxu0 %v359
        %453 = vmatpush1.bf16.msra.mxu0 %v358
        %454 = vmatprep.subr.bf16.mxu0 %v395
        %455 = vmatpush1.bf16.msra.mxu0 %v392
        %456 = vmatprep.subr.bf16.mxu0 0
        %457 = vmatpush1.bf16.msra.mxu0 0
        %458 = vmatprep.subr.bf16.mxu0 0
        %459 = vmatpush1.bf16.msra.mxu0 0
        %460 = vmatprep.subr.bf16.mxu0 0
        %461 = vmatpush1.bf16.msra.mxu0 0
        %462 = vmatprep.subr.bf16.mxu0 0
        %463 = vmatpush1.bf16.msra.mxu0 0
        %464 = vmatprep.subr.bf16.mxu0 0
        %465 = vmatpush1.bf16.msra.mxu0 0
        %466 = vmatprep.subr.bf16.mxu0 0
        %467 = vmatpush1.bf16.msra.mxu0 0
        %468 = vmatprep.subr.bf16.mxu0 0
        %469 = vmatpush1.bf16.msra.mxu0 0
        %470 = vmatprep.subr.bf16.mxu0 0
        %471 = vmatpush1.bf16.msra.mxu0 0
        %472 = vmatprep.subr.bf16.mxu0 0
        %473 = vmatpush1.bf16.msra.mxu0 0
        %474 = vmatprep.subr.bf16.mxu0 0
        %475 = vmatpush1.bf16.msra.mxu0 0
        %476 = vmatprep.subr.bf16.mxu0 0
        %477 = vmatpush1.bf16.msra.mxu0 0
        %478 = vmatprep.subr.bf16.mxu0 0
        %479 = vmatpush1.bf16.msra.mxu0 0
        %480 = vmatprep.subr.bf16.mxu0 0
        %481 = vmatpush1.bf16.msra.mxu0 0
        %482 = vmatprep.subr.bf16.mxu0 0
        %483 = vmatpush1.bf16.msra.mxu0 0
        %484 = vmatprep.mubr.bf16.mxu0 0
        %485 = vmatmul.mubr.bf16.gmra.mrb[0].mxu0 %v382
        %v486 = vpop.f32.mrb[0].mxu0
        %v487 = vadd.f32 %v308, %v486
        %v488 = vpop.f32.mrb[0].mxu0
        %v489 = vadd.f32 %v308, %v488
        %v490 = vpop.f32.mrb[0].mxu0
        %v491 = vadd.f32 %v313, %v490
        %v492 = vpop.f32.mrb[0].mxu0
        %v493 = vadd.f32 %v313, %v492
        %494 = vdwg.mxu0
        %495 = vmatprep.subr.bf16.mxu0 %v361
        %496 = vmatpush1.bf16.msra.mxu0 %v360
        %497 = vmatprep.subr.bf16.mxu0 %v401
        %498 = vmatpush1.bf16.msra.mxu0 %v398
        %499 = vmatprep.subr.bf16.mxu0 0
        %500 = vmatpush1.bf16.msra.mxu0 0
        %501 = vmatprep.subr.bf16.mxu0 0
        %502 = vmatpush1.bf16.msra.mxu0 0
        %503 = vmatprep.subr.bf16.mxu0 0
        %504 = vmatpush1.bf16.msra.mxu0 0
        %505 = vmatprep.subr.bf16.mxu0 0
        %506 = vmatpush1.bf16.msra.mxu0 0
        %507 = vmatprep.subr.bf16.mxu0 0
        %508 = vmatpush1.bf16.msra.mxu0 0
        %509 = vmatprep.subr.bf16.mxu0 0
        %510 = vmatpush1.bf16.msra.mxu0 0
        %511 = vmatprep.subr.bf16.mxu0 0
        %512 = vmatpush1.bf16.msra.mxu0 0
        %513 = vmatprep.subr.bf16.mxu0 0
        %514 = vmatpush1.bf16.msra.mxu0 0
        %515 = vmatprep.subr.bf16.mxu0 0
        %516 = vmatpush1.bf16.msra.mxu0 0
        %517 = vmatprep.subr.bf16.mxu0 0
        %518 = vmatpush1.bf16.msra.mxu0 0
        %519 = vmatprep.subr.bf16.mxu0 0
        %520 = vmatpush1.bf16.msra.mxu0 0
        %521 = vmatprep.subr.bf16.mxu0 0
        %522 = vmatpush1.bf16.msra.mxu0 0
        %523 = vmatprep.subr.bf16.mxu0 0
        %524 = vmatpush1.bf16.msra.mxu0 0
        %525 = vmatprep.subr.bf16.mxu0 0
        %526 = vmatpush1.bf16.msra.mxu0 0
        %527 = vmatprep.mubr.bf16.mxu0 0
        %528 = vmatmul.mubr.bf16.gmra.mrb[0].mxu0 %v382
        %v529 = vpop.f32.mrb[0].mxu0
        %v530 = vadd.f32 %v308, %v529
        %v531 = vpop.f32.mrb[0].mxu0
        %v532 = vadd.f32 %v308, %v531
        %v533 = vpop.f32.mrb[0].mxu0
        %v534 = vadd.f32 %v313, %v533
        %v535 = vpop.f32.mrb[0].mxu0
        %v536 = vadd.f32 %v313, %v535
        %537 = vdwg.mxu0
        %538 = vmatprep.subr.bf16.mxu0 %v363
        %539 = vmatpush1.bf16.msra.mxu0 %v362
        %540 = vmatprep.subr.bf16.mxu0 %v407
        %541 = vmatpush1.bf16.msra.mxu0 %v404
        %542 = vmatprep.subr.bf16.mxu0 0
        %543 = vmatpush1.bf16.msra.mxu0 0
        %544 = vmatprep.subr.bf16.mxu0 0
        %545 = vmatpush1.bf16.msra.mxu0 0
        %546 = vmatprep.subr.bf16.mxu0 0
        %547 = vmatpush1.bf16.msra.mxu0 0
        %548 = vmatprep.subr.bf16.mxu0 0
        %549 = vmatpush1.bf16.msra.mxu0 0
        %550 = vmatprep.subr.bf16.mxu0 0
        %551 = vmatpush1.bf16.msra.mxu0 0
        %552 = vmatprep.subr.bf16.mxu0 0
        %553 = vmatpush1.bf16.msra.mxu0 0
        %554 = vmatprep.subr.bf16.mxu0 0
        %555 = vmatpush1.bf16.msra.mxu0 0
        %556 = vmatprep.subr.bf16.mxu0 0
        %557 = vmatpush1.bf16.msra.mxu0 0
        %558 = vmatprep.subr.bf16.mxu0 0
        %559 = vmatpush1.bf16.msra.mxu0 0
        %560 = vmatprep.subr.bf16.mxu0 0
        %561 = vmatpush1.bf16.msra.mxu0 0
        %562 = vmatprep.subr.bf16.mxu0 0
        %563 = vmatpush1.bf16.msra.mxu0 0
        %564 = vmatprep.subr.bf16.mxu0 0
        %565 = vmatpush1.bf16.msra.mxu0 0
        %566 = vmatprep.subr.bf16.mxu0 0
        %567 = vmatpush1.bf16.msra.mxu0 0
        %568 = vmatprep.subr.bf16.mxu0 0
        %569 = vmatpush1.bf16.msra.mxu0 0
        %570 = vmatprep.mubr.bf16.mxu0 0
        %571 = vmatmul.mubr.bf16.gmra.mrb[0].mxu0 %v382
        %v572 = vpop.f32.mrb[0].mxu0
        %v573 = vadd.f32 %v308, %v572
        %v574 = vpop.f32.mrb[0].mxu0
        %v575 = vadd.f32 %v308, %v574
        %v576 = vpop.f32.mrb[0].mxu0
        %v577 = vadd.f32 %v313, %v576
        %v578 = vpop.f32.mrb[0].mxu0
        %v579 = vadd.f32 %v313, %v578
        %580 = vdwg.mxu0
        %581 = vst [vmem:[%s261] sm:$0xff] %v444
        %582 = vst [vmem:[%s261 + $0x8] sm:$0xff] %v446
        %583 = vst [vmem:[%s261 + $0x10] sm:$0xff] %v487
        %584 = vst [vmem:[%s261 + $0x18] sm:$0xff] %v489
        %585 = vst [vmem:[%s261 + $0x20] sm:$0xff] %v530
        %586 = vst [vmem:[%s261 + $0x28] sm:$0xff] %v532
        %587 = vst [vmem:[%s261 + $0x30] sm:$0xff] %v573
        %588 = vst [vmem:[%s261 + $0x38] sm:$0xff] %v575
        %589 = vst [vmem:[%s261 + $0x40] sm:$0xff] %v448
        %590 = vst [vmem:[%s261 + $0x48] sm:$0xff] %v450
        %591 = vst [vmem:[%s261 + $0x50] sm:$0xff] %v491
        %592 = vst [vmem:[%s261 + $0x58] sm:$0xff] %v493
        %593 = vst [vmem:[%s261 + $0x60] sm:$0xff] %v534
        %594 = vst [vmem:[%s261 + $0x68] sm:$0xff] %v536
        %595 = vst [vmem:[%s261 + $0x70] sm:$0xff] %v577
        %596 = vst [vmem:[%s261 + $0x78] sm:$0xff] %v579
        %v597 = vadd.f32 %v444, %v446
        %v598 = vadd.f32 %v597, %v487
        %v599 = vadd.f32 %v598, %v489
        %v600 = vadd.f32 %v599, %v530
        %v601 = vadd.f32 %v600, %v532
        %v602 = vadd.f32 %v601, %v573
        %v603 = vadd.f32 %v602, %v575
        %604 = vadd.xlane.f32.xlu0 %v603
        %v605 = vpop.xlane.xlu0 %604
        %v606 = vadd.f32 %v448, %v450
        %v607 = vadd.f32 %v606, %v491
        %v608 = vadd.f32 %v607, %v493
        %v609 = vadd.f32 %v608, %v534
        %v610 = vadd.f32 %v609, %v536
        %v611 = vadd.f32 %v610, %v577
        %v612 = vadd.f32 %v611, %v579
        %613 = vadd.xlane.f32.xlu0 %v612
        %v614 = vpop.xlane.xlu0 %613
        %vm615 = vcmask 7168
        %616 = vst.msk [vmem:[%s282] sm:$0xff] %vm615, %v605
        %617 = vst.msk [vmem:[%s282 + $0x8] sm:$0xff] %vm615, %v614
        %v618 = vmul.f32 %v444, %v444
        %v619 = vmul.f32 %v446, %v446
        %v620 = vmul.f32 %v487, %v487
        %v621 = vmul.f32 %v489, %v489
        %v622 = vmul.f32 %v530, %v530
        %v623 = vmul.f32 %v532, %v532
        %v624 = vmul.f32 %v573, %v573
        %v625 = vmul.f32 %v575, %v575
        %v626 = vmul.f32 %v448, %v448
        %v627 = vmul.f32 %v450, %v450
        %v628 = vmul.f32 %v491, %v491
        %v629 = vmul.f32 %v493, %v493
        %v630 = vmul.f32 %v534, %v534
        %v631 = vmul.f32 %v536, %v536
        %v632 = vmul.f32 %v577, %v577
        %v633 = vmul.f32 %v579, %v579
        %v634 = vadd.f32 %v618, %v619
        %v635 = vadd.f32 %v634, %v620
        %v636 = vadd.f32 %v635, %v621
        %v637 = vadd.f32 %v636, %v622
        %v638 = vadd.f32 %v637, %v623
        %v639 = vadd.f32 %v638, %v624
        %v640 = vadd.f32 %v639, %v625
        %641 = vadd.xlane.f32.xlu0 %v640
        %v642 = vpop.xlane.xlu0 %641
        %v643 = vadd.f32 %v626, %v627
        %v644 = vadd.f32 %v643, %v628
        %v645 = vadd.f32 %v644, %v629
        %v646 = vadd.f32 %v645, %v630
        %v647 = vadd.f32 %v646, %v631
        %v648 = vadd.f32 %v647, %v632
        %v649 = vadd.f32 %v648, %v633
        %650 = vadd.xlane.f32.xlu0 %v649
        %v651 = vpop.xlane.xlu0 %650
        %652 = vst.msk [vmem:[%s287] sm:$0xff] %vm615, %v642
        %653 = vst.msk [vmem:[%s287 + $0x8] sm:$0xff] %vm615, %v651
        %s654 = sand.u32 %s93, 1
        %s655 = sand.u32 %s93, 1
        %s656 = smul.addr %s655, 128
        %s657 = scalar_lea.vmem [#allocation3], %s656
        %p658 = scmp.lt.s32.totalorder %s17, 2
        %s659 = scalar_select %p658, %s17, 2
        %s660 = smul.addr %s659, 2
        %s661 = smul.addr %s660, 8
        %s662 = scalar_lea.vmem %s4, %s661
        %p663 = scmp.lt.s32.totalorder %s17, 2
        %s664 = scalar_select %p663, %s17, 2
        %s665 = smul.addr %s664, 2
        %s666 = smul.addr %s665, 8
        %s667 = scalar_lea.vmem %s5, %s666
        // Predicated region
        $region56: #{sfc_back_forward.4} parent=50 // pred_check
          %p668 = pneg %p103
        $region57: #{sfc_back_forward.4} parent=50 // pred_check_branch
          %670 = sbr.rel (%p668) target = $region59
        $region58: #{sfc_back_forward.4} parent=50 // pred_region
          %s671 = smul.u32 8, %s17
          %s672 = smul.addr %s671, 8
          %s673 = scalar_lea.vmem %s3, %s672
          // Predicated region
          $region60: #{sfc_back_forward.4} parent=58 // pred_check
            _
          $region61: #{sfc_back_forward.4} parent=58 // pred_check_branch
            %675 = sbr.rel (0) target = $region63
          $region62: #{sfc_back_forward.4} parent=58 // pred_region
            // Predicated region
            $region64: #{sfc_back_forward.4} parent=62 // pred_check
              _
            $region65: #{sfc_back_forward.4} parent=62 // pred_check_branch
              %677 = sbr.rel (0) target = $region67
            $region66: #{sfc_back_forward.4} parent=62 // pred_region
              loop: start=0, step=1, limit=1
              $region68: #{sfc_back_forward.4} parent=66 // loop_pre_header
                _
              $region69: #{sfc_back_forward.4} parent=66 // loop_header
                %s679 = sphi 0, %s683
                %p680 = scmp.ge.s32.totalorder %s679, 1
                %s684 = sphi %s657, %s657
                %s685 = sphi %s673, %s673
              $region70: #{sfc_back_forward.4} parent=66 // loop_header_branch
                %682 = sbr.rel (%p680) target = $region74
              $region71: #{sfc_back_forward.4} parent=66 // loop_body
                %v686 = vld [vmem:[%s684] sm:$0xff]
                %687 = vst [vmem:[%s685] sm:$0xff] %v686
                %v688 = vld [vmem:[%s684 + $0x8] sm:$0xff]
                %689 = vst [vmem:[%s685 + $0x8] sm:$0xff] %v688
                %v690 = vld [vmem:[%s684 + $0x10] sm:$0xff]
                %691 = vst [vmem:[%s685 + $0x10] sm:$0xff] %v690
                %v692 = vld [vmem:[%s684 + $0x18] sm:$0xff]
                %693 = vst [vmem:[%s685 + $0x18] sm:$0xff] %v692
                %v694 = vld [vmem:[%s684 + $0x20] sm:$0xff]
                %695 = vst [vmem:[%s685 + $0x20] sm:$0xff] %v694
                %v696 = vld [vmem:[%s684 + $0x28] sm:$0xff]
                %697 = vst [vmem:[%s685 + $0x28] sm:$0xff] %v696
                %v698 = vld [vmem:[%s684 + $0x30] sm:$0xff]
                %699 = vst [vmem:[%s685 + $0x30] sm:$0xff] %v698
                %v700 = vld [vmem:[%s684 + $0x38] sm:$0xff]
                %701 = vst [vmem:[%s685 + $0x38] sm:$0xff] %v700
                %v702 = vld [vmem:[%s684 + $0x40] sm:$0xff]
                %703 = vst [vmem:[%s685 + $0xc0] sm:$0xff] %v702
                %v704 = vld [vmem:[%s684 + $0x48] sm:$0xff]
                %705 = vst [vmem:[%s685 + $0xc8] sm:$0xff] %v704
                %v706 = vld [vmem:[%s684 + $0x50] sm:$0xff]
                %707 = vst [vmem:[%s685 + $0xd0] sm:$0xff] %v706
                %v708 = vld [vmem:[%s684 + $0x58] sm:$0xff]
                %709 = vst [vmem:[%s685 + $0xd8] sm:$0xff] %v708
                %v710 = vld [vmem:[%s684 + $0x60] sm:$0xff]
                %711 = vst [vmem:[%s685 + $0xe0] sm:$0xff] %v710
                %v712 = vld [vmem:[%s684 + $0x68] sm:$0xff]
                %713 = vst [vmem:[%s685 + $0xe8] sm:$0xff] %v712
                %v714 = vld [vmem:[%s684 + $0x70] sm:$0xff]
                %715 = vst [vmem:[%s685 + $0xf0] sm:$0xff] %v714
                %v716 = vld [vmem:[%s684 + $0x78] sm:$0xff]
                %717 = vst [vmem:[%s685 + $0xf8] sm:$0xff] %v716
              $region72: #{sfc_back_forward.4} parent=66 // loop_footer
                %s683 = sadd.s32 1, %s679
              $region73: #{sfc_back_forward.4} parent=66 // loop_footer_branch
                %678 = sbr.rel target = $region69
              $region74: #{sfc_back_forward.4} parent=66 // loop_exit
                _
            $region67: #{sfc_back_forward.4} parent=62 // pred_fallthru
              _
            // Predicated region
            $region75: #{sfc_back_forward.4} parent=62 // pred_check
              _
            $region76: #{sfc_back_forward.4} parent=62 // pred_check_branch
              %719 = sbr.rel target = $region78
            $region77: #{sfc_back_forward.4} parent=62 // pred_region
              _
            $region78: #{sfc_back_forward.4} parent=62 // pred_fallthru
              _
          $region63: #{sfc_back_forward.4} parent=58 // pred_fallthru
            _
          %720 = vnop
        $region59: #{sfc_back_forward.4} parent=50 // pred_fallthru
          _
        // Predicated region
        $region79: #{sfc_back_forward.4} parent=50 // pred_check
          %p721 = pneg %p129
        $region80: #{sfc_back_forward.4} parent=50 // pred_check_branch
          %723 = sbr.rel (%p721) target = $region82
        $region81: #{sfc_back_forward.4} parent=50 // pred_region
          _
        $region82: #{sfc_back_forward.4} parent=50 // pred_fallthru
          _
        // Predicated region
        $region83: #{sfc_back_forward.4} parent=50 // pred_check
          %p724 = pneg %p155
        $region84: #{sfc_back_forward.4} parent=50 // pred_check_branch
          %726 = sbr.rel (%p724) target = $region86
        $region85: #{sfc_back_forward.4} parent=50 // pred_region
          _
        $region86: #{sfc_back_forward.4} parent=50 // pred_fallthru
          _
      $region51: #{sfc_back_forward.4} parent=5 // pred_fallthru
        _
      %p727 = scmp.le.s32.totalorder 2, %s12
      // Predicated region
      $region87: #{sfc_back_forward.4} parent=5 // pred_check
        %p728 = pneg %p727
      $region88: #{sfc_back_forward.4} parent=5 // pred_check_branch
        %730 = sbr.rel (%p728) target = $region90
      $region89: #{sfc_back_forward.4} parent=5 // pred_region
        %s731 = ssub.s32 %s12, 2
        // Predicated region
        $region91: #{sfc_back_forward.4} parent=89 // pred_check
          %p732 = pneg %p109
        $region92: #{sfc_back_forward.4} parent=89 // pred_check_branch
          %734 = sbr.rel (%p732) target = $region94
        $region93: #{sfc_back_forward.4} parent=89 // pred_region
          %s735 = sand.u32 %s94, 1
          %s736 = sand.u32 %s94, 1
          %s737 = smul.addr %s736, 128
          %s738 = scalar_lea.vmem [#allocation3], %s737
        $region94: #{sfc_back_forward.4} parent=89 // pred_fallthru
          _
        // Predicated region
        $region95: #{sfc_back_forward.4} parent=89 // pred_check
          %p739 = pneg %p135
        $region96: #{sfc_back_forward.4} parent=89 // pred_check_branch
          %741 = sbr.rel (%p739) target = $region98
        $region97: #{sfc_back_forward.4} parent=89 // pred_region
          %p742 = scmp.lt.s32.totalorder %s18, 2
          %s743 = scalar_select %p742, %s18, 2
          %s744 = smul.addr %s743, 2
          %s745 = smul.addr %s744, 8
          %s746 = scalar_lea.vmem %s4, %s745
        $region98: #{sfc_back_forward.4} parent=89 // pred_fallthru
          _
        // Predicated region
        $region99: #{sfc_back_forward.4} parent=89 // pred_check
          %p747 = pneg %p161
        $region100: #{sfc_back_forward.4} parent=89 // pred_check_branch
          %749 = sbr.rel (%p747) target = $region102
        $region101: #{sfc_back_forward.4} parent=89 // pred_region
          %p750 = scmp.lt.s32.totalorder %s18, 2
          %s751 = scalar_select %p750, %s18, 2
          %s752 = smul.addr %s751, 2
          %s753 = smul.addr %s752, 8
          %s754 = scalar_lea.vmem %s5, %s753
        $region102: #{sfc_back_forward.4} parent=89 // pred_fallthru
          _
      $region90: #{sfc_back_forward.4} parent=5 // pred_fallthru
        _
    $region6: #{sfc_back_forward.4} parent=1 // loop_footer
      %s16 = sadd.s32 1, %s12
    $region7: #{sfc_back_forward.4} parent=1 // loop_footer_branch
      %11 = sbr.rel target = $region3
    $region8: #{sfc_back_forward.4} parent=1 // loop_exit
      _

// kernel: sfc_back_forward.6
$region0: #{sfc_back_forward.6}
  #allocation0 [shape = 'u32[]', space=smem, size = 0x4, offset = 0x4, fixed_abs, tag = 'smem constant byte address 0x4 - core index']
  #allocation1 [shape = 'u32[144,128]{1,0:T(1,128)}', space=vmem, size = 0x12000, scoped, tag = 'internal scratch']
  %s0 = inlined_call_operand.vmem [shape: bf16[216,2048], index: 0, kind: input, shape index: {}]
  %s1 = inlined_call_operand.vmem [shape: bf16[24,216], index: 1, kind: input, shape index: {}]
  %s2 = inlined_call_operand.vmem [shape: f32[24,1], index: 2, kind: input, shape index: {}]
  %s3 = inlined_call_operand.vmem [shape: f32[24,2048], index: 3, kind: output, shape index: {0}]
  %s4 = inlined_call_operand.vmem [shape: f32[2,24,1], index: 4, kind: output, shape index: {1}]
  %s5 = inlined_call_operand.vmem [shape: f32[2,24,1], index: 5, kind: output, shape index: {2}]
  %6 = xla_tuple %s3, %s4, %s5
  %s7 = sld [smem:[#allocation0]]
  $region103: #{sfc_back_forward.6} parent=0
    _
  %s9 = ssub.s32 1, %s7
  %s10 = scalar_select 0, %s9, %s7
  $region1: #{sfc_back_forward.6} parent=0
    #allocation2 [shape = 'u8[884736]{0}', space=vmem, size = 0xd8000, scoped, tag = 'input window, operand 0']
    #allocation3 [shape = 'u8[196608]{0}', space=vmem, size = 0x30000, scoped, tag = 'output window, operand 0']
    loop: start=0, step=1, limit=4
    $region2: #{sfc_back_forward.6} parent=1 // loop_pre_header
      _
    $region3: #{sfc_back_forward.6} parent=1 // loop_header
      %s12 = sphi 0, %s16
      %p13 = scmp.ge.s32.totalorder %s12, 4
      %s22 = sphi 0, %s24
      %s25 = sphi 0, %s22
      %s26 = sphi 0, %s25
      %s42 = sphi 0, %s26
      %s46 = sphi 0, %s46
      %s48 = sphi 0, %s46
      %s49 = sphi 0, %s48
      %s63 = sphi 0, %s49
      %s67 = sphi 0, %s67
      %s69 = sphi 0, %s67
      %s70 = sphi 0, %s69
      %s84 = sphi 0, %s70
      %s90 = sphi 0, %s92
      %s93 = sphi 0, %s90
      %s94 = sphi 0, %s93
      %s110 = sphi 0, %s94
      %s116 = sphi 0, %s118
      %s119 = sphi 0, %s116
      %s120 = sphi 0, %s119
      %s136 = sphi 0, %s120
      %s142 = sphi 0, %s144
      %s145 = sphi 0, %s142
      %s146 = sphi 0, %s145
      %s162 = sphi 0, %s146
    $region4: #{sfc_back_forward.6} parent=1 // loop_header_branch
      %15 = sbr.rel (%p13) target = $region8
    $region5: #{sfc_back_forward.6} parent=1 // loop_body
      %s17 = ssub.s32 %s12, 1
      %s18 = ssub.s32 %s12, 2
      %s19 = sadd.s32 %s12, 1
      %s20 = ssub.s32 %s12, %s19
      %p21 = scmp.eq.s32.totalorder %s20, 0
      %s23 = sadd.s32 %s22, 1
      %s24 = scalar_select %p21, %s22, %s23
      %p27 = pneg %p21
      %p28 = scmp.eq.s32.totalorder %s12, 1
      %p29 = por %p27, %p28
      %p30 = scmp.ne.s32.totalorder %s22, %s25
      %p31 = scmp.eq.s32.totalorder %s12, 0
      %p32 = por %p30, %p31
      %p33 = scmp.ne.s32.totalorder %s22, %s25
      %p34 = scmp.eq.s32.totalorder %s17, 1
      %p35 = por %p33, %p34
      %p36 = scmp.ne.s32.totalorder %s25, %s26
      %p37 = scmp.eq.s32.totalorder %s17, 0
      %p38 = por %p36, %p37
      %p39 = scmp.ne.s32.totalorder %s25, %s26
      %p40 = scmp.eq.s32.totalorder %s18, 1
      %p41 = por %p39, %p40
      %p43 = scmp.ne.s32.totalorder %s26, %s42
      %p44 = scmp.eq.s32.totalorder %s18, 0
      %p45 = por %p43, %p44
      %s47 = sadd.s32 %s46, 1
      %p50 = scmp.eq.s32.totalorder %s12, 1
      %p51 = scmp.ne.s32.totalorder %s46, %s48
      %p52 = scmp.eq.s32.totalorder %s12, 0
      %p53 = por %p51, %p52
      %p54 = scmp.ne.s32.totalorder %s46, %s48
      %p55 = scmp.eq.s32.totalorder %s17, 1
      %p56 = por %p54, %p55
      %p57 = scmp.ne.s32.totalorder %s48, %s49
      %p58 = scmp.eq.s32.totalorder %s17, 0
      %p59 = por %p57, %p58
      %p60 = scmp.ne.s32.totalorder %s48, %s49
      %p61 = scmp.eq.s32.totalorder %s18, 1
      %p62 = por %p60, %p61
      %p64 = scmp.ne.s32.totalorder %s49, %s63
      %p65 = scmp.eq.s32.totalorder %s18, 0
      %p66 = por %p64, %p65
      %s68 = sadd.s32 %s67, 1
      %p71 = scmp.eq.s32.totalorder %s12, 1
      %p72 = scmp.ne.s32.totalorder %s67, %s69
      %p73 = scmp.eq.s32.totalorder %s12, 0
      %p74 = por %p72, %p73
      %p75 = scmp.ne.s32.totalorder %s67, %s69
      %p76 = scmp.eq.s32.totalorder %s17, 1
      %p77 = por %p75, %p76
      %p78 = scmp.ne.s32.totalorder %s69, %s70
      %p79 = scmp.eq.s32.totalorder %s17, 0
      %p80 = por %p78, %p79
      %p81 = scmp.ne.s32.totalorder %s69, %s70
      %p82 = scmp.eq.s32.totalorder %s18, 1
      %p83 = por %p81, %p82
      %p85 = scmp.ne.s32.totalorder %s70, %s84
      %p86 = scmp.eq.s32.totalorder %s18, 0
      %p87 = por %p85, %p86
      %s88 = ssub.s32 %s12, %s19
      %p89 = scmp.eq.s32.totalorder %s88, 0
      %s91 = sadd.s32 %s90, 1
      %s92 = scalar_select %p89, %s90, %s91
      %p95 = pneg %p89
      %p96 = scmp.eq.s32.totalorder %s12, 1
      %p97 = por %p95, %p96
      %p98 = scmp.ne.s32.totalorder %s90, %s93
      %p99 = scmp.eq.s32.totalorder %s12, 0
      %p100 = por %p98, %p99
      %p101 = scmp.ne.s32.totalorder %s90, %s93
      %p102 = scmp.eq.s32.totalorder %s17, 1
      %p103 = por %p101, %p102
      %p104 = scmp.ne.s32.totalorder %s93, %s94
      %p105 = scmp.eq.s32.totalorder %s17, 0
      %p106 = por %p104, %p105
      %p107 = scmp.ne.s32.totalorder %s93, %s94
      %p108 = scmp.eq.s32.totalorder %s18, 1
      %p109 = por %p107, %p108
      %p111 = scmp.ne.s32.totalorder %s94, %s110
      %p112 = scmp.eq.s32.totalorder %s18, 0
      %p113 = por %p111, %p112
      %s114 = ssub.s32 %s12, %s19
      %p115 = scmp.eq.s32.totalorder %s114, 0
      %s117 = sadd.s32 %s116, 1
      %s118 = scalar_select %p115, %s116, %s117
      %p121 = pneg %p115
      %p122 = scmp.eq.s32.totalorder %s12, 1
      %p123 = por %p121, %p122
      %p124 = scmp.ne.s32.totalorder %s116, %s119
      %p125 = scmp.eq.s32.totalorder %s12, 0
      %p126 = por %p124, %p125
      %p127 = scmp.ne.s32.totalorder %s116, %s119
      %p128 = scmp.eq.s32.totalorder %s17, 1
      %p129 = por %p127, %p128
      %p130 = scmp.ne.s32.totalorder %s119, %s120
      %p131 = scmp.eq.s32.totalorder %s17, 0
      %p132 = por %p130, %p131
      %p133 = scmp.ne.s32.totalorder %s119, %s120
      %p134 = scmp.eq.s32.totalorder %s18, 1
      %p135 = por %p133, %p134
      %p137 = scmp.ne.s32.totalorder %s120, %s136
      %p138 = scmp.eq.s32.totalorder %s18, 0
      %p139 = por %p137, %p138
      %s140 = ssub.s32 %s12, %s19
      %p141 = scmp.eq.s32.totalorder %s140, 0
      %s143 = sadd.s32 %s142, 1
      %s144 = scalar_select %p141, %s142, %s143
      %p147 = pneg %p141
      %p148 = scmp.eq.s32.totalorder %s12, 1
      %p149 = por %p147, %p148
      %p150 = scmp.ne.s32.totalorder %s142, %s145
      %p151 = scmp.eq.s32.totalorder %s12, 0
      %p152 = por %p150, %p151
      %p153 = scmp.ne.s32.totalorder %s142, %s145
      %p154 = scmp.eq.s32.totalorder %s17, 1
      %p155 = por %p153, %p154
      %p156 = scmp.ne.s32.totalorder %s145, %s146
      %p157 = scmp.eq.s32.totalorder %s17, 0
      %p158 = por %p156, %p157
      %p159 = scmp.ne.s32.totalorder %s145, %s146
      %p160 = scmp.eq.s32.totalorder %s18, 1
      %p161 = por %p159, %p160
      %p163 = scmp.ne.s32.totalorder %s146, %s162
      %p164 = scmp.eq.s32.totalorder %s18, 0
      %p165 = por %p163, %p164
      %p166 = scmp.le.s32.totalorder 1, %s12
      %p167 = scmp.lt.s32.totalorder %s12, 3
      %p168 = pnand %p166, %p167
      %p169 = pneg %p168
      // Predicated region
      $region9: #{sfc_back_forward.6} parent=5 // pred_check
        _
      $region10: #{sfc_back_forward.6} parent=5 // pred_check_branch
        %171 = sbr.rel (%p168) target = $region12
      $region11: #{sfc_back_forward.6} parent=5 // pred_region
        %s172 = ssub.s32 %s12, 1
        // Predicated region
        $region13: #{sfc_back_forward.6} parent=11 // pred_check
          %p173 = pneg %p59
        $region14: #{sfc_back_forward.6} parent=11 // pred_check_branch
          %175 = sbr.rel (%p173) target = $region16
        $region15: #{sfc_back_forward.6} parent=11 // pred_region
          _
        $region16: #{sfc_back_forward.6} parent=11 // pred_fallthru
          _
        // Predicated region
        $region17: #{sfc_back_forward.6} parent=11 // pred_check
          %p176 = pneg %p80
        $region18: #{sfc_back_forward.6} parent=11 // pred_check_branch
          %178 = sbr.rel (%p176) target = $region20
        $region19: #{sfc_back_forward.6} parent=11 // pred_region
          _
        $region20: #{sfc_back_forward.6} parent=11 // pred_fallthru
          _
      $region12: #{sfc_back_forward.6} parent=5 // pred_fallthru
        _
      %p179 = scmp.lt.s32.totalorder %s12, 2
      // Predicated region
      $region21: #{sfc_back_forward.6} parent=5 // pred_check
        %p180 = pneg %p179
      $region22: #{sfc_back_forward.6} parent=5 // pred_check_branch
        %182 = sbr.rel (%p180) target = $region24
      $region23: #{sfc_back_forward.6} parent=5 // pred_region
        // Predicated region
        $region25: #{sfc_back_forward.6} parent=23 // pred_check
          %p183 = pneg %p32
        $region26: #{sfc_back_forward.6} parent=23 // pred_check_branch
          %185 = sbr.rel (%p183) target = $region28
        $region27: #{sfc_back_forward.6} parent=23 // pred_region
          %s186 = sand.u32 %s22, 1
          %s187 = sand.u32 %s22, 1
          %s188 = smul.addr %s187, 864
          %s189 = scalar_lea.vmem [#allocation2], %s188
          %s190 = smul.u32 8, %s12
          %s191 = smul.addr %s190, 4
          %s192 = scalar_lea.vmem %s0, %s191
          // Predicated region
          $region29: #{sfc_back_forward.6} parent=27 // pred_check
            _
          $region30: #{sfc_back_forward.6} parent=27 // pred_check_branch
            %194 = sbr.rel (0) target = $region32
          $region31: #{sfc_back_forward.6} parent=27 // pred_region
            // Predicated region
            $region33: #{sfc_back_forward.6} parent=31 // pred_check
              _
            $region34: #{sfc_back_forward.6} parent=31 // pred_check_branch
              %196 = sbr.rel (0) target = $region36
            $region35: #{sfc_back_forward.6} parent=31 // pred_region
              loop: start=0, step=1, limit=1
              $region37: #{sfc_back_forward.6} parent=35 // loop_pre_header
                _
              $region38: #{sfc_back_forward.6} parent=35 // loop_header
                %s198 = sphi 0, %s202
                %p199 = scmp.ge.s32.totalorder %s198, 1
                %s203 = sphi %s192, %s192
                %s204 = sphi %s189, %s189
              $region39: #{sfc_back_forward.6} parent=35 // loop_header_branch
                %201 = sbr.rel (%p199) target = $region43
              $region40: #{sfc_back_forward.6} parent=35 // loop_body
                %v205 = vld [vmem:[%s203] sm:$0xff]
                %206 = vst [vmem:[%s204] sm:$0xff] %v205
                %v207 = vld [vmem:[%s203 + $0x8] sm:$0xff]
                %208 = vst [vmem:[%s204 + $0x8] sm:$0xff] %v207
                %v209 = vld [vmem:[%s203 + $0x10] sm:$0xff]
                %210 = vst [vmem:[%s204 + $0x10] sm:$0xff] %v209
                %v211 = vld [vmem:[%s203 + $0x18] sm:$0xff]
                %212 = vst [vmem:[%s204 + $0x18] sm:$0xff] %v211
                %v213 = vld [vmem:[%s203 + $0x40] sm:$0xff]
                %214 = vst [vmem:[%s204 + $0x20] sm:$0xff] %v213
                %v215 = vld [vmem:[%s203 + $0x48] sm:$0xff]
                %216 = vst [vmem:[%s204 + $0x28] sm:$0xff] %v215
                %v217 = vld [vmem:[%s203 + $0x50] sm:$0xff]
                %218 = vst [vmem:[%s204 + $0x30] sm:$0xff] %v217
                %v219 = vld [vmem:[%s203 + $0x58] sm:$0xff]
                %220 = vst [vmem:[%s204 + $0x38] sm:$0xff] %v219
                %v221 = vld [vmem:[%s203 + $0x80] sm:$0xff]
                %222 = vst [vmem:[%s204 + $0x40] sm:$0xff] %v221
                %v223 = vld [vmem:[%s203 + $0x88] sm:$0xff]
                %224 = vst [vmem:[%s204 + $0x48] sm:$0xff] %v223
                %v225 = vld [vmem:[%s203 + $0x90] sm:$0xff]
                %226 = vst [vmem:[%s204 + $0x50] sm:$0xff] %v225
                %v227 = vld [vmem:[%s203 + $0x98] sm:$0xff]
                %228 = vst [vmem:[%s204 + $0x58] sm:$0xff] %v227
                %v229 = vld [vmem:[%s203 + $0xc0] sm:$0xff]
                %230 = vst [vmem:[%s204 + $0x60] sm:$0xff] %v229
                %v231 = vld [vmem:[%s203 + $0xc8] sm:$0xff]
                %232 = vst [vmem:[%s204 + $0x68] sm:$0xff] %v231
                %v233 = vld [vmem:[%s203 + $0xd0] sm:$0xff]
                %234 = vst [vmem:[%s204 + $0x70] sm:$0xff] %v233
                %v235 = vld [vmem:[%s203 + $0xd8] sm:$0xff]
                %236 = vst [vmem:[%s204 + $0x78] sm:$0xff] %v235
                %v237 = vld [vmem:[%s203 + $0x100] sm:$0xff]
                %238 = vst [vmem:[%s204 + $0x80] sm:$0xff] %v237
                %v239 = vld [vmem:[%s203 + $0x108] sm:$0xff]
                %240 = vst [vmem:[%s204 + $0x88] sm:$0xff] %v239
                %v241 = vld [vmem:[%s203 + $0x110] sm:$0xff]
                %242 = vst [vmem:[%s204 + $0x90] sm:$0xff] %v241
                %v243 = vld [vmem:[%s203 + $0x118] sm:$0xff]
                %244 = vst [vmem:[%s204 + $0x98] sm:$0xff] %v243
                %v245 = vld [vmem:[%s203 + $0x140] sm:$0xff]
                %246 = vst [vmem:[%s204 + $0xa0] sm:$0xff] %v245
                %v247 = vld [vmem:[%s203 + $0x148] sm:$0xff]
                %248 = vst [vmem:[%s204 + $0xa8] sm:$0xff] %v247
                %v249 = vld [vmem:[%s203 + $0x150] sm:$0xff]
                %250 = vst [vmem:[%s204 + $0xb0] sm:$0xff] %v249
                %v251 = vld [vmem:[%s203 + $0x158] sm:$0xff]
                %252 = vst [vmem:[%s204 + $0xb8] sm:$0xff] %v251
                %v253 = vld [vmem:[%s203 + $0x180] sm:$0xff]
                %254 = vst [vmem:[%s204 + $0xc0] sm:$0xff] %v253
                %v255 = vld [vmem:[%s203 + $0x188] sm:$0xff]
                %256 = vst [vmem:[%s204 + $0xc8] sm:$0xff] %v255
                %v257 = vld [vmem:[%s203 + $0x190] sm:$0xff]
                %258 = vst [vmem:[%s204 + $0xd0] sm:$0xff] %v257
                %v259 = vld [vmem:[%s203 + $0x198] sm:$0xff]
                %260 = vst [vmem:[%s204 + $0xd8] sm:$0xff] %v259
                %v261 = vld [vmem:[%s203 + $0x1c0] sm:$0xff]
                %262 = vst [vmem:[%s204 + $0xe0] sm:$0xff] %v261
                %v263 = vld [vmem:[%s203 + $0x1c8] sm:$0xff]
                %264 = vst [vmem:[%s204 + $0xe8] sm:$0xff] %v263
                %v265 = vld [vmem:[%s203 + $0x1d0] sm:$0xff]
                %266 = vst [vmem:[%s204 + $0xf0] sm:$0xff] %v265
                %v267 = vld [vmem:[%s203 + $0x1d8] sm:$0xff]
                %268 = vst [vmem:[%s204 + $0xf8] sm:$0xff] %v267
                %v269 = vld [vmem:[%s203 + $0x200] sm:$0xff]
                %270 = vst [vmem:[%s204 + $0x100] sm:$0xff] %v269
                %v271 = vld [vmem:[%s203 + $0x208] sm:$0xff]
                %272 = vst [vmem:[%s204 + $0x108] sm:$0xff] %v271
                %v273 = vld [vmem:[%s203 + $0x210] sm:$0xff]
                %274 = vst [vmem:[%s204 + $0x110] sm:$0xff] %v273
                %v275 = vld [vmem:[%s203 + $0x218] sm:$0xff]
                %276 = vst [vmem:[%s204 + $0x118] sm:$0xff] %v275
                %v277 = vld [vmem:[%s203 + $0x240] sm:$0xff]
                %278 = vst [vmem:[%s204 + $0x120] sm:$0xff] %v277
                %v279 = vld [vmem:[%s203 + $0x248] sm:$0xff]
                %280 = vst [vmem:[%s204 + $0x128] sm:$0xff] %v279
                %v281 = vld [vmem:[%s203 + $0x250] sm:$0xff]
                %282 = vst [vmem:[%s204 + $0x130] sm:$0xff] %v281
                %v283 = vld [vmem:[%s203 + $0x258] sm:$0xff]
                %284 = vst [vmem:[%s204 + $0x138] sm:$0xff] %v283
                %v285 = vld [vmem:[%s203 + $0x280] sm:$0xff]
                %286 = vst [vmem:[%s204 + $0x140] sm:$0xff] %v285
                %v287 = vld [vmem:[%s203 + $0x288] sm:$0xff]
                %288 = vst [vmem:[%s204 + $0x148] sm:$0xff] %v287
                %v289 = vld [vmem:[%s203 + $0x290] sm:$0xff]
                %290 = vst [vmem:[%s204 + $0x150] sm:$0xff] %v289
                %v291 = vld [vmem:[%s203 + $0x298] sm:$0xff]
                %292 = vst [vmem:[%s204 + $0x158] sm:$0xff] %v291
                %v293 = vld [vmem:[%s203 + $0x2c0] sm:$0xff]
                %294 = vst [vmem:[%s204 + $0x160] sm:$0xff] %v293
                %v295 = vld [vmem:[%s203 + $0x2c8] sm:$0xff]
                %296 = vst [vmem:[%s204 + $0x168] sm:$0xff] %v295
                %v297 = vld [vmem:[%s203 + $0x2d0] sm:$0xff]
                %298 = vst [vmem:[%s204 + $0x170] sm:$0xff] %v297
                %v299 = vld [vmem:[%s203 + $0x2d8] sm:$0xff]
                %300 = vst [vmem:[%s204 + $0x178] sm:$0xff] %v299
                %v301 = vld [vmem:[%s203 + $0x300] sm:$0xff]
                %302 = vst [vmem:[%s204 + $0x180] sm:$0xff] %v301
                %v303 = vld [vmem:[%s203 + $0x308] sm:$0xff]
                %304 = vst [vmem:[%s204 + $0x188] sm:$0xff] %v303
                %v305 = vld [vmem:[%s203 + $0x310] sm:$0xff]
                %306 = vst [vmem:[%s204 + $0x190] sm:$0xff] %v305
                %v307 = vld [vmem:[%s203 + $0x318] sm:$0xff]
                %308 = vst [vmem:[%s204 + $0x198] sm:$0xff] %v307
                %v309 = vld [vmem:[%s203 + $0x340] sm:$0xff]
                %310 = vst [vmem:[%s204 + $0x1a0] sm:$0xff] %v309
                %v311 = vld [vmem:[%s203 + $0x348] sm:$0xff]
                %312 = vst [vmem:[%s204 + $0x1a8] sm:$0xff] %v311
                %v313 = vld [vmem:[%s203 + $0x350] sm:$0xff]
                %314 = vst [vmem:[%s204 + $0x1b0] sm:$0xff] %v313
                %v315 = vld [vmem:[%s203 + $0x358] sm:$0xff]
                %316 = vst [vmem:[%s204 + $0x1b8] sm:$0xff] %v315
                %v317 = vld [vmem:[%s203 + $0x380] sm:$0xff]
                %318 = vst [vmem:[%s204 + $0x1c0] sm:$0xff] %v317
                %v319 = vld [vmem:[%s203 + $0x388] sm:$0xff]
                %320 = vst [vmem:[%s204 + $0x1c8] sm:$0xff] %v319
                %v321 = vld [vmem:[%s203 + $0x390] sm:$0xff]
                %322 = vst [vmem:[%s204 + $0x1d0] sm:$0xff] %v321
                %v323 = vld [vmem:[%s203 + $0x398] sm:$0xff]
                %324 = vst [vmem:[%s204 + $0x1d8] sm:$0xff] %v323
                %v325 = vld [vmem:[%s203 + $0x3c0] sm:$0xff]
                %326 = vst [vmem:[%s204 + $0x1e0] sm:$0xff] %v325
                %v327 = vld [vmem:[%s203 + $0x3c8] sm:$0xff]
                %328 = vst [vmem:[%s204 + $0x1e8] sm:$0xff] %v327
                %v329 = vld [vmem:[%s203 + $0x3d0] sm:$0xff]
                %330 = vst [vmem:[%s204 + $0x1f0] sm:$0xff] %v329
                %v331 = vld [vmem:[%s203 + $0x3d8] sm:$0xff]
                %332 = vst [vmem:[%s204 + $0x1f8] sm:$0xff] %v331
                %v333 = vld [vmem:[%s203 + $0x400] sm:$0xff]
                %334 = vst [vmem:[%s204 + $0x200] sm:$0xff] %v333
                %v335 = vld [vmem:[%s203 + $0x408] sm:$0xff]
                %336 = vst [vmem:[%s204 + $0x208] sm:$0xff] %v335
                %v337 = vld [vmem:[%s203 + $0x410] sm:$0xff]
                %338 = vst [vmem:[%s204 + $0x210] sm:$0xff] %v337
                %v339 = vld [vmem:[%s203 + $0x418] sm:$0xff]
                %340 = vst [vmem:[%s204 + $0x218] sm:$0xff] %v339
                %v341 = vld [vmem:[%s203 + $0x440] sm:$0xff]
                %342 = vst [vmem:[%s204 + $0x220] sm:$0xff] %v341
                %v343 = vld [vmem:[%s203 + $0x448] sm:$0xff]
                %344 = vst [vmem:[%s204 + $0x228] sm:$0xff] %v343
                %v345 = vld [vmem:[%s203 + $0x450] sm:$0xff]
                %346 = vst [vmem:[%s204 + $0x230] sm:$0xff] %v345
                %v347 = vld [vmem:[%s203 + $0x458] sm:$0xff]
                %348 = vst [vmem:[%s204 + $0x238] sm:$0xff] %v347
                %v349 = vld [vmem:[%s203 + $0x480] sm:$0xff]
                %350 = vst [vmem:[%s204 + $0x240] sm:$0xff] %v349
                %v351 = vld [vmem:[%s203 + $0x488] sm:$0xff]
                %352 = vst [vmem:[%s204 + $0x248] sm:$0xff] %v351
                %v353 = vld [vmem:[%s203 + $0x490] sm:$0xff]
                %354 = vst [vmem:[%s204 + $0x250] sm:$0xff] %v353
                %v355 = vld [vmem:[%s203 + $0x498] sm:$0xff]
                %356 = vst [vmem:[%s204 + $0x258] sm:$0xff] %v355
                %v357 = vld [vmem:[%s203 + $0x4c0] sm:$0xff]
                %358 = vst [vmem:[%s204 + $0x260] sm:$0xff] %v357
                %v359 = vld [vmem:[%s203 + $0x4c8] sm:$0xff]
                %360 = vst [vmem:[%s204 + $0x268] sm:$0xff] %v359
                %v361 = vld [vmem:[%s203 + $0x4d0] sm:$0xff]
                %362 = vst [vmem:[%s204 + $0x270] sm:$0xff] %v361
                %v363 = vld [vmem:[%s203 + $0x4d8] sm:$0xff]
                %364 = vst [vmem:[%s204 + $0x278] sm:$0xff] %v363
                %v365 = vld [vmem:[%s203 + $0x500] sm:$0xff]
                %366 = vst [vmem:[%s204 + $0x280] sm:$0xff] %v365
                %v367 = vld [vmem:[%s203 + $0x508] sm:$0xff]
                %368 = vst [vmem:[%s204 + $0x288] sm:$0xff] %v367
                %v369 = vld [vmem:[%s203 + $0x510] sm:$0xff]
                %370 = vst [vmem:[%s204 + $0x290] sm:$0xff] %v369
                %v371 = vld [vmem:[%s203 + $0x518] sm:$0xff]
                %372 = vst [vmem:[%s204 + $0x298] sm:$0xff] %v371
                %v373 = vld [vmem:[%s203 + $0x540] sm:$0xff]
                %374 = vst [vmem:[%s204 + $0x2a0] sm:$0xff] %v373
                %v375 = vld [vmem:[%s203 + $0x548] sm:$0xff]
                %376 = vst [vmem:[%s204 + $0x2a8] sm:$0xff] %v375
                %v377 = vld [vmem:[%s203 + $0x550] sm:$0xff]
                %378 = vst [vmem:[%s204 + $0x2b0] sm:$0xff] %v377
                %v379 = vld [vmem:[%s203 + $0x558] sm:$0xff]
                %380 = vst [vmem:[%s204 + $0x2b8] sm:$0xff] %v379
                %v381 = vld [vmem:[%s203 + $0x580] sm:$0xff]
                %382 = vst [vmem:[%s204 + $0x2c0] sm:$0xff] %v381
                %v383 = vld [vmem:[%s203 + $0x588] sm:$0xff]
                %384 = vst [vmem:[%s204 + $0x2c8] sm:$0xff] %v383
                %v385 = vld [vmem:[%s203 + $0x590] sm:$0xff]
                %386 = vst [vmem:[%s204 + $0x2d0] sm:$0xff] %v385
                %v387 = vld [vmem:[%s203 + $0x598] sm:$0xff]
                %388 = vst [vmem:[%s204 + $0x2d8] sm:$0xff] %v387
                %v389 = vld [vmem:[%s203 + $0x5c0] sm:$0xff]
                %390 = vst [vmem:[%s204 + $0x2e0] sm:$0xff] %v389
                %v391 = vld [vmem:[%s203 + $0x5c8] sm:$0xff]
                %392 = vst [vmem:[%s204 + $0x2e8] sm:$0xff] %v391
                %v393 = vld [vmem:[%s203 + $0x5d0] sm:$0xff]
                %394 = vst [vmem:[%s204 + $0x2f0] sm:$0xff] %v393
                %v395 = vld [vmem:[%s203 + $0x5d8] sm:$0xff]
                %396 = vst [vmem:[%s204 + $0x2f8] sm:$0xff] %v395
                %v397 = vld [vmem:[%s203 + $0x600] sm:$0xff]
                %398 = vst [vmem:[%s204 + $0x300] sm:$0xff] %v397
                %v399 = vld [vmem:[%s203 + $0x608] sm:$0xff]
                %400 = vst [vmem:[%s204 + $0x308] sm:$0xff] %v399
                %v401 = vld [vmem:[%s203 + $0x610] sm:$0xff]
                %402 = vst [vmem:[%s204 + $0x310] sm:$0xff] %v401
                %v403 = vld [vmem:[%s203 + $0x618] sm:$0xff]
                %404 = vst [vmem:[%s204 + $0x318] sm:$0xff] %v403
                %v405 = vld [vmem:[%s203 + $0x640] sm:$0xff]
                %406 = vst [vmem:[%s204 + $0x320] sm:$0xff] %v405
                %v407 = vld [vmem:[%s203 + $0x648] sm:$0xff]
                %408 = vst [vmem:[%s204 + $0x328] sm:$0xff] %v407
                %v409 = vld [vmem:[%s203 + $0x650] sm:$0xff]
                %410 = vst [vmem:[%s204 + $0x330] sm:$0xff] %v409
                %v411 = vld [vmem:[%s203 + $0x658] sm:$0xff]
                %412 = vst [vmem:[%s204 + $0x338] sm:$0xff] %v411
                %v413 = vld [vmem:[%s203 + $0x680] sm:$0xff]
                %414 = vst [vmem:[%s204 + $0x340] sm:$0xff] %v413
                %v415 = vld [vmem:[%s203 + $0x688] sm:$0xff]
                %416 = vst [vmem:[%s204 + $0x348] sm:$0xff] %v415
                %v417 = vld [vmem:[%s203 + $0x690] sm:$0xff]
                %418 = vst [vmem:[%s204 + $0x350] sm:$0xff] %v417
                %v419 = vld [vmem:[%s203 + $0x698] sm:$0xff]
                %420 = vst [vmem:[%s204 + $0x358] sm:$0xff] %v419
              $region41: #{sfc_back_forward.6} parent=35 // loop_footer
                %s202 = sadd.s32 1, %s198
              $region42: #{sfc_back_forward.6} parent=35 // loop_footer_branch
                %197 = sbr.rel target = $region38
              $region43: #{sfc_back_forward.6} parent=35 // loop_exit
                _
            $region36: #{sfc_back_forward.6} parent=31 // pred_fallthru
              _
            // Predicated region
            $region44: #{sfc_back_forward.6} parent=31 // pred_check
              _
            $region45: #{sfc_back_forward.6} parent=31 // pred_check_branch
              %422 = sbr.rel target = $region47
            $region46: #{sfc_back_forward.6} parent=31 // pred_region
              _
            $region47: #{sfc_back_forward.6} parent=31 // pred_fallthru
              _
          $region32: #{sfc_back_forward.6} parent=27 // pred_fallthru
            _
          %423 = vnop
        $region28: #{sfc_back_forward.6} parent=23 // pred_fallthru
          _
      $region24: #{sfc_back_forward.6} parent=5 // pred_fallthru
        _
      %p424 = scmp.le.s32.totalorder 1, %s12
      %p425 = scmp.lt.s32.totalorder %s12, 3
      %p426 = pnand %p424, %p425
      %p427 = pneg %p426
      // Predicated region
      $region48: #{sfc_back_forward.6} parent=5 // pred_check
        _
      $region49: #{sfc_back_forward.6} parent=5 // pred_check_branch
        %429 = sbr.rel (%p426) target = $region51
      $region50: #{sfc_back_forward.6} parent=5 // pred_region
        %s430 = ssub.s32 %s12, 1
        %s431 = sand.u32 %s25, 1
        %s432 = sand.u32 %s25, 1
        %s433 = smul.addr %s432, 864
        %s434 = scalar_lea.vmem [#allocation2], %s433
        // Predicated region
        $region52: #{sfc_back_forward.6} parent=50 // pred_check
          %p435 = pneg %p38
        $region53: #{sfc_back_forward.6} parent=50 // pred_check_branch
          %437 = sbr.rel (%p435) target = $region55
        $region54: #{sfc_back_forward.6} parent=50 // pred_region
          _
        $region55: #{sfc_back_forward.6} parent=50 // pred_fallthru
          _
        %s438 = sand.u32 %s25, 1
        %s439 = sand.u32 %s25, 1
        %s440 = smul.addr %s439, 864
        %s441 = scalar_lea.vmem [#allocation2], %s440
        %p442 = pneg %p38
        %p443 = pneg %p35
        %p444 = pneg %p59
        %p445 = pneg %p56
        %p446 = pneg %p80
        %p447 = pneg %p77
        %p448 = pneg %p106
        %p449 = pneg %p103
        %s450 = sand.u32 %s93, 1
        %s451 = sand.u32 %s93, 1
        %s452 = smul.addr %s451, 192
        %s453 = scalar_lea.vmem [#allocation3], %s452
        %p454 = pneg %p132
        %p455 = pneg %p129
        %p456 = scmp.lt.s32.totalorder %s17, 1
        %s457 = scalar_select %p456, %s17, 1
        %s458 = smul.addr %s457, 3
        %s459 = smul.addr %s458, 8
        %s460 = scalar_lea.vmem %s4, %s459
        %p461 = pneg %p158
        %p462 = pneg %p155
        %p463 = scmp.lt.s32.totalorder %s17, 1
        %s464 = scalar_select %p463, %s17, 1
        %s465 = smul.addr %s464, 3
        %s466 = smul.addr %s465, 8
        %s467 = scalar_lea.vmem %s5, %s466
        %s468 = smul.u32 8, %s17
        %s469 = smul.u32 8, %s17
        %p470 = scmp.lt.s32.totalorder %s17, 1
        %s471 = scalar_select %p470, %s17, 1
        %s472 = smul.addr %s471, 3
        %s473 = smul.addr %s472, 8
        %s474 = scalar_lea.vmem %s4, %s473
        %p475 = scmp.lt.s32.totalorder %s17, 1
        %s476 = scalar_select %p475, %s17, 1
        %s477 = smul.addr %s476, 3
        %s478 = smul.addr %s477, 8
        %s479 = scalar_lea.vmem %s5, %s478
        %v481 = vld [vmem:[%s1] sm:$0xff]
        %v482 = vld [vmem:[%s1 + $0x8] sm:$0xff]
        %v483 = vld [vmem:[%s1 + $0x10] sm:$0xff]
        %v484 = vld [vmem:[%s434] sm:$0xff]
        %v485 = vld [vmem:[%s434 + $0x8] sm:$0xff]
        %v486 = vld [vmem:[%s434 + $0x10] sm:$0xff]
        %v487 = vld [vmem:[%s434 + $0x18] sm:$0xff]
        %v488 = vld [vmem:[%s434 + $0x20] sm:$0xff]
        %v489 = vld [vmem:[%s434 + $0x28] sm:$0xff]
        %v490 = vld [vmem:[%s434 + $0x30] sm:$0xff]
        %v491 = vld [vmem:[%s434 + $0x38] sm:$0xff]
        %v492 = vld [vmem:[%s434 + $0x40] sm:$0xff]
        %v493 = vld [vmem:[%s434 + $0x48] sm:$0xff]
        %v494 = vld [vmem:[%s434 + $0x50] sm:$0xff]
        %v495 = vld [vmem:[%s434 + $0x58] sm:$0xff]
        %v496 = vld [vmem:[%s434 + $0x60] sm:$0xff]
        %v497 = vld [vmem:[%s434 + $0x68] sm:$0xff]
        %v498 = vld [vmem:[%s434 + $0x70] sm:$0xff]
        %v499 = vld [vmem:[%s434 + $0x78] sm:$0xff]
        %v500 = vld [vmem:[%s434 + $0x80] sm:$0xff]
        %v501 = vld [vmem:[%s434 + $0x88] sm:$0xff]
        %v502 = vld [vmem:[%s434 + $0x90] sm:$0xff]
        %v503 = vld [vmem:[%s434 + $0x98] sm:$0xff]
        %v504 = vld [vmem:[%s434 + $0xa0] sm:$0xff]
        %v505 = vld [vmem:[%s434 + $0xa8] sm:$0xff]
        %v506 = vld [vmem:[%s434 + $0xb0] sm:$0xff]
        %v507 = vld [vmem:[%s434 + $0xb8] sm:$0xff]
        %v508 = vld [vmem:[%s434 + $0xc0] sm:$0xff]
        %v509 = vld [vmem:[%s434 + $0xc8] sm:$0xff]
        %v510 = vld [vmem:[%s434 + $0xd0] sm:$0xff]
        %v511 = vld [vmem:[%s434 + $0xd8] sm:$0xff]
        %v512 = vld [vmem:[%s434 + $0xe0] sm:$0xff]
        %v513 = vld [vmem:[%s434 + $0xe8] sm:$0xff]
        %v514 = vld [vmem:[%s434 + $0xf0] sm:$0xff]
        %v515 = vld [vmem:[%s434 + $0xf8] sm:$0xff]
        %v516 = vld [vmem:[%s434 + $0x100] sm:$0xff]
        %v517 = vld [vmem:[%s434 + $0x108] sm:$0xff]
        %v518 = vld [vmem:[%s434 + $0x110] sm:$0xff]
        %v519 = vld [vmem:[%s434 + $0x118] sm:$0xff]
        %v520 = vld [vmem:[%s434 + $0x120] sm:$0xff]
        %v521 = vld [vmem:[%s434 + $0x128] sm:$0xff]
        %v522 = vld [vmem:[%s434 + $0x130] sm:$0xff]
        %v523 = vld [vmem:[%s434 + $0x138] sm:$0xff]
        %v524 = vld [vmem:[%s434 + $0x140] sm:$0xff]
        %v525 = vld [vmem:[%s434 + $0x148] sm:$0xff]
        %v526 = vld [vmem:[%s434 + $0x150] sm:$0xff]
        %v527 = vld [vmem:[%s434 + $0x158] sm:$0xff]
        %v528 = vld [vmem:[%s434 + $0x160] sm:$0xff]
        %v529 = vld [vmem:[%s434 + $0x168] sm:$0xff]
        %v530 = vld [vmem:[%s434 + $0x170] sm:$0xff]
        %v531 = vld [vmem:[%s434 + $0x178] sm:$0xff]
        %v532 = vld [vmem:[%s434 + $0x180] sm:$0xff]
        %v533 = vld [vmem:[%s434 + $0x188] sm:$0xff]
        %v534 = vld [vmem:[%s434 + $0x190] sm:$0xff]
        %v535 = vld [vmem:[%s434 + $0x198] sm:$0xff]
        %v536 = vld [vmem:[%s434 + $0x1a0] sm:$0xff]
        %v537 = vld [vmem:[%s434 + $0x1a8] sm:$0xff]
        %v538 = vld [vmem:[%s434 + $0x1b0] sm:$0xff]
        %v539 = vld [vmem:[%s434 + $0x1b8] sm:$0xff]
        %v540 = vld [vmem:[%s434 + $0x1c0] sm:$0xff]
        %v541 = vld [vmem:[%s434 + $0x1c8] sm:$0xff]
        %v542 = vld [vmem:[%s434 + $0x1d0] sm:$0xff]
        %v543 = vld [vmem:[%s434 + $0x1d8] sm:$0xff]
        %v544 = vld [vmem:[%s434 + $0x1e0] sm:$0xff]
        %v545 = vld [vmem:[%s434 + $0x1e8] sm:$0xff]
        %v546 = vld [vmem:[%s434 + $0x1f0] sm:$0xff]
        %v547 = vld [vmem:[%s434 + $0x1f8] sm:$0xff]
        %v548 = vld [vmem:[%s434 + $0x200] sm:$0xff]
        %v549 = vld [vmem:[%s434 + $0x208] sm:$0xff]
        %v550 = vld [vmem:[%s434 + $0x210] sm:$0xff]
        %v551 = vld [vmem:[%s434 + $0x218] sm:$0xff]
        %v552 = vld [vmem:[%s434 + $0x220] sm:$0xff]
        %v553 = vld [vmem:[%s434 + $0x228] sm:$0xff]
        %v554 = vld [vmem:[%s434 + $0x230] sm:$0xff]
        %v555 = vld [vmem:[%s434 + $0x238] sm:$0xff]
        %v556 = vld [vmem:[%s434 + $0x240] sm:$0xff]
        %v557 = vld [vmem:[%s434 + $0x248] sm:$0xff]
        %v558 = vld [vmem:[%s434 + $0x250] sm:$0xff]
        %v559 = vld [vmem:[%s434 + $0x258] sm:$0xff]
        %v560 = vld [vmem:[%s434 + $0x260] sm:$0xff]
        %v561 = vld [vmem:[%s434 + $0x268] sm:$0xff]
        %v562 = vld [vmem:[%s434 + $0x270] sm:$0xff]
        %v563 = vld [vmem:[%s434 + $0x278] sm:$0xff]
        %v564 = vld [vmem:[%s434 + $0x280] sm:$0xff]
        %v565 = vld [vmem:[%s434 + $0x288] sm:$0xff]
        %v566 = vld [vmem:[%s434 + $0x290] sm:$0xff]
        %v567 = vld [vmem:[%s434 + $0x298] sm:$0xff]
        %v568 = vld [vmem:[%s434 + $0x2a0] sm:$0xff]
        %v569 = vld [vmem:[%s434 + $0x2a8] sm:$0xff]
        %v570 = vld [vmem:[%s434 + $0x2b0] sm:$0xff]
        %v571 = vld [vmem:[%s434 + $0x2b8] sm:$0xff]
        %v572 = vld [vmem:[%s434 + $0x2c0] sm:$0xff]
        %v573 = vld [vmem:[%s434 + $0x2c8] sm:$0xff]
        %v574 = vld [vmem:[%s434 + $0x2d0] sm:$0xff]
        %v575 = vld [vmem:[%s434 + $0x2d8] sm:$0xff]
        %v576 = vld [vmem:[%s434 + $0x2e0] sm:$0xff]
        %v577 = vld [vmem:[%s434 + $0x2e8] sm:$0xff]
        %v578 = vld [vmem:[%s434 + $0x2f0] sm:$0xff]
        %v579 = vld [vmem:[%s434 + $0x2f8] sm:$0xff]
        %v580 = vld [vmem:[%s434 + $0x300] sm:$0xff]
        %v581 = vld [vmem:[%s434 + $0x308] sm:$0xff]
        %v582 = vld [vmem:[%s434 + $0x310] sm:$0xff]
        %v583 = vld [vmem:[%s434 + $0x318] sm:$0xff]
        %v584 = vld [vmem:[%s434 + $0x320] sm:$0xff]
        %v585 = vld [vmem:[%s434 + $0x328] sm:$0xff]
        %v586 = vld [vmem:[%s434 + $0x330] sm:$0xff]
        %v587 = vld [vmem:[%s434 + $0x338] sm:$0xff]
        %v588 = vld [vmem:[%s434 + $0x340] sm:$0xff]
        %v589 = vld [vmem:[%s434 + $0x348] sm:$0xff]
        %v590 = vld [vmem:[%s434 + $0x350] sm:$0xff]
        %v591 = vld [vmem:[%s434 + $0x358] sm:$0xff]
        %v592 = vld [vmem:[%s2] sm:$0xff]
        %v593 = vld [vmem:[%s2 + $0x8] sm:$0xff]
        %v594 = vld [vmem:[%s2 + $0x10] sm:$0xff]
        %596 = vset.pattern.permute.xlu0 0
        %597 = vperm.xlu0 %596, %v592
        %v598 = vpop.permute.xlu0 %597
        %601 = vset.pattern.permute.xlu0 0
        %602 = vperm.xlu0 %601, %v593
        %v603 = vpop.permute.xlu0 %602
        %606 = vset.pattern.permute.xlu0 0
        %607 = vperm.xlu0 %606, %v594
        %v608 = vpop.permute.xlu0 %607
        %v613 = vunpack.c.l.b16 %v481
        %v614 = vunpack.c.h.b16 %v481
        %v615 = vunpack.c.l.b16 %v482
        %v616 = vunpack.c.h.b16 %v482
        %v617 = vunpack.c.l.b16 %v483
        %v618 = vunpack.c.h.b16 %v483
        %v619 = vpack.c.b16 %v615, %v613
        %v620 = vpack.c.b16 %v616, %v614
        %v621 = vpack.c.b16 %v617, %v617
        %v622 = vpack.c.b16 %v618, %v618
        %v733 = vunpack.c.l.b16 %v484
        %v734 = vunpack.c.h.b16 %v484
        %v735 = vunpack.c.l.b16 %v485
        %v736 = vunpack.c.h.b16 %v485
        %v737 = vunpack.c.l.b16 %v486
        %v738 = vunpack.c.h.b16 %v486
        %v739 = vunpack.c.l.b16 %v487
        %v740 = vunpack.c.h.b16 %v487
        %v741 = vunpack.c.l.b16 %v488
        %v742 = vunpack.c.h.b16 %v488
        %v743 = vunpack.c.l.b16 %v489
        %v744 = vunpack.c.h.b16 %v489
        %v745 = vunpack.c.l.b16 %v490
        %v746 = vunpack.c.h.b16 %v490
        %v747 = vunpack.c.l.b16 %v491
        %v748 = vunpack.c.h.b16 %v491
        %v749 = vunpack.c.l.b16 %v492
        %v750 = vunpack.c.h.b16 %v492
        %v751 = vunpack.c.l.b16 %v493
        %v752 = vunpack.c.h.b16 %v493
        %v753 = vunpack.c.l.b16 %v494
        %v754 = vunpack.c.h.b16 %v494
        %v755 = vunpack.c.l.b16 %v495
        %v756 = vunpack.c.h.b16 %v495
        %v757 = vunpack.c.l.b16 %v496
        %v758 = vunpack.c.h.b16 %v496
        %v759 = vunpack.c.l.b16 %v497
        %v760 = vunpack.c.h.b16 %v497
        %v761 = vunpack.c.l.b16 %v498
        %v762 = vunpack.c.h.b16 %v498
        %v763 = vunpack.c.l.b16 %v499
        %v764 = vunpack.c.h.b16 %v499
        %v765 = vunpack.c.l.b16 %v500
        %v766 = vunpack.c.h.b16 %v500
        %v767 = vunpack.c.l.b16 %v501
        %v768 = vunpack.c.h.b16 %v501
        %v769 = vunpack.c.l.b16 %v502
        %v770 = vunpack.c.h.b16 %v502
        %v771 = vunpack.c.l.b16 %v503
        %v772 = vunpack.c.h.b16 %v503
        %v773 = vunpack.c.l.b16 %v504
        %v774 = vunpack.c.h.b16 %v504
        %v775 = vunpack.c.l.b16 %v505
        %v776 = vunpack.c.h.b16 %v505
        %v777 = vunpack.c.l.b16 %v506
        %v778 = vunpack.c.h.b16 %v506
        %v779 = vunpack.c.l.b16 %v507
        %v780 = vunpack.c.h.b16 %v507
        %v781 = vunpack.c.l.b16 %v508
        %v782 = vunpack.c.h.b16 %v508
        %v783 = vunpack.c.l.b16 %v509
        %v784 = vunpack.c.h.b16 %v509
        %v785 = vunpack.c.l.b16 %v510
        %v786 = vunpack.c.h.b16 %v510
        %v787 = vunpack.c.l.b16 %v511
        %v788 = vunpack.c.h.b16 %v511
        %v789 = vunpack.c.l.b16 %v512
        %v790 = vunpack.c.h.b16 %v512
        %v791 = vunpack.c.l.b16 %v513
        %v792 = vunpack.c.h.b16 %v513
        %v793 = vunpack.c.l.b16 %v514
        %v794 = vunpack.c.h.b16 %v514
        %v795 = vunpack.c.l.b16 %v515
        %v796 = vunpack.c.h.b16 %v515
        %v797 = vunpack.c.l.b16 %v516
        %v798 = vunpack.c.h.b16 %v516
        %v799 = vunpack.c.l.b16 %v517
        %v800 = vunpack.c.h.b16 %v517
        %v801 = vunpack.c.l.b16 %v518
        %v802 = vunpack.c.h.b16 %v518
        %v803 = vunpack.c.l.b16 %v519
        %v804 = vunpack.c.h.b16 %v519
        %v805 = vunpack.c.l.b16 %v520
        %v806 = vunpack.c.h.b16 %v520
        %v807 = vunpack.c.l.b16 %v521
        %v808 = vunpack.c.h.b16 %v521
        %v809 = vunpack.c.l.b16 %v522
        %v810 = vunpack.c.h.b16 %v522
        %v811 = vunpack.c.l.b16 %v523
        %v812 = vunpack.c.h.b16 %v523
        %v813 = vunpack.c.l.b16 %v524
        %v814 = vunpack.c.h.b16 %v524
        %v815 = vunpack.c.l.b16 %v525
        %v816 = vunpack.c.h.b16 %v525
        %v817 = vunpack.c.l.b16 %v526
        %v818 = vunpack.c.h.b16 %v526
        %v819 = vunpack.c.l.b16 %v527
        %v820 = vunpack.c.h.b16 %v527
        %v821 = vunpack.c.l.b16 %v528
        %v822 = vunpack.c.h.b16 %v528
        %v823 = vunpack.c.l.b16 %v529
        %v824 = vunpack.c.h.b16 %v529
        %v825 = vunpack.c.l.b16 %v530
        %v826 = vunpack.c.h.b16 %v530
        %v827 = vunpack.c.l.b16 %v531
        %v828 = vunpack.c.h.b16 %v531
        %v829 = vunpack.c.l.b16 %v532
        %v830 = vunpack.c.h.b16 %v532
        %v831 = vunpack.c.l.b16 %v533
        %v832 = vunpack.c.h.b16 %v533
        %v833 = vunpack.c.l.b16 %v534
        %v834 = vunpack.c.h.b16 %v534
        %v835 = vunpack.c.l.b16 %v535
        %v836 = vunpack.c.h.b16 %v535
        %v837 = vunpack.c.l.b16 %v536
        %v838 = vunpack.c.h.b16 %v536
        %v839 = vunpack.c.l.b16 %v537
        %v840 = vunpack.c.h.b16 %v537
        %v841 = vunpack.c.l.b16 %v538
        %v842 = vunpack.c.h.b16 %v538
        %v843 = vunpack.c.l.b16 %v539
        %v844 = vunpack.c.h.b16 %v539
        %v845 = vunpack.c.l.b16 %v540
        %v846 = vunpack.c.h.b16 %v540
        %v847 = vunpack.c.l.b16 %v541
        %v848 = vunpack.c.h.b16 %v541
        %v849 = vunpack.c.l.b16 %v542
        %v850 = vunpack.c.h.b16 %v542
        %v851 = vunpack.c.l.b16 %v543
        %v852 = vunpack.c.h.b16 %v543
        %v853 = vunpack.c.l.b16 %v544
        %v854 = vunpack.c.h.b16 %v544
        %v855 = vunpack.c.l.b16 %v545
        %v856 = vunpack.c.h.b16 %v545
        %v857 = vunpack.c.l.b16 %v546
        %v858 = vunpack.c.h.b16 %v546
        %v859 = vunpack.c.l.b16 %v547
        %v860 = vunpack.c.h.b16 %v547
        %v861 = vunpack.c.l.b16 %v548
        %v862 = vunpack.c.h.b16 %v548
        %v863 = vunpack.c.l.b16 %v549
        %v864 = vunpack.c.h.b16 %v549
        %v865 = vunpack.c.l.b16 %v550
        %v866 = vunpack.c.h.b16 %v550
        %v867 = vunpack.c.l.b16 %v551
        %v868 = vunpack.c.h.b16 %v551
        %v869 = vunpack.c.l.b16 %v552
        %v870 = vunpack.c.h.b16 %v552
        %v871 = vunpack.c.l.b16 %v553
        %v872 = vunpack.c.h.b16 %v553
        %v873 = vunpack.c.l.b16 %v554
        %v874 = vunpack.c.h.b16 %v554
        %v875 = vunpack.c.l.b16 %v555
        %v876 = vunpack.c.h.b16 %v555
        %v877 = vunpack.c.l.b16 %v556
        %v878 = vunpack.c.h.b16 %v556
        %v879 = vunpack.c.l.b16 %v557
        %v880 = vunpack.c.h.b16 %v557
        %v881 = vunpack.c.l.b16 %v558
        %v882 = vunpack.c.h.b16 %v558
        %v883 = vunpack.c.l.b16 %v559
        %v884 = vunpack.c.h.b16 %v559
        %v885 = vunpack.c.l.b16 %v560
        %v886 = vunpack.c.h.b16 %v560
        %v887 = vunpack.c.l.b16 %v561
        %v888 = vunpack.c.h.b16 %v561
        %v889 = vunpack.c.l.b16 %v562
        %v890 = vunpack.c.h.b16 %v562
        %v891 = vunpack.c.l.b16 %v563
        %v892 = vunpack.c.h.b16 %v563
        %v893 = vunpack.c.l.b16 %v564
        %v894 = vunpack.c.h.b16 %v564
        %v895 = vunpack.c.l.b16 %v565
        %v896 = vunpack.c.h.b16 %v565
        %v897 = vunpack.c.l.b16 %v566
        %v898 = vunpack.c.h.b16 %v566
        %v899 = vunpack.c.l.b16 %v567
        %v900 = vunpack.c.h.b16 %v567
        %v901 = vunpack.c.l.b16 %v568
        %v902 = vunpack.c.h.b16 %v568
        %v903 = vunpack.c.l.b16 %v569
        %v904 = vunpack.c.h.b16 %v569
        %v905 = vunpack.c.l.b16 %v570
        %v906 = vunpack.c.h.b16 %v570
        %v907 = vunpack.c.l.b16 %v571
        %v908 = vunpack.c.h.b16 %v571
        %v909 = vunpack.c.l.b16 %v572
        %v910 = vunpack.c.h.b16 %v572
        %v911 = vunpack.c.l.b16 %v573
        %v912 = vunpack.c.h.b16 %v573
        %v913 = vunpack.c.l.b16 %v574
        %v914 = vunpack.c.h.b16 %v574
        %v915 = vunpack.c.l.b16 %v575
        %v916 = vunpack.c.h.b16 %v575
        %v917 = vunpack.c.l.b16 %v576
        %v918 = vunpack.c.h.b16 %v576
        %v919 = vunpack.c.l.b16 %v577
        %v920 = vunpack.c.h.b16 %v577
        %v921 = vunpack.c.l.b16 %v578
        %v922 = vunpack.c.h.b16 %v578
        %v923 = vunpack.c.l.b16 %v579
        %v924 = vunpack.c.h.b16 %v579
        %v925 = vunpack.c.l.b16 %v580
        %v926 = vunpack.c.h.b16 %v580
        %v927 = vunpack.c.l.b16 %v581
        %v928 = vunpack.c.h.b16 %v581
        %v929 = vunpack.c.l.b16 %v582
        %v930 = vunpack.c.h.b16 %v582
        %v931 = vunpack.c.l.b16 %v583
        %v932 = vunpack.c.h.b16 %v583
        %v933 = vunpack.c.l.b16 %v584
        %v934 = vunpack.c.h.b16 %v584
        %v935 = vunpack.c.l.b16 %v585
        %v936 = vunpack.c.h.b16 %v585
        %v937 = vunpack.c.l.b16 %v586
        %v938 = vunpack.c.h.b16 %v586
        %v939 = vunpack.c.l.b16 %v587
        %v940 = vunpack.c.h.b16 %v587
        %v941 = vunpack.c.l.b16 %v588
        %v942 = vunpack.c.h.b16 %v588
        %v943 = vunpack.c.l.b16 %v589
        %v944 = vunpack.c.h.b16 %v589
        %v945 = vunpack.c.l.b16 %v590
        %v946 = vunpack.c.h.b16 %v590
        %v947 = vunpack.c.l.b16 %v591
        %v948 = vunpack.c.h.b16 %v591
        %v949 = vpack.c.b16 %v741, %v733
        %v950 = vpack.c.b16 %v742, %v734
        %v951 = vpack.c.b16 %v743, %v735
        %v952 = vpack.c.b16 %v744, %v736
        %v953 = vpack.c.b16 %v745, %v737
        %v954 = vpack.c.b16 %v746, %v738
        %v955 = vpack.c.b16 %v747, %v739
        %v956 = vpack.c.b16 %v748, %v740
        %v957 = vpack.c.b16 %v757, %v749
        %v958 = vpack.c.b16 %v758, %v750
        %v959 = vpack.c.b16 %v759, %v751
        %v960 = vpack.c.b16 %v760, %v752
        %v961 = vpack.c.b16 %v761, %v753
        %v962 = vpack.c.b16 %v762, %v754
        %v963 = vpack.c.b16 %v763, %v755
        %v964 = vpack.c.b16 %v764, %v756
        %v965 = vpack.c.b16 %v773, %v765
        %v966 = vpack.c.b16 %v774, %v766
        %v967 = vpack.c.b16 %v775, %v767
        %v968 = vpack.c.b16 %v776, %v768
        %v969 = vpack.c.b16 %v777, %v769
        %v970 = vpack.c.b16 %v778, %v770
        %v971 = vpack.c.b16 %v779, %v771
        %v972 = vpack.c.b16 %v780, %v772
        %v973 = vpack.c.b16 %v789, %v781
        %v974 = vpack.c.b16 %v790, %v782
        %v975 = vpack.c.b16 %v791, %v783
        %v976 = vpack.c.b16 %v792, %v784
        %v977 = vpack.c.b16 %v793, %v785
        %v978 = vpack.c.b16 %v794, %v786
        %v979 = vpack.c.b16 %v795, %v787
        %v980 = vpack.c.b16 %v796, %v788
        %v981 = vpack.c.b16 %v805, %v797
        %v982 = vpack.c.b16 %v806, %v798
        %v983 = vpack.c.b16 %v807, %v799
        %v984 = vpack.c.b16 %v808, %v800
        %v985 = vpack.c.b16 %v809, %v801
        %v986 = vpack.c.b16 %v810, %v802
        %v987 = vpack.c.b16 %v811, %v803
        %v988 = vpack.c.b16 %v812, %v804
        %v989 = vpack.c.b16 %v821, %v813
        %v990 = vpack.c.b16 %v822, %v814
        %v991 = vpack.c.b16 %v823, %v815
        %v992 = vpack.c.b16 %v824, %v816
        %v993 = vpack.c.b16 %v825, %v817
        %v994 = vpack.c.b16 %v826, %v818
        %v995 = vpack.c.b16 %v827, %v819
        %v996 = vpack.c.b16 %v828, %v820
        %v997 = vpack.c.b16 %v837, %v829
        %v998 = vpack.c.b16 %v838, %v830
        %v999 = vpack.c.b16 %v839, %v831
        %v1000 = vpack.c.b16 %v840, %v832
        %v1001 = vpack.c.b16 %v841, %v833
        %v1002 = vpack.c.b16 %v842, %v834
        %v1003 = vpack.c.b16 %v843, %v835
        %v1004 = vpack.c.b16 %v844, %v836
        %v1005 = vpack.c.b16 %v853, %v845
        %v1006 = vpack.c.b16 %v854, %v846
        %v1007 = vpack.c.b16 %v855, %v847
        %v1008 = vpack.c.b16 %v856, %v848
        %v1009 = vpack.c.b16 %v857, %v849
        %v1010 = vpack.c.b16 %v858, %v850
        %v1011 = vpack.c.b16 %v859, %v851
        %v1012 = vpack.c.b16 %v860, %v852
        %v1013 = vpack.c.b16 %v869, %v861
        %v1014 = vpack.c.b16 %v870, %v862
        %v1015 = vpack.c.b16 %v871, %v863
        %v1016 = vpack.c.b16 %v872, %v864
        %v1017 = vpack.c.b16 %v873, %v865
        %v1018 = vpack.c.b16 %v874, %v866
        %v1019 = vpack.c.b16 %v875, %v867
        %v1020 = vpack.c.b16 %v876, %v868
        %v1021 = vpack.c.b16 %v885, %v877
        %v1022 = vpack.c.b16 %v886, %v878
        %v1023 = vpack.c.b16 %v887, %v879
        %v1024 = vpack.c.b16 %v888, %v880
        %v1025 = vpack.c.b16 %v889, %v881
        %v1026 = vpack.c.b16 %v890, %v882
        %v1027 = vpack.c.b16 %v891, %v883
        %v1028 = vpack.c.b16 %v892, %v884
        %v1029 = vpack.c.b16 %v901, %v893
        %v1030 = vpack.c.b16 %v902, %v894
        %v1031 = vpack.c.b16 %v903, %v895
        %v1032 = vpack.c.b16 %v904, %v896
        %v1033 = vpack.c.b16 %v905, %v897
        %v1034 = vpack.c.b16 %v906, %v898
        %v1035 = vpack.c.b16 %v907, %v899
        %v1036 = vpack.c.b16 %v908, %v900
        %v1037 = vpack.c.b16 %v917, %v909
        %v1038 = vpack.c.b16 %v918, %v910
        %v1039 = vpack.c.b16 %v919, %v911
        %v1040 = vpack.c.b16 %v920, %v912
        %v1041 = vpack.c.b16 %v921, %v913
        %v1042 = vpack.c.b16 %v922, %v914
        %v1043 = vpack.c.b16 %v923, %v915
        %v1044 = vpack.c.b16 %v924, %v916
        %v1045 = vpack.c.b16 %v933, %v925
        %v1046 = vpack.c.b16 %v934, %v926
        %v1047 = vpack.c.b16 %v935, %v927
        %v1048 = vpack.c.b16 %v936, %v928
        %v1049 = vpack.c.b16 %v937, %v929
        %v1050 = vpack.c.b16 %v938, %v930
        %v1051 = vpack.c.b16 %v939, %v931
        %v1052 = vpack.c.b16 %v940, %v932
        %v1053 = vpack.c.b16 %v941, %v941
        %v1054 = vpack.c.b16 %v942, %v942
        %v1055 = vpack.c.b16 %v943, %v943
        %v1056 = vpack.c.b16 %v944, %v944
        %v1057 = vpack.c.b16 %v945, %v945
        %v1058 = vpack.c.b16 %v946, %v946
        %v1059 = vpack.c.b16 %v947, %v947
        %v1060 = vpack.c.b16 %v948, %v948
        %vm1165 = vcmask 719872
        %v1167 = vsel %vm1165, %v620, 0
        %v1170 = vsel %vm1165, %v622, 0
        %vm1172 = vcmask 1043456
        %v1174 = vsel %vm1172, %v1053, 0
        %v1177 = vsel %vm1172, %v1054, 0
        %v1180 = vsel %vm1172, %v1055, 0
        %v1183 = vsel %vm1172, %v1056, 0
        %v1186 = vsel %vm1172, %v1057, 0
        %v1189 = vsel %vm1172, %v1058, 0
        %v1192 = vsel %vm1172, %v1059, 0
        %v1195 = vsel %vm1172, %v1060, 0
        %1197 = vmatprep.subr.bf16.mxu0 %v950
        %1198 = vmatpush1.bf16.msra.mxu0 %v949
        %1199 = vmatprep.subr.bf16.mxu0 %v958
        %1200 = vmatpush1.bf16.msra.mxu0 %v957
        %1201 = vmatprep.subr.bf16.mxu0 %v966
        %1202 = vmatpush1.bf16.msra.mxu0 %v965
        %1203 = vmatprep.subr.bf16.mxu0 %v974
        %1204 = vmatpush1.bf16.msra.mxu0 %v973
        %1205 = vmatprep.subr.bf16.mxu0 %v982
        %1206 = vmatpush1.bf16.msra.mxu0 %v981
        %1207 = vmatprep.subr.bf16.mxu0 %v990
        %1208 = vmatpush1.bf16.msra.mxu0 %v989
        %1209 = vmatprep.subr.bf16.mxu0 %v998
        %1210 = vmatpush1.bf16.msra.mxu0 %v997
        %1211 = vmatprep.subr.bf16.mxu0 %v1006
        %1212 = vmatpush1.bf16.msra.mxu0 %v1005
        %1213 = vmatprep.subr.bf16.mxu0 %v1014
        %1214 = vmatpush1.bf16.msra.mxu0 %v1013
        %1215 = vmatprep.subr.bf16.mxu0 %v1022
        %1216 = vmatpush1.bf16.msra.mxu0 %v1021
        %1217 = vmatprep.subr.bf16.mxu0 %v1030
        %1218 = vmatpush1.bf16.msra.mxu0 %v1029
        %1219 = vmatprep.subr.bf16.mxu0 %v1038
        %1220 = vmatpush1.bf16.msra.mxu0 %v1037
        %1221 = vmatprep.subr.bf16.mxu0 %v1046
        %1222 = vmatpush1.bf16.msra.mxu0 %v1045
        %1223 = vmatprep.subr.bf16.mxu0 %v1177
        %1224 = vmatpush1.bf16.msra.mxu0 %v1174
        %1225 = vmatprep.subr.bf16.mxu0 0
        %1226 = vmatpush1.bf16.msra.mxu0 0
        %1227 = vmatprep.subr.bf16.mxu0 0
        %1228 = vmatpush1.bf16.msra.mxu0 0
        %1229 = vmatprep.mubr.bf16.mxu0 %v1167
        %1230 = vmatmul.mubr.bf16.gmra.mrb[0].mxu0 %v619
        %v1231 = vpop.f32.mrb[0].mxu0
        %v1232 = vadd.f32 %v598, %v1231
        %v1233 = vpop.f32.mrb[0].mxu0
        %v1234 = vadd.f32 %v598, %v1233
        %v1235 = vpop.f32.mrb[0].mxu0
        %v1236 = vadd.f32 %v603, %v1235
        %v1237 = vpop.f32.mrb[0].mxu0
        %v1238 = vadd.f32 %v603, %v1237
        %1239 = vmatprep.mubr.bf16.mxu0 %v1170
        %1240 = vmatmul.mubr.bf16.gmra.mrb[0].mxu0 %v621
        %v1241 = vpop.f32.mrb[0].mxu0
        %v1242 = vadd.f32 %v608, %v1241
        %v1243 = vpop.f32.mrb[0].mxu0
        %v1244 = vadd.f32 %v608, %v1243
        %v1245 = vpop.f32.mrb[0].mxu0
        %v1246 = vpop.f32.mrb[0].mxu0
        %1247 = vdwg.mxu0
        %1248 = vmatprep.subr.bf16.mxu0 %v952
        %1249 = vmatpush1.bf16.msra.mxu0 %v951
        %1250 = vmatprep.subr.bf16.mxu0 %v960
        %1251 = vmatpush1.bf16.msra.mxu0 %v959
        %1252 = vmatprep.subr.bf16.mxu0 %v968
        %1253 = vmatpush1.bf16.msra.mxu0 %v967
        %1254 = vmatprep.subr.bf16.mxu0 %v976
        %1255 = vmatpush1.bf16.msra.mxu0 %v975
        %1256 = vmatprep.subr.bf16.mxu0 %v984
        %1257 = vmatpush1.bf16.msra.mxu0 %v983
        %1258 = vmatprep.subr.bf16.mxu0 %v992
        %1259 = vmatpush1.bf16.msra.mxu0 %v991
        %1260 = vmatprep.subr.bf16.mxu0 %v1000
        %1261 = vmatpush1.bf16.msra.mxu0 %v999
        %1262 = vmatprep.subr.bf16.mxu0 %v1008
        %1263 = vmatpush1.bf16.msra.mxu0 %v1007
        %1264 = vmatprep.subr.bf16.mxu0 %v1016
        %1265 = vmatpush1.bf16.msra.mxu0 %v1015
        %1266 = vmatprep.subr.bf16.mxu0 %v1024
        %1267 = vmatpush1.bf16.msra.mxu0 %v1023
        %1268 = vmatprep.subr.bf16.mxu0 %v1032
        %1269 = vmatpush1.bf16.msra.mxu0 %v1031
        %1270 = vmatprep.subr.bf16.mxu0 %v1040
        %1271 = vmatpush1.bf16.msra.mxu0 %v1039
        %1272 = vmatprep.subr.bf16.mxu0 %v1048
        %1273 = vmatpush1.bf16.msra.mxu0 %v1047
        %1274 = vmatprep.subr.bf16.mxu0 %v1183
        %1275 = vmatpush1.bf16.msra.mxu0 %v1180
        %1276 = vmatprep.subr.bf16.mxu0 0
        %1277 = vmatpush1.bf16.msra.mxu0 0
        %1278 = vmatprep.subr.bf16.mxu0 0
        %1279 = vmatpush1.bf16.msra.mxu0 0
        %1280 = vmatprep.mubr.bf16.mxu0 %v1167
        %1281 = vmatmul.mubr.bf16.gmra.mrb[0].mxu0 %v619
        %v1282 = vpop.f32.mrb[0].mxu0
        %v1283 = vadd.f32 %v598, %v1282
        %v1284 = vpop.f32.mrb[0].mxu0
        %v1285 = vadd.f32 %v598, %v1284
        %v1286 = vpop.f32.mrb[0].mxu0
        %v1287 = vadd.f32 %v603, %v1286
        %v1288 = vpop.f32.mrb[0].mxu0
        %v1289 = vadd.f32 %v603, %v1288
        %1290 = vmatprep.mubr.bf16.mxu0 %v1170
        %1291 = vmatmul.mubr.bf16.gmra.mrb[0].mxu0 %v621
        %v1292 = vpop.f32.mrb[0].mxu0
        %v1293 = vadd.f32 %v608, %v1292
        %v1294 = vpop.f32.mrb[0].mxu0
        %v1295 = vadd.f32 %v608, %v1294
        %v1296 = vpop.f32.mrb[0].mxu0
        %v1297 = vpop.f32.mrb[0].mxu0
        %1298 = vdwg.mxu0
        %1299 = vmatprep.subr.bf16.mxu0 %v954
        %1300 = vmatpush1.bf16.msra.mxu0 %v953
        %1301 = vmatprep.subr.bf16.mxu0 %v962
        %1302 = vmatpush1.bf16.msra.mxu0 %v961
        %1303 = vmatprep.subr.bf16.mxu0 %v970
        %1304 = vmatpush1.bf16.msra.mxu0 %v969
        %1305 = vmatprep.subr.bf16.mxu0 %v978
        %1306 = vmatpush1.bf16.msra.mxu0 %v977
        %1307 = vmatprep.subr.bf16.mxu0 %v986
        %1308 = vmatpush1.bf16.msra.mxu0 %v985
        %1309 = vmatprep.subr.bf16.mxu0 %v994
        %1310 = vmatpush1.bf16.msra.mxu0 %v993
        %1311 = vmatprep.subr.bf16.mxu0 %v1002
        %1312 = vmatpush1.bf16.msra.mxu0 %v1001
        %1313 = vmatprep.subr.bf16.mxu0 %v1010
        %1314 = vmatpush1.bf16.msra.mxu0 %v1009
        %1315 = vmatprep.subr.bf16.mxu0 %v1018
        %1316 = vmatpush1.bf16.msra.mxu0 %v1017
        %1317 = vmatprep.subr.bf16.mxu0 %v1026
        %1318 = vmatpush1.bf16.msra.mxu0 %v1025
        %1319 = vmatprep.subr.bf16.mxu0 %v1034
        %1320 = vmatpush1.bf16.msra.mxu0 %v1033
        %1321 = vmatprep.subr.bf16.mxu0 %v1042
        %1322 = vmatpush1.bf16.msra.mxu0 %v1041
        %1323 = vmatprep.subr.bf16.mxu0 %v1050
        %1324 = vmatpush1.bf16.msra.mxu0 %v1049
        %1325 = vmatprep.subr.bf16.mxu0 %v1189
        %1326 = vmatpush1.bf16.msra.mxu0 %v1186
        %1327 = vmatprep.subr.bf16.mxu0 0
        %1328 = vmatpush1.bf16.msra.mxu0 0
        %1329 = vmatprep.subr.bf16.mxu0 0
        %1330 = vmatpush1.bf16.msra.mxu0 0
        %1331 = vmatprep.mubr.bf16.mxu0 %v1167
        %1332 = vmatmul.mubr.bf16.gmra.mrb[0].mxu0 %v619
        %v1333 = vpop.f32.mrb[0].mxu0
        %v1334 = vadd.f32 %v598, %v1333
        %v1335 = vpop.f32.mrb[0].mxu0
        %v1336 = vadd.f32 %v598, %v1335
        %v1337 = vpop.f32.mrb[0].mxu0
        %v1338 = vadd.f32 %v603, %v1337
        %v1339 = vpop.f32.mrb[0].mxu0
        %v1340 = vadd.f32 %v603, %v1339
        %1341 = vmatprep.mubr.bf16.mxu0 %v1170
        %1342 = vmatmul.mubr.bf16.gmra.mrb[0].mxu0 %v621
        %v1343 = vpop.f32.mrb[0].mxu0
        %v1344 = vadd.f32 %v608, %v1343
        %v1345 = vpop.f32.mrb[0].mxu0
        %v1346 = vadd.f32 %v608, %v1345
        %v1347 = vpop.f32.mrb[0].mxu0
        %v1348 = vpop.f32.mrb[0].mxu0
        %1349 = vdwg.mxu0
        %1350 = vmatprep.subr.bf16.mxu0 %v956
        %1351 = vmatpush1.bf16.msra.mxu0 %v955
        %1352 = vmatprep.subr.bf16.mxu0 %v964
        %1353 = vmatpush1.bf16.msra.mxu0 %v963
        %1354 = vmatprep.subr.bf16.mxu0 %v972
        %1355 = vmatpush1.bf16.msra.mxu0 %v971
        %1356 = vmatprep.subr.bf16.mxu0 %v980
        %1357 = vmatpush1.bf16.msra.mxu0 %v979
        %1358 = vmatprep.subr.bf16.mxu0 %v988
        %1359 = vmatpush1.bf16.msra.mxu0 %v987
        %1360 = vmatprep.subr.bf16.mxu0 %v996
        %1361 = vmatpush1.bf16.msra.mxu0 %v995
        %1362 = vmatprep.subr.bf16.mxu0 %v1004
        %1363 = vmatpush1.bf16.msra.mxu0 %v1003
        %1364 = vmatprep.subr.bf16.mxu0 %v1012
        %1365 = vmatpush1.bf16.msra.mxu0 %v1011
        %1366 = vmatprep.subr.bf16.mxu0 %v1020
        %1367 = vmatpush1.bf16.msra.mxu0 %v1019
        %1368 = vmatprep.subr.bf16.mxu0 %v1028
        %1369 = vmatpush1.bf16.msra.mxu0 %v1027
        %1370 = vmatprep.subr.bf16.mxu0 %v1036
        %1371 = vmatpush1.bf16.msra.mxu0 %v1035
        %1372 = vmatprep.subr.bf16.mxu0 %v1044
        %1373 = vmatpush1.bf16.msra.mxu0 %v1043
        %1374 = vmatprep.subr.bf16.mxu0 %v1052
        %1375 = vmatpush1.bf16.msra.mxu0 %v1051
        %1376 = vmatprep.subr.bf16.mxu0 %v1195
        %1377 = vmatpush1.bf16.msra.mxu0 %v1192
        %1378 = vmatprep.subr.bf16.mxu0 0
        %1379 = vmatpush1.bf16.msra.mxu0 0
        %1380 = vmatprep.subr.bf16.mxu0 0
        %1381 = vmatpush1.bf16.msra.mxu0 0
        %1382 = vmatprep.mubr.bf16.mxu0 %v1167
        %1383 = vmatmul.mubr.bf16.gmra.mrb[0].mxu0 %v619
        %v1384 = vpop.f32.mrb[0].mxu0
        %v1385 = vadd.f32 %v598, %v1384
        %v1386 = vpop.f32.mrb[0].mxu0
        %v1387 = vadd.f32 %v598, %v1386
        %v1388 = vpop.f32.mrb[0].mxu0
        %v1389 = vadd.f32 %v603, %v1388
        %v1390 = vpop.f32.mrb[0].mxu0
        %v1391 = vadd.f32 %v603, %v1390
        %1392 = vmatprep.mubr.bf16.mxu0 %v1170
        %1393 = vmatmul.mubr.bf16.gmra.mrb[0].mxu0 %v621
        %v1394 = vpop.f32.mrb[0].mxu0
        %v1395 = vadd.f32 %v608, %v1394
        %v1396 = vpop.f32.mrb[0].mxu0
        %v1397 = vadd.f32 %v608, %v1396
        %v1398 = vpop.f32.mrb[0].mxu0
        %v1399 = vpop.f32.mrb[0].mxu0
        %1400 = vdwg.mxu0
        %1401 = vst [vmem:[%s453] sm:$0xff] %v1232
        %1402 = vst [vmem:[%s453 + $0x8] sm:$0xff] %v1234
        %1403 = vst [vmem:[%s453 + $0x10] sm:$0xff] %v1283
        %1404 = vst [vmem:[%s453 + $0x18] sm:$0xff] %v1285
        %1405 = vst [vmem:[%s453 + $0x20] sm:$0xff] %v1334
        %1406 = vst [vmem:[%s453 + $0x28] sm:$0xff] %v1336
        %1407 = vst [vmem:[%s453 + $0x30] sm:$0xff] %v1385
        %1408 = vst [vmem:[%s453 + $0x38] sm:$0xff] %v1387
        %1409 = vst [vmem:[%s453 + $0x40] sm:$0xff] %v1236
        %1410 = vst [vmem:[%s453 + $0x48] sm:$0xff] %v1238
        %1411 = vst [vmem:[%s453 + $0x50] sm:$0xff] %v1287
        %1412 = vst [vmem:[%s453 + $0x58] sm:$0xff] %v1289
        %1413 = vst [vmem:[%s453 + $0x60] sm:$0xff] %v1338
        %1414 = vst [vmem:[%s453 + $0x68] sm:$0xff] %v1340
        %1415 = vst [vmem:[%s453 + $0x70] sm:$0xff] %v1389
        %1416 = vst [vmem:[%s453 + $0x78] sm:$0xff] %v1391
        %1417 = vst [vmem:[%s453 + $0x80] sm:$0xff] %v1242
        %1418 = vst [vmem:[%s453 + $0x88] sm:$0xff] %v1244
        %1419 = vst [vmem:[%s453 + $0x90] sm:$0xff] %v1293
        %1420 = vst [vmem:[%s453 + $0x98] sm:$0xff] %v1295
        %1421 = vst [vmem:[%s453 + $0xa0] sm:$0xff] %v1344
        %1422 = vst [vmem:[%s453 + $0xa8] sm:$0xff] %v1346
        %1423 = vst [vmem:[%s453 + $0xb0] sm:$0xff] %v1395
        %1424 = vst [vmem:[%s453 + $0xb8] sm:$0xff] %v1397
        %v1425 = vadd.f32 %v1232, %v1234
        %v1426 = vadd.f32 %v1425, %v1283
        %v1427 = vadd.f32 %v1426, %v1285
        %v1428 = vadd.f32 %v1427, %v1334
        %v1429 = vadd.f32 %v1428, %v1336
        %v1430 = vadd.f32 %v1429, %v1385
        %v1431 = vadd.f32 %v1430, %v1387
        %1432 = vadd.xlane.f32.xlu0 %v1431
        %v1433 = vpop.xlane.xlu0 %1432
        %v1434 = vadd.f32 %v1236, %v1238
        %v1435 = vadd.f32 %v1434, %v1287
        %v1436 = vadd.f32 %v1435, %v1289
        %v1437 = vadd.f32 %v1436, %v1338
        %v1438 = vadd.f32 %v1437, %v1340
        %v1439 = vadd.f32 %v1438, %v1389
        %v1440 = vadd.f32 %v1439, %v1391
        %1441 = vadd.xlane.f32.xlu0 %v1440
        %v1442 = vpop.xlane.xlu0 %1441
        %v1443 = vadd.f32 %v1242, %v1244
        %v1444 = vadd.f32 %v1443, %v1293
        %v1445 = vadd.f32 %v1444, %v1295
        %v1446 = vadd.f32 %v1445, %v1344
        %v1447 = vadd.f32 %v1446, %v1346
        %v1448 = vadd.f32 %v1447, %v1395
        %v1449 = vadd.f32 %v1448, %v1397
        %1450 = vadd.xlane.f32.xlu0 %v1449
        %v1451 = vpop.xlane.xlu0 %1450
        %vm1452 = vcmask 7168
        %1453 = vst.msk [vmem:[%s474] sm:$0xff] %vm1452, %v1433
        %1454 = vst.msk [vmem:[%s474 + $0x8] sm:$0xff] %vm1452, %v1442
        %1455 = vst.msk [vmem:[%s474 + $0x10] sm:$0xff] %vm1452, %v1451
        %v1456 = vmul.f32 %v1232, %v1232
        %v1457 = vmul.f32 %v1234, %v1234
        %v1458 = vmul.f32 %v1283, %v1283
        %v1459 = vmul.f32 %v1285, %v1285
        %v1460 = vmul.f32 %v1334, %v1334
        %v1461 = vmul.f32 %v1336, %v1336
        %v1462 = vmul.f32 %v1385, %v1385
        %v1463 = vmul.f32 %v1387, %v1387
        %v1464 = vmul.f32 %v1236, %v1236
        %v1465 = vmul.f32 %v1238, %v1238
        %v1466 = vmul.f32 %v1287, %v1287
        %v1467 = vmul.f32 %v1289, %v1289
        %v1468 = vmul.f32 %v1338, %v1338
        %v1469 = vmul.f32 %v1340, %v1340
        %v1470 = vmul.f32 %v1389, %v1389
        %v1471 = vmul.f32 %v1391, %v1391
        %v1472 = vmul.f32 %v1242, %v1242
        %v1473 = vmul.f32 %v1244, %v1244
        %v1474 = vmul.f32 %v1293, %v1293
        %v1475 = vmul.f32 %v1295, %v1295
        %v1476 = vmul.f32 %v1344, %v1344
        %v1477 = vmul.f32 %v1346, %v1346
        %v1478 = vmul.f32 %v1395, %v1395
        %v1479 = vmul.f32 %v1397, %v1397
        %v1480 = vadd.f32 %v1456, %v1457
        %v1481 = vadd.f32 %v1480, %v1458
        %v1482 = vadd.f32 %v1481, %v1459
        %v1483 = vadd.f32 %v1482, %v1460
        %v1484 = vadd.f32 %v1483, %v1461
        %v1485 = vadd.f32 %v1484, %v1462
        %v1486 = vadd.f32 %v1485, %v1463
        %1487 = vadd.xlane.f32.xlu0 %v1486
        %v1488 = vpop.xlane.xlu0 %1487
        %v1489 = vadd.f32 %v1464, %v1465
        %v1490 = vadd.f32 %v1489, %v1466
        %v1491 = vadd.f32 %v1490, %v1467
        %v1492 = vadd.f32 %v1491, %v1468
        %v1493 = vadd.f32 %v1492, %v1469
        %v1494 = vadd.f32 %v1493, %v1470
        %v1495 = vadd.f32 %v1494, %v1471
        %1496 = vadd.xlane.f32.xlu0 %v1495
        %v1497 = vpop.xlane.xlu0 %1496
        %v1498 = vadd.f32 %v1472, %v1473
        %v1499 = vadd.f32 %v1498, %v1474
        %v1500 = vadd.f32 %v1499, %v1475
        %v1501 = vadd.f32 %v1500, %v1476
        %v1502 = vadd.f32 %v1501, %v1477
        %v1503 = vadd.f32 %v1502, %v1478
        %v1504 = vadd.f32 %v1503, %v1479
        %1505 = vadd.xlane.f32.xlu0 %v1504
        %v1506 = vpop.xlane.xlu0 %1505
        %1507 = vst.msk [vmem:[%s479] sm:$0xff] %vm1452, %v1488
        %1508 = vst.msk [vmem:[%s479 + $0x8] sm:$0xff] %vm1452, %v1497
        %1509 = vst.msk [vmem:[%s479 + $0x10] sm:$0xff] %vm1452, %v1506
        %s1510 = sand.u32 %s93, 1
        %s1511 = sand.u32 %s93, 1
        %s1512 = smul.addr %s1511, 192
        %s1513 = scalar_lea.vmem [#allocation3], %s1512
        %p1514 = scmp.lt.s32.totalorder %s17, 1
        %s1515 = scalar_select %p1514, %s17, 1
        %s1516 = smul.addr %s1515, 3
        %s1517 = smul.addr %s1516, 8
        %s1518 = scalar_lea.vmem %s4, %s1517
        %p1519 = scmp.lt.s32.totalorder %s17, 1
        %s1520 = scalar_select %p1519, %s17, 1
        %s1521 = smul.addr %s1520, 3
        %s1522 = smul.addr %s1521, 8
        %s1523 = scalar_lea.vmem %s5, %s1522
        // Predicated region
        $region56: #{sfc_back_forward.6} parent=50 // pred_check
          %p1524 = pneg %p103
        $region57: #{sfc_back_forward.6} parent=50 // pred_check_branch
          %1526 = sbr.rel (%p1524) target = $region59
        $region58: #{sfc_back_forward.6} parent=50 // pred_region
          %s1527 = smul.u32 8, %s17
          %s1528 = smul.addr %s1527, 8
          %s1529 = scalar_lea.vmem %s3, %s1528
          // Predicated region
          $region60: #{sfc_back_forward.6} parent=58 // pred_check
            _
          $region61: #{sfc_back_forward.6} parent=58 // pred_check_branch
            %1531 = sbr.rel (0) target = $region63
          $region62: #{sfc_back_forward.6} parent=58 // pred_region
            // Predicated region
            $region64: #{sfc_back_forward.6} parent=62 // pred_check
              _
            $region65: #{sfc_back_forward.6} parent=62 // pred_check_branch
              %1533 = sbr.rel (0) target = $region67
            $region66: #{sfc_back_forward.6} parent=62 // pred_region
              loop: start=0, step=1, limit=1
              $region68: #{sfc_back_forward.6} parent=66 // loop_pre_header
                _
              $region69: #{sfc_back_forward.6} parent=66 // loop_header
                %s1535 = sphi 0, %s1539
                %p1536 = scmp.ge.s32.totalorder %s1535, 1
                %s1540 = sphi %s1513, %s1513
                %s1541 = sphi %s1529, %s1529
              $region70: #{sfc_back_forward.6} parent=66 // loop_header_branch
                %1538 = sbr.rel (%p1536) target = $region74
              $region71: #{sfc_back_forward.6} parent=66 // loop_body
                %v1542 = vld [vmem:[%s1540] sm:$0xff]
                %1543 = vst [vmem:[%s1541] sm:$0xff] %v1542
                %v1544 = vld [vmem:[%s1540 + $0x8] sm:$0xff]
                %1545 = vst [vmem:[%s1541 + $0x8] sm:$0xff] %v1544
                %v1546 = vld [vmem:[%s1540 + $0x10] sm:$0xff]
                %1547 = vst [vmem:[%s1541 + $0x10] sm:$0xff] %v1546
                %v1548 = vld [vmem:[%s1540 + $0x18] sm:$0xff]
                %1549 = vst [vmem:[%s1541 + $0x18] sm:$0xff] %v1548
                %v1550 = vld [vmem:[%s1540 + $0x20] sm:$0xff]
                %1551 = vst [vmem:[%s1541 + $0x20] sm:$0xff] %v1550
                %v1552 = vld [vmem:[%s1540 + $0x28] sm:$0xff]
                %1553 = vst [vmem:[%s1541 + $0x28] sm:$0xff] %v1552
                %v1554 = vld [vmem:[%s1540 + $0x30] sm:$0xff]
                %1555 = vst [vmem:[%s1541 + $0x30] sm:$0xff] %v1554
                %v1556 = vld [vmem:[%s1540 + $0x38] sm:$0xff]
                %1557 = vst [vmem:[%s1541 + $0x38] sm:$0xff] %v1556
                %v1558 = vld [vmem:[%s1540 + $0x40] sm:$0xff]
                %1559 = vst [vmem:[%s1541 + $0x80] sm:$0xff] %v1558
                %v1560 = vld [vmem:[%s1540 + $0x48] sm:$0xff]
                %1561 = vst [vmem:[%s1541 + $0x88] sm:$0xff] %v1560
                %v1562 = vld [vmem:[%s1540 + $0x50] sm:$0xff]
                %1563 = vst [vmem:[%s1541 + $0x90] sm:$0xff] %v1562
                %v1564 = vld [vmem:[%s1540 + $0x58] sm:$0xff]
                %1565 = vst [vmem:[%s1541 + $0x98] sm:$0xff] %v1564
                %v1566 = vld [vmem:[%s1540 + $0x60] sm:$0xff]
                %1567 = vst [vmem:[%s1541 + $0xa0] sm:$0xff] %v1566
                %v1568 = vld [vmem:[%s1540 + $0x68] sm:$0xff]
                %1569 = vst [vmem:[%s1541 + $0xa8] sm:$0xff] %v1568
                %v1570 = vld [vmem:[%s1540 + $0x70] sm:$0xff]
                %1571 = vst [vmem:[%s1541 + $0xb0] sm:$0xff] %v1570
                %v1572 = vld [vmem:[%s1540 + $0x78] sm:$0xff]
                %1573 = vst [vmem:[%s1541 + $0xb8] sm:$0xff] %v1572
                %v1574 = vld [vmem:[%s1540 + $0x80] sm:$0xff]
                %1575 = vst [vmem:[%s1541 + $0x100] sm:$0xff] %v1574
                %v1576 = vld [vmem:[%s1540 + $0x88] sm:$0xff]
                %1577 = vst [vmem:[%s1541 + $0x108] sm:$0xff] %v1576
                %v1578 = vld [vmem:[%s1540 + $0x90] sm:$0xff]
                %1579 = vst [vmem:[%s1541 + $0x110] sm:$0xff] %v1578
                %v1580 = vld [vmem:[%s1540 + $0x98] sm:$0xff]
                %1581 = vst [vmem:[%s1541 + $0x118] sm:$0xff] %v1580
                %v1582 = vld [vmem:[%s1540 + $0xa0] sm:$0xff]
                %1583 = vst [vmem:[%s1541 + $0x120] sm:$0xff] %v1582
                %v1584 = vld [vmem:[%s1540 + $0xa8] sm:$0xff]
                %1585 = vst [vmem:[%s1541 + $0x128] sm:$0xff] %v1584
                %v1586 = vld [vmem:[%s1540 + $0xb0] sm:$0xff]
                %1587 = vst [vmem:[%s1541 + $0x130] sm:$0xff] %v1586
                %v1588 = vld [vmem:[%s1540 + $0xb8] sm:$0xff]
                %1589 = vst [vmem:[%s1541 + $0x138] sm:$0xff] %v1588
              $region72: #{sfc_back_forward.6} parent=66 // loop_footer
                %s1539 = sadd.s32 1, %s1535
              $region73: #{sfc_back_forward.6} parent=66 // loop_footer_branch
                %1534 = sbr.rel target = $region69
              $region74: #{sfc_back_forward.6} parent=66 // loop_exit
                _
            $region67: #{sfc_back_forward.6} parent=62 // pred_fallthru
              _
            // Predicated region
            $region75: #{sfc_back_forward.6} parent=62 // pred_check
              _
            $region76: #{sfc_back_forward.6} parent=62 // pred_check_branch
              %1591 = sbr.rel target = $region78
            $region77: #{sfc_back_forward.6} parent=62 // pred_region
              _
            $region78: #{sfc_back_forward.6} parent=62 // pred_fallthru
              _
          $region63: #{sfc_back_forward.6} parent=58 // pred_fallthru
            _
          %1592 = vnop
        $region59: #{sfc_back_forward.6} parent=50 // pred_fallthru
          _
        // Predicated region
        $region79: #{sfc_back_forward.6} parent=50 // pred_check
          %p1593 = pneg %p129
        $region80: #{sfc_back_forward.6} parent=50 // pred_check_branch
          %1595 = sbr.rel (%p1593) target = $region82
        $region81: #{sfc_back_forward.6} parent=50 // pred_region
          _
        $region82: #{sfc_back_forward.6} parent=50 // pred_fallthru
          _
        // Predicated region
        $region83: #{sfc_back_forward.6} parent=50 // pred_check
          %p1596 = pneg %p155
        $region84: #{sfc_back_forward.6} parent=50 // pred_check_branch
          %1598 = sbr.rel (%p1596) target = $region86
        $region85: #{sfc_back_forward.6} parent=50 // pred_region
          _
        $region86: #{sfc_back_forward.6} parent=50 // pred_fallthru
          _
      $region51: #{sfc_back_forward.6} parent=5 // pred_fallthru
        _
      %p1599 = scmp.le.s32.totalorder 2, %s12
      // Predicated region
      $region87: #{sfc_back_forward.6} parent=5 // pred_check
        %p1600 = pneg %p1599
      $region88: #{sfc_back_forward.6} parent=5 // pred_check_branch
        %1602 = sbr.rel (%p1600) target = $region90
      $region89: #{sfc_back_forward.6} parent=5 // pred_region
        %s1603 = ssub.s32 %s12, 2
        // Predicated region
        $region91: #{sfc_back_forward.6} parent=89 // pred_check
          %p1604 = pneg %p109
        $region92: #{sfc_back_forward.6} parent=89 // pred_check_branch
          %1606 = sbr.rel (%p1604) target = $region94
        $region93: #{sfc_back_forward.6} parent=89 // pred_region
          %s1607 = sand.u32 %s94, 1
          %s1608 = sand.u32 %s94, 1
          %s1609 = smul.addr %s1608, 192
          %s1610 = scalar_lea.vmem [#allocation3], %s1609
        $region94: #{sfc_back_forward.6} parent=89 // pred_fallthru
          _
        // Predicated region
        $region95: #{sfc_back_forward.6} parent=89 // pred_check
          %p1611 = pneg %p135
        $region96: #{sfc_back_forward.6} parent=89 // pred_check_branch
          %1613 = sbr.rel (%p1611) target = $region98
        $region97: #{sfc_back_forward.6} parent=89 // pred_region
          %p1614 = scmp.lt.s32.totalorder %s18, 1
          %s1615 = scalar_select %p1614, %s18, 1
          %s1616 = smul.addr %s1615, 3
          %s1617 = smul.addr %s1616, 8
          %s1618 = scalar_lea.vmem %s4, %s1617
        $region98: #{sfc_back_forward.6} parent=89 // pred_fallthru
          _
        // Predicated region
        $region99: #{sfc_back_forward.6} parent=89 // pred_check
          %p1619 = pneg %p161
        $region100: #{sfc_back_forward.6} parent=89 // pred_check_branch
          %1621 = sbr.rel (%p1619) target = $region102
        $region101: #{sfc_back_forward.6} parent=89 // pred_region
          %p1622 = scmp.lt.s32.totalorder %s18, 1
          %s1623 = scalar_select %p1622, %s18, 1
          %s1624 = smul.addr %s1623, 3
          %s1625 = smul.addr %s1624, 8
          %s1626 = scalar_lea.vmem %s5, %s1625
        $region102: #{sfc_back_forward.6} parent=89 // pred_fallthru
          _
      $region90: #{sfc_back_forward.6} parent=5 // pred_fallthru
        _
    $region6: #{sfc_back_forward.6} parent=1 // loop_footer
      %s16 = sadd.s32 1, %s12
    $region7: #{sfc_back_forward.6} parent=1 // loop_footer_branch
      %11 = sbr.rel target = $region3
    $region8: #{sfc_back_forward.6} parent=1 // loop_exit
      _

// kernel: sfc_back_forward.7
$region0: #{sfc_back_forward.7}
  #allocation0 [shape = 'u32[]', space=smem, size = 0x4, offset = 0x4, fixed_abs, tag = 'smem constant byte address 0x4 - core index']
  #allocation1 [shape = 'u32[144,128]{1,0:T(1,128)}', space=vmem, size = 0x12000, scoped, tag = 'internal scratch']
  %s0 = inlined_call_operand.vmem [shape: f32[24,2048], index: 0, kind: input, shape index: {}]
  %s1 = inlined_call_operand.vmem [shape: f32[24,1], index: 1, kind: input, shape index: {}]
  %s2 = inlined_call_operand.vmem [shape: f32[24,1], index: 2, kind: input, shape index: {}]
  %s3 = inlined_call_operand.vmem [shape: f32[24,2048], index: 3, kind: output, shape index: {}]
  %s4 = sld [smem:[#allocation0]]
  $region87: #{sfc_back_forward.7} parent=0
    _
  %s6 = ssub.s32 1, %s4
  %s7 = scalar_select 0, %s6, %s4
  $region1: #{sfc_back_forward.7} parent=0
    #allocation2 [shape = 'u8[196608]{0}', space=vmem, size = 0x30000, scoped, tag = 'input window, operand 0']
    #allocation3 [shape = 'u8[196608]{0}', space=vmem, size = 0x30000, scoped, tag = 'output window, operand 0']
    loop: start=0, step=1, limit=4
    $region2: #{sfc_back_forward.7} parent=1 // loop_pre_header
      _
    $region3: #{sfc_back_forward.7} parent=1 // loop_header
      %s9 = sphi 0, %s13
      %p10 = scmp.ge.s32.totalorder %s9, 4
      %s19 = sphi 0, %s21
      %s22 = sphi 0, %s19
      %s23 = sphi 0, %s22
      %s39 = sphi 0, %s23
      %s43 = sphi 0, %s43
      %s45 = sphi 0, %s43
      %s46 = sphi 0, %s45
      %s60 = sphi 0, %s46
      %s64 = sphi 0, %s64
      %s66 = sphi 0, %s64
      %s67 = sphi 0, %s66
      %s81 = sphi 0, %s67
      %s87 = sphi 0, %s89
      %s90 = sphi 0, %s87
      %s91 = sphi 0, %s90
      %s107 = sphi 0, %s91
    $region4: #{sfc_back_forward.7} parent=1 // loop_header_branch
      %12 = sbr.rel (%p10) target = $region8
    $region5: #{sfc_back_forward.7} parent=1 // loop_body
      %s14 = ssub.s32 %s9, 1
      %s15 = ssub.s32 %s9, 2
      %s16 = sadd.s32 %s9, 1
      %s17 = ssub.s32 %s9, %s16
      %p18 = scmp.eq.s32.totalorder %s17, 0
      %s20 = sadd.s32 %s19, 1
      %s21 = scalar_select %p18, %s19, %s20
      %p24 = pneg %p18
      %p25 = scmp.eq.s32.totalorder %s9, 1
      %p26 = por %p24, %p25
      %p27 = scmp.ne.s32.totalorder %s19, %s22
      %p28 = scmp.eq.s32.totalorder %s9, 0
      %p29 = por %p27, %p28
      %p30 = scmp.ne.s32.totalorder %s19, %s22
      %p31 = scmp.eq.s32.totalorder %s14, 1
      %p32 = por %p30, %p31
      %p33 = scmp.ne.s32.totalorder %s22, %s23
      %p34 = scmp.eq.s32.totalorder %s14, 0
      %p35 = por %p33, %p34
      %p36 = scmp.ne.s32.totalorder %s22, %s23
      %p37 = scmp.eq.s32.totalorder %s15, 1
      %p38 = por %p36, %p37
      %p40 = scmp.ne.s32.totalorder %s23, %s39
      %p41 = scmp.eq.s32.totalorder %s15, 0
      %p42 = por %p40, %p41
      %s44 = sadd.s32 %s43, 1
      %p47 = scmp.eq.s32.totalorder %s9, 1
      %p48 = scmp.ne.s32.totalorder %s43, %s45
      %p49 = scmp.eq.s32.totalorder %s9, 0
      %p50 = por %p48, %p49
      %p51 = scmp.ne.s32.totalorder %s43, %s45
      %p52 = scmp.eq.s32.totalorder %s14, 1
      %p53 = por %p51, %p52
      %p54 = scmp.ne.s32.totalorder %s45, %s46
      %p55 = scmp.eq.s32.totalorder %s14, 0
      %p56 = por %p54, %p55
      %p57 = scmp.ne.s32.totalorder %s45, %s46
      %p58 = scmp.eq.s32.totalorder %s15, 1
      %p59 = por %p57, %p58
      %p61 = scmp.ne.s32.totalorder %s46, %s60
      %p62 = scmp.eq.s32.totalorder %s15, 0
      %p63 = por %p61, %p62
      %s65 = sadd.s32 %s64, 1
      %p68 = scmp.eq.s32.totalorder %s9, 1
      %p69 = scmp.ne.s32.totalorder %s64, %s66
      %p70 = scmp.eq.s32.totalorder %s9, 0
      %p71 = por %p69, %p70
      %p72 = scmp.ne.s32.totalorder %s64, %s66
      %p73 = scmp.eq.s32.totalorder %s14, 1
      %p74 = por %p72, %p73
      %p75 = scmp.ne.s32.totalorder %s66, %s67
      %p76 = scmp.eq.s32.totalorder %s14, 0
      %p77 = por %p75, %p76
      %p78 = scmp.ne.s32.totalorder %s66, %s67
      %p79 = scmp.eq.s32.totalorder %s15, 1
      %p80 = por %p78, %p79
      %p82 = scmp.ne.s32.totalorder %s67, %s81
      %p83 = scmp.eq.s32.totalorder %s15, 0
      %p84 = por %p82, %p83
      %s85 = ssub.s32 %s9, %s16
      %p86 = scmp.eq.s32.totalorder %s85, 0
      %s88 = sadd.s32 %s87, 1
      %s89 = scalar_select %p86, %s87, %s88
      %p92 = pneg %p86
      %p93 = scmp.eq.s32.totalorder %s9, 1
      %p94 = por %p92, %p93
      %p95 = scmp.ne.s32.totalorder %s87, %s90
      %p96 = scmp.eq.s32.totalorder %s9, 0
      %p97 = por %p95, %p96
      %p98 = scmp.ne.s32.totalorder %s87, %s90
      %p99 = scmp.eq.s32.totalorder %s14, 1
      %p100 = por %p98, %p99
      %p101 = scmp.ne.s32.totalorder %s90, %s91
      %p102 = scmp.eq.s32.totalorder %s14, 0
      %p103 = por %p101, %p102
      %p104 = scmp.ne.s32.totalorder %s90, %s91
      %p105 = scmp.eq.s32.totalorder %s15, 1
      %p106 = por %p104, %p105
      %p108 = scmp.ne.s32.totalorder %s91, %s107
      %p109 = scmp.eq.s32.totalorder %s15, 0
      %p110 = por %p108, %p109
      %p111 = scmp.le.s32.totalorder 1, %s9
      %p112 = scmp.lt.s32.totalorder %s9, 3
      %p113 = pnand %p111, %p112
      %p114 = pneg %p113
      // Predicated region
      $region9: #{sfc_back_forward.7} parent=5 // pred_check
        _
      $region10: #{sfc_back_forward.7} parent=5 // pred_check_branch
        %116 = sbr.rel (%p113) target = $region12
      $region11: #{sfc_back_forward.7} parent=5 // pred_region
        %s117 = ssub.s32 %s9, 1
        // Predicated region
        $region13: #{sfc_back_forward.7} parent=11 // pred_check
          %p118 = pneg %p56
        $region14: #{sfc_back_forward.7} parent=11 // pred_check_branch
          %120 = sbr.rel (%p118) target = $region16
        $region15: #{sfc_back_forward.7} parent=11 // pred_region
          _
        $region16: #{sfc_back_forward.7} parent=11 // pred_fallthru
          _
        // Predicated region
        $region17: #{sfc_back_forward.7} parent=11 // pred_check
          %p121 = pneg %p77
        $region18: #{sfc_back_forward.7} parent=11 // pred_check_branch
          %123 = sbr.rel (%p121) target = $region20
        $region19: #{sfc_back_forward.7} parent=11 // pred_region
          _
        $region20: #{sfc_back_forward.7} parent=11 // pred_fallthru
          _
      $region12: #{sfc_back_forward.7} parent=5 // pred_fallthru
        _
      %p124 = scmp.lt.s32.totalorder %s9, 2
      // Predicated region
      $region21: #{sfc_back_forward.7} parent=5 // pred_check
        %p125 = pneg %p124
      $region22: #{sfc_back_forward.7} parent=5 // pred_check_branch
        %127 = sbr.rel (%p125) target = $region24
      $region23: #{sfc_back_forward.7} parent=5 // pred_region
        // Predicated region
        $region25: #{sfc_back_forward.7} parent=23 // pred_check
          %p128 = pneg %p29
        $region26: #{sfc_back_forward.7} parent=23 // pred_check_branch
          %130 = sbr.rel (%p128) target = $region28
        $region27: #{sfc_back_forward.7} parent=23 // pred_region
          %s131 = sand.u32 %s19, 1
          %s132 = sand.u32 %s19, 1
          %s133 = smul.addr %s132, 192
          %s134 = scalar_lea.vmem [#allocation2], %s133
          %s135 = smul.u32 8, %s9
          %s136 = smul.addr %s135, 8
          %s137 = scalar_lea.vmem %s0, %s136
          // Predicated region
          $region29: #{sfc_back_forward.7} parent=27 // pred_check
            _
          $region30: #{sfc_back_forward.7} parent=27 // pred_check_branch
            %139 = sbr.rel (0) target = $region32
          $region31: #{sfc_back_forward.7} parent=27 // pred_region
            // Predicated region
            $region33: #{sfc_back_forward.7} parent=31 // pred_check
              _
            $region34: #{sfc_back_forward.7} parent=31 // pred_check_branch
              %141 = sbr.rel (0) target = $region36
            $region35: #{sfc_back_forward.7} parent=31 // pred_region
              loop: start=0, step=1, limit=1
              $region37: #{sfc_back_forward.7} parent=35 // loop_pre_header
                _
              $region38: #{sfc_back_forward.7} parent=35 // loop_header
                %s143 = sphi 0, %s147
                %p144 = scmp.ge.s32.totalorder %s143, 1
                %s148 = sphi %s137, %s137
                %s149 = sphi %s134, %s134
              $region39: #{sfc_back_forward.7} parent=35 // loop_header_branch
                %146 = sbr.rel (%p144) target = $region43
              $region40: #{sfc_back_forward.7} parent=35 // loop_body
                %v150 = vld [vmem:[%s148] sm:$0xff]
                %151 = vst [vmem:[%s149] sm:$0xff] %v150
                %v152 = vld [vmem:[%s148 + $0x8] sm:$0xff]
                %153 = vst [vmem:[%s149 + $0x8] sm:$0xff] %v152
                %v154 = vld [vmem:[%s148 + $0x10] sm:$0xff]
                %155 = vst [vmem:[%s149 + $0x10] sm:$0xff] %v154
                %v156 = vld [vmem:[%s148 + $0x18] sm:$0xff]
                %157 = vst [vmem:[%s149 + $0x18] sm:$0xff] %v156
                %v158 = vld [vmem:[%s148 + $0x20] sm:$0xff]
                %159 = vst [vmem:[%s149 + $0x20] sm:$0xff] %v158
                %v160 = vld [vmem:[%s148 + $0x28] sm:$0xff]
                %161 = vst [vmem:[%s149 + $0x28] sm:$0xff] %v160
                %v162 = vld [vmem:[%s148 + $0x30] sm:$0xff]
                %163 = vst [vmem:[%s149 + $0x30] sm:$0xff] %v162
                %v164 = vld [vmem:[%s148 + $0x38] sm:$0xff]
                %165 = vst [vmem:[%s149 + $0x38] sm:$0xff] %v164
                %v166 = vld [vmem:[%s148 + $0x80] sm:$0xff]
                %167 = vst [vmem:[%s149 + $0x40] sm:$0xff] %v166
                %v168 = vld [vmem:[%s148 + $0x88] sm:$0xff]
                %169 = vst [vmem:[%s149 + $0x48] sm:$0xff] %v168
                %v170 = vld [vmem:[%s148 + $0x90] sm:$0xff]
                %171 = vst [vmem:[%s149 + $0x50] sm:$0xff] %v170
                %v172 = vld [vmem:[%s148 + $0x98] sm:$0xff]
                %173 = vst [vmem:[%s149 + $0x58] sm:$0xff] %v172
                %v174 = vld [vmem:[%s148 + $0xa0] sm:$0xff]
                %175 = vst [vmem:[%s149 + $0x60] sm:$0xff] %v174
                %v176 = vld [vmem:[%s148 + $0xa8] sm:$0xff]
                %177 = vst [vmem:[%s149 + $0x68] sm:$0xff] %v176
                %v178 = vld [vmem:[%s148 + $0xb0] sm:$0xff]
                %179 = vst [vmem:[%s149 + $0x70] sm:$0xff] %v178
                %v180 = vld [vmem:[%s148 + $0xb8] sm:$0xff]
                %181 = vst [vmem:[%s149 + $0x78] sm:$0xff] %v180
                %v182 = vld [vmem:[%s148 + $0x100] sm:$0xff]
                %183 = vst [vmem:[%s149 + $0x80] sm:$0xff] %v182
                %v184 = vld [vmem:[%s148 + $0x108] sm:$0xff]
                %185 = vst [vmem:[%s149 + $0x88] sm:$0xff] %v184
                %v186 = vld [vmem:[%s148 + $0x110] sm:$0xff]
                %187 = vst [vmem:[%s149 + $0x90] sm:$0xff] %v186
                %v188 = vld [vmem:[%s148 + $0x118] sm:$0xff]
                %189 = vst [vmem:[%s149 + $0x98] sm:$0xff] %v188
                %v190 = vld [vmem:[%s148 + $0x120] sm:$0xff]
                %191 = vst [vmem:[%s149 + $0xa0] sm:$0xff] %v190
                %v192 = vld [vmem:[%s148 + $0x128] sm:$0xff]
                %193 = vst [vmem:[%s149 + $0xa8] sm:$0xff] %v192
                %v194 = vld [vmem:[%s148 + $0x130] sm:$0xff]
                %195 = vst [vmem:[%s149 + $0xb0] sm:$0xff] %v194
                %v196 = vld [vmem:[%s148 + $0x138] sm:$0xff]
                %197 = vst [vmem:[%s149 + $0xb8] sm:$0xff] %v196
              $region41: #{sfc_back_forward.7} parent=35 // loop_footer
                %s147 = sadd.s32 1, %s143
              $region42: #{sfc_back_forward.7} parent=35 // loop_footer_branch
                %142 = sbr.rel target = $region38
              $region43: #{sfc_back_forward.7} parent=35 // loop_exit
                _
            $region36: #{sfc_back_forward.7} parent=31 // pred_fallthru
              _
            // Predicated region
            $region44: #{sfc_back_forward.7} parent=31 // pred_check
              _
            $region45: #{sfc_back_forward.7} parent=31 // pred_check_branch
              %199 = sbr.rel target = $region47
            $region46: #{sfc_back_forward.7} parent=31 // pred_region
              _
            $region47: #{sfc_back_forward.7} parent=31 // pred_fallthru
              _
          $region32: #{sfc_back_forward.7} parent=27 // pred_fallthru
            _
          %200 = vnop
        $region28: #{sfc_back_forward.7} parent=23 // pred_fallthru
          _
      $region24: #{sfc_back_forward.7} parent=5 // pred_fallthru
        _
      %p201 = scmp.le.s32.totalorder 1, %s9
      %p202 = scmp.lt.s32.totalorder %s9, 3
      %p203 = pnand %p201, %p202
      %p204 = pneg %p203
      // Predicated region
      $region48: #{sfc_back_forward.7} parent=5 // pred_check
        _
      $region49: #{sfc_back_forward.7} parent=5 // pred_check_branch
        %206 = sbr.rel (%p203) target = $region51
      $region50: #{sfc_back_forward.7} parent=5 // pred_region
        %s207 = ssub.s32 %s9, 1
        %s208 = sand.u32 %s22, 1
        %s209 = sand.u32 %s22, 1
        %s210 = smul.addr %s209, 192
        %s211 = scalar_lea.vmem [#allocation2], %s210
        // Predicated region
        $region52: #{sfc_back_forward.7} parent=50 // pred_check
          %p212 = pneg %p35
        $region53: #{sfc_back_forward.7} parent=50 // pred_check_branch
          %214 = sbr.rel (%p212) target = $region55
        $region54: #{sfc_back_forward.7} parent=50 // pred_region
          _
        $region55: #{sfc_back_forward.7} parent=50 // pred_fallthru
          _
        %s215 = sand.u32 %s22, 1
        %s216 = sand.u32 %s22, 1
        %s217 = smul.addr %s216, 192
        %s218 = scalar_lea.vmem [#allocation2], %s217
        %p219 = pneg %p35
        %p220 = pneg %p32
        %p221 = pneg %p56
        %p222 = pneg %p53
        %p223 = pneg %p77
        %p224 = pneg %p74
        %p225 = pneg %p103
        %p226 = pneg %p100
        %s227 = sand.u32 %s90, 1
        %s228 = sand.u32 %s90, 1
        %s229 = smul.addr %s228, 192
        %s230 = scalar_lea.vmem [#allocation3], %s229
        %s231 = smul.u32 8, %s14
        %s232 = smul.u32 8, %s14
        %v233 = vld [vmem:[%s211] sm:$0xff]
        %v234 = vld [vmem:[%s211 + $0x8] sm:$0xff]
        %v235 = vld [vmem:[%s211 + $0x10] sm:$0xff]
        %v236 = vld [vmem:[%s211 + $0x18] sm:$0xff]
        %v237 = vld [vmem:[%s211 + $0x20] sm:$0xff]
        %v238 = vld [vmem:[%s211 + $0x28] sm:$0xff]
        %v239 = vld [vmem:[%s211 + $0x30] sm:$0xff]
        %v240 = vld [vmem:[%s211 + $0x38] sm:$0xff]
        %v241 = vld [vmem:[%s211 + $0x40] sm:$0xff]
        %v242 = vld [vmem:[%s211 + $0x48] sm:$0xff]
        %v243 = vld [vmem:[%s211 + $0x50] sm:$0xff]
        %v244 = vld [vmem:[%s211 + $0x58] sm:$0xff]
        %v245 = vld [vmem:[%s211 + $0x60] sm:$0xff]
        %v246 = vld [vmem:[%s211 + $0x68] sm:$0xff]
        %v247 = vld [vmem:[%s211 + $0x70] sm:$0xff]
        %v248 = vld [vmem:[%s211 + $0x78] sm:$0xff]
        %v249 = vld [vmem:[%s211 + $0x80] sm:$0xff]
        %v250 = vld [vmem:[%s211 + $0x88] sm:$0xff]
        %v251 = vld [vmem:[%s211 + $0x90] sm:$0xff]
        %v252 = vld [vmem:[%s211 + $0x98] sm:$0xff]
        %v253 = vld [vmem:[%s211 + $0xa0] sm:$0xff]
        %v254 = vld [vmem:[%s211 + $0xa8] sm:$0xff]
        %v255 = vld [vmem:[%s211 + $0xb0] sm:$0xff]
        %v256 = vld [vmem:[%s211 + $0xb8] sm:$0xff]
        %v257 = vld [vmem:[%s1] sm:$0xff]
        %v258 = vld [vmem:[%s1 + $0x8] sm:$0xff]
        %v259 = vld [vmem:[%s1 + $0x10] sm:$0xff]
        %261 = vset.pattern.permute.xlu0 0
        %262 = vperm.xlu0 %261, %v257
        %v263 = vpop.permute.xlu0 %262
        %266 = vset.pattern.permute.xlu0 0
        %267 = vperm.xlu0 %266, %v258
        %v268 = vpop.permute.xlu0 %267
        %271 = vset.pattern.permute.xlu0 0
        %272 = vperm.xlu0 %271, %v259
        %v273 = vpop.permute.xlu0 %272
        %v275 = vmul.f32 %v233, %v263
        %v276 = vmul.f32 %v234, %v263
        %v277 = vmul.f32 %v235, %v263
        %v278 = vmul.f32 %v236, %v263
        %v279 = vmul.f32 %v237, %v263
        %v280 = vmul.f32 %v238, %v263
        %v281 = vmul.f32 %v239, %v263
        %v282 = vmul.f32 %v240, %v263
        %v283 = vmul.f32 %v241, %v268
        %v284 = vmul.f32 %v242, %v268
        %v285 = vmul.f32 %v243, %v268
        %v286 = vmul.f32 %v244, %v268
        %v287 = vmul.f32 %v245, %v268
        %v288 = vmul.f32 %v246, %v268
        %v289 = vmul.f32 %v247, %v268
        %v290 = vmul.f32 %v248, %v268
        %v291 = vmul.f32 %v249, %v273
        %v292 = vmul.f32 %v250, %v273
        %v293 = vmul.f32 %v251, %v273
        %v294 = vmul.f32 %v252, %v273
        %v295 = vmul.f32 %v253, %v273
        %v296 = vmul.f32 %v254, %v273
        %v297 = vmul.f32 %v255, %v273
        %v298 = vmul.f32 %v256, %v273
        %v299 = vld [vmem:[%s2] sm:$0xff]
        %v300 = vld [vmem:[%s2 + $0x8] sm:$0xff]
        %v301 = vld [vmem:[%s2 + $0x10] sm:$0xff]
        %303 = vset.pattern.permute.xlu0 0
        %304 = vperm.xlu0 %303, %v299
        %v305 = vpop.permute.xlu0 %304
        %308 = vset.pattern.permute.xlu0 0
        %309 = vperm.xlu0 %308, %v300
        %v310 = vpop.permute.xlu0 %309
        %313 = vset.pattern.permute.xlu0 0
        %314 = vperm.xlu0 %313, %v301
        %v315 = vpop.permute.xlu0 %314
        %v317 = vadd.f32 %v275, %v305
        %v318 = vadd.f32 %v276, %v305
        %v319 = vadd.f32 %v277, %v305
        %v320 = vadd.f32 %v278, %v305
        %v321 = vadd.f32 %v279, %v305
        %v322 = vadd.f32 %v280, %v305
        %v323 = vadd.f32 %v281, %v305
        %v324 = vadd.f32 %v282, %v305
        %v325 = vadd.f32 %v283, %v310
        %v326 = vadd.f32 %v284, %v310
        %v327 = vadd.f32 %v285, %v310
        %v328 = vadd.f32 %v286, %v310
        %v329 = vadd.f32 %v287, %v310
        %v330 = vadd.f32 %v288, %v310
        %v331 = vadd.f32 %v289, %v310
        %v332 = vadd.f32 %v290, %v310
        %v333 = vadd.f32 %v291, %v315
        %v334 = vadd.f32 %v292, %v315
        %v335 = vadd.f32 %v293, %v315
        %v336 = vadd.f32 %v294, %v315
        %v337 = vadd.f32 %v295, %v315
        %v338 = vadd.f32 %v296, %v315
        %v339 = vadd.f32 %v297, %v315
        %v340 = vadd.f32 %v298, %v315
        %v341 = vmax.f32 %v317, 0.0
        %v342 = vmax.f32 %v318, 0.0
        %v343 = vmax.f32 %v319, 0.0
        %v344 = vmax.f32 %v320, 0.0
        %v345 = vmax.f32 %v321, 0.0
        %v346 = vmax.f32 %v322, 0.0
        %v347 = vmax.f32 %v323, 0.0
        %v348 = vmax.f32 %v324, 0.0
        %v349 = vmax.f32 %v325, 0.0
        %v350 = vmax.f32 %v326, 0.0
        %v351 = vmax.f32 %v327, 0.0
        %v352 = vmax.f32 %v328, 0.0
        %v353 = vmax.f32 %v329, 0.0
        %v354 = vmax.f32 %v330, 0.0
        %v355 = vmax.f32 %v331, 0.0
        %v356 = vmax.f32 %v332, 0.0
        %v357 = vmax.f32 %v333, 0.0
        %v358 = vmax.f32 %v334, 0.0
        %v359 = vmax.f32 %v335, 0.0
        %v360 = vmax.f32 %v336, 0.0
        %v361 = vmax.f32 %v337, 0.0
        %v362 = vmax.f32 %v338, 0.0
        %v363 = vmax.f32 %v339, 0.0
        %v364 = vmax.f32 %v340, 0.0
        %365 = vst [vmem:[%s230] sm:$0xff] %v341
        %366 = vst [vmem:[%s230 + $0x8] sm:$0xff] %v342
        %367 = vst [vmem:[%s230 + $0x10] sm:$0xff] %v343
        %368 = vst [vmem:[%s230 + $0x18] sm:$0xff] %v344
        %369 = vst [vmem:[%s230 + $0x20] sm:$0xff] %v345
        %370 = vst [vmem:[%s230 + $0x28] sm:$0xff] %v346
        %371 = vst [vmem:[%s230 + $0x30] sm:$0xff] %v347
        %372 = vst [vmem:[%s230 + $0x38] sm:$0xff] %v348
        %373 = vst [vmem:[%s230 + $0x40] sm:$0xff] %v349
        %374 = vst [vmem:[%s230 + $0x48] sm:$0xff] %v350
        %375 = vst [vmem:[%s230 + $0x50] sm:$0xff] %v351
        %376 = vst [vmem:[%s230 + $0x58] sm:$0xff] %v352
        %377 = vst [vmem:[%s230 + $0x60] sm:$0xff] %v353
        %378 = vst [vmem:[%s230 + $0x68] sm:$0xff] %v354
        %379 = vst [vmem:[%s230 + $0x70] sm:$0xff] %v355
        %380 = vst [vmem:[%s230 + $0x78] sm:$0xff] %v356
        %381 = vst [vmem:[%s230 + $0x80] sm:$0xff] %v357
        %382 = vst [vmem:[%s230 + $0x88] sm:$0xff] %v358
        %383 = vst [vmem:[%s230 + $0x90] sm:$0xff] %v359
        %384 = vst [vmem:[%s230 + $0x98] sm:$0xff] %v360
        %385 = vst [vmem:[%s230 + $0xa0] sm:$0xff] %v361
        %386 = vst [vmem:[%s230 + $0xa8] sm:$0xff] %v362
        %387 = vst [vmem:[%s230 + $0xb0] sm:$0xff] %v363
        %388 = vst [vmem:[%s230 + $0xb8] sm:$0xff] %v364
        %s389 = sand.u32 %s90, 1
        %s390 = sand.u32 %s90, 1
        %s391 = smul.addr %s390, 192
        %s392 = scalar_lea.vmem [#allocation3], %s391
        // Predicated region
        $region56: #{sfc_back_forward.7} parent=50 // pred_check
          %p393 = pneg %p100
        $region57: #{sfc_back_forward.7} parent=50 // pred_check_branch
          %395 = sbr.rel (%p393) target = $region59
        $region58: #{sfc_back_forward.7} parent=50 // pred_region
          %s396 = smul.u32 8, %s14
          %s397 = smul.addr %s396, 8
          %s398 = scalar_lea.vmem %s3, %s397
          // Predicated region
          $region60: #{sfc_back_forward.7} parent=58 // pred_check
            _
          $region61: #{sfc_back_forward.7} parent=58 // pred_check_branch
            %400 = sbr.rel (0) target = $region63
          $region62: #{sfc_back_forward.7} parent=58 // pred_region
            // Predicated region
            $region64: #{sfc_back_forward.7} parent=62 // pred_check
              _
            $region65: #{sfc_back_forward.7} parent=62 // pred_check_branch
              %402 = sbr.rel (0) target = $region67
            $region66: #{sfc_back_forward.7} parent=62 // pred_region
              loop: start=0, step=1, limit=1
              $region68: #{sfc_back_forward.7} parent=66 // loop_pre_header
                _
              $region69: #{sfc_back_forward.7} parent=66 // loop_header
                %s404 = sphi 0, %s408
                %p405 = scmp.ge.s32.totalorder %s404, 1
                %s409 = sphi %s392, %s392
                %s410 = sphi %s398, %s398
              $region70: #{sfc_back_forward.7} parent=66 // loop_header_branch
                %407 = sbr.rel (%p405) target = $region74
              $region71: #{sfc_back_forward.7} parent=66 // loop_body
                %v411 = vld [vmem:[%s409] sm:$0xff]
                %412 = vst [vmem:[%s410] sm:$0xff] %v411
                %v413 = vld [vmem:[%s409 + $0x8] sm:$0xff]
                %414 = vst [vmem:[%s410 + $0x8] sm:$0xff] %v413
                %v415 = vld [vmem:[%s409 + $0x10] sm:$0xff]
                %416 = vst [vmem:[%s410 + $0x10] sm:$0xff] %v415
                %v417 = vld [vmem:[%s409 + $0x18] sm:$0xff]
                %418 = vst [vmem:[%s410 + $0x18] sm:$0xff] %v417
                %v419 = vld [vmem:[%s409 + $0x20] sm:$0xff]
                %420 = vst [vmem:[%s410 + $0x20] sm:$0xff] %v419
                %v421 = vld [vmem:[%s409 + $0x28] sm:$0xff]
                %422 = vst [vmem:[%s410 + $0x28] sm:$0xff] %v421
                %v423 = vld [vmem:[%s409 + $0x30] sm:$0xff]
                %424 = vst [vmem:[%s410 + $0x30] sm:$0xff] %v423
                %v425 = vld [vmem:[%s409 + $0x38] sm:$0xff]
                %426 = vst [vmem:[%s410 + $0x38] sm:$0xff] %v425
                %v427 = vld [vmem:[%s409 + $0x40] sm:$0xff]
                %428 = vst [vmem:[%s410 + $0x80] sm:$0xff] %v427
                %v429 = vld [vmem:[%s409 + $0x48] sm:$0xff]
                %430 = vst [vmem:[%s410 + $0x88] sm:$0xff] %v429
                %v431 = vld [vmem:[%s409 + $0x50] sm:$0xff]
                %432 = vst [vmem:[%s410 + $0x90] sm:$0xff] %v431
                %v433 = vld [vmem:[%s409 + $0x58] sm:$0xff]
                %434 = vst [vmem:[%s410 + $0x98] sm:$0xff] %v433
                %v435 = vld [vmem:[%s409 + $0x60] sm:$0xff]
                %436 = vst [vmem:[%s410 + $0xa0] sm:$0xff] %v435
                %v437 = vld [vmem:[%s409 + $0x68] sm:$0xff]
                %438 = vst [vmem:[%s410 + $0xa8] sm:$0xff] %v437
                %v439 = vld [vmem:[%s409 + $0x70] sm:$0xff]
                %440 = vst [vmem:[%s410 + $0xb0] sm:$0xff] %v439
                %v441 = vld [vmem:[%s409 + $0x78] sm:$0xff]
                %442 = vst [vmem:[%s410 + $0xb8] sm:$0xff] %v441
                %v443 = vld [vmem:[%s409 + $0x80] sm:$0xff]
                %444 = vst [vmem:[%s410 + $0x100] sm:$0xff] %v443
                %v445 = vld [vmem:[%s409 + $0x88] sm:$0xff]
                %446 = vst [vmem:[%s410 + $0x108] sm:$0xff] %v445
                %v447 = vld [vmem:[%s409 + $0x90] sm:$0xff]
                %448 = vst [vmem:[%s410 + $0x110] sm:$0xff] %v447
                %v449 = vld [vmem:[%s409 + $0x98] sm:$0xff]
                %450 = vst [vmem:[%s410 + $0x118] sm:$0xff] %v449
                %v451 = vld [vmem:[%s409 + $0xa0] sm:$0xff]
                %452 = vst [vmem:[%s410 + $0x120] sm:$0xff] %v451
                %v453 = vld [vmem:[%s409 + $0xa8] sm:$0xff]
                %454 = vst [vmem:[%s410 + $0x128] sm:$0xff] %v453
                %v455 = vld [vmem:[%s409 + $0xb0] sm:$0xff]
                %456 = vst [vmem:[%s410 + $0x130] sm:$0xff] %v455
                %v457 = vld [vmem:[%s409 + $0xb8] sm:$0xff]
                %458 = vst [vmem:[%s410 + $0x138] sm:$0xff] %v457
              $region72: #{sfc_back_forward.7} parent=66 // loop_footer
                %s408 = sadd.s32 1, %s404
              $region73: #{sfc_back_forward.7} parent=66 // loop_footer_branch
                %403 = sbr.rel target = $region69
              $region74: #{sfc_back_forward.7} parent=66 // loop_exit
                _
            $region67: #{sfc_back_forward.7} parent=62 // pred_fallthru
              _
            // Predicated region
            $region75: #{sfc_back_forward.7} parent=62 // pred_check
              _
            $region76: #{sfc_back_forward.7} parent=62 // pred_check_branch
              %460 = sbr.rel target = $region78
            $region77: #{sfc_back_forward.7} parent=62 // pred_region
              _
            $region78: #{sfc_back_forward.7} parent=62 // pred_fallthru
              _
          $region63: #{sfc_back_forward.7} parent=58 // pred_fallthru
            _
          %461 = vnop
        $region59: #{sfc_back_forward.7} parent=50 // pred_fallthru
          _
      $region51: #{sfc_back_forward.7} parent=5 // pred_fallthru
        _
      %p462 = scmp.le.s32.totalorder 2, %s9
      // Predicated region
      $region79: #{sfc_back_forward.7} parent=5 // pred_check
        %p463 = pneg %p462
      $region80: #{sfc_back_forward.7} parent=5 // pred_check_branch
        %465 = sbr.rel (%p463) target = $region82
      $region81: #{sfc_back_forward.7} parent=5 // pred_region
        %s466 = ssub.s32 %s9, 2
        // Predicated region
        $region83: #{sfc_back_forward.7} parent=81 // pred_check
          %p467 = pneg %p106
        $region84: #{sfc_back_forward.7} parent=81 // pred_check_branch
          %469 = sbr.rel (%p467) target = $region86
        $region85: #{sfc_back_forward.7} parent=81 // pred_region
          %s470 = sand.u32 %s91, 1
          %s471 = sand.u32 %s91, 1
          %s472 = smul.addr %s471, 192
          %s473 = scalar_lea.vmem [#allocation3], %s472
        $region86: #{sfc_back_forward.7} parent=81 // pred_fallthru
          _
      $region82: #{sfc_back_forward.7} parent=5 // pred_fallthru
        _
    $region6: #{sfc_back_forward.7} parent=1 // loop_footer
      %s13 = sadd.s32 1, %s9
    $region7: #{sfc_back_forward.7} parent=1 // loop_footer_branch
      %8 = sbr.rel target = $region3
    $region8: #{sfc_back_forward.7} parent=1 // loop_exit
      _

</llo_original>
